<compile_context>
chip_gen: v5e
topology: v5e:2x2
jax: 0.10.0
libtpu: 0.0.40
codegen_flags: <defaults>
</compile_context>

<pallas_src>
import functools

import jax
import jax.numpy as jnp
from jax.experimental import pallas as pl
from jax.experimental.pallas import tpu as pltpu


# --------------------------------------------------------------------------
# tiling helpers
# --------------------------------------------------------------------------
def _pick_hw_tile(hw, c_max, itemsize=4, target_bytes=2 * 1024 * 1024):
    """Lane-axis (H*W) tile: multiple of 128, ~target_bytes per block."""
    if hw % 128 != 0:
        return hw                      # full-extent block (allowed by Pallas)
    t = (target_bytes // max(1, c_max * itemsize)) // 128 * 128
    t = int(max(128, min(hw, t)))
    while hw % t != 0:
        t -= 128
    return t


def _largest_divisor_leq(n, cap):
    cap = int(max(1, min(n, cap)))
    for d in range(cap, 0, -1):
        if n % d == 0:
            return d
    return 1


# --------------------------------------------------------------------------
# kernel 1: pointwise (1x1) conv  ==  channel matmul on (C, hw_tile) blocks
# --------------------------------------------------------------------------
def _pointwise_kernel(x_ref, w_ref, b_ref, o_ref):
    f32 = jnp.float32
    x = x_ref[...].astype(f32)                       # (Cin, t)
    w = w_ref[...].astype(f32)                       # (Cout, Cin)
    b = b_ref[...].astype(f32)                       # (Cout, 1)
    y = jnp.dot(w, x, preferred_element_type=f32) + b
    o_ref[...] = y.astype(o_ref.dtype)


def conv1x1(x3, w, b):
    """x3: (B, Cin, HW) -> (B, Cout, HW). w: (Cout, Cin); b: (Cout,)."""
    B, Cin, HW = x3.shape
    Cout = w.shape[0]
    t = _pick_hw_tile(HW, max(Cin, Cout))
    grid = (B, HW // t)
    cost = pl.CostEstimate(
        flops=2 * B * Cout * Cin * HW,
        transcendentals=0,
        bytes_accessed=4 * (B * Cin * HW + B * Cout * HW + Cout * Cin + Cout))
    return pl.pallas_call(
        _pointwise_kernel,
        out_shape=jax.ShapeDtypeStruct((B, Cout, HW), x3.dtype),
        grid=grid,
        in_specs=[
            pl.BlockSpec((None, Cin, t), lambda bi, j: (bi, 0, j)),
            pl.BlockSpec((Cout, Cin), lambda bi, j: (0, 0)),
            pl.BlockSpec((Cout, 1), lambda bi, j: (0, 0)),
        ],
        out_specs=pl.BlockSpec((None, Cout, t), lambda bi, j: (bi, 0, j)),
        compiler_params=pltpu.CompilerParams(
            dimension_semantics=("parallel", "parallel")),
        cost_estimate=cost,
    )(x3, w, b.reshape(Cout, 1))


# --------------------------------------------------------------------------
# kernel 2: fused Dual_Direction_Fusion (three 1x1 convs + gating, one pass)
# --------------------------------------------------------------------------
def _ddf_kernel(x_ref, m_ref, wmt_ref, bmt_ref,
                w11_ref, w12_ref, b1_ref, w21_ref, w22_ref, b2_ref,
                wf1_ref, wf2_ref, bf_ref, o_ref):
    f32 = jnp.float32
    x = x_ref[...].astype(f32)                       # (C, t)
    m = m_ref[...].astype(f32)                       # (C, t)
    mt = (jnp.dot(wmt_ref[...].astype(f32), m, preferred_element_type=f32)
          + bmt_ref[...].astype(f32))
    c1 = (jnp.dot(w11_ref[...].astype(f32), x, preferred_element_type=f32)
          + jnp.dot(w12_ref[...].astype(f32), mt, preferred_element_type=f32)
          + b1_ref[...].astype(f32))
    c2 = (jnp.dot(w21_ref[...].astype(f32), x, preferred_element_type=f32)
          + jnp.dot(w22_ref[...].astype(f32), mt, preferred_element_type=f32)
          + b2_ref[...].astype(f32))
    out1 = c1 * x + x
    out2 = c2 * mt + mt
    fus = (jnp.dot(wf1_ref[...].astype(f32), out1, preferred_element_type=f32)
           + jnp.dot(wf2_ref[...].astype(f32), out2, preferred_element_type=f32)
           + bf_ref[...].astype(f32))
    o_ref[...] = (fus + x).astype(o_ref.dtype)


def dual_direction_fusion(x3, m3, p):
    """x3, m3: (B, C, HW). Returns (B, C, HW)."""
    B, C, HW = x3.shape
    t = _pick_hw_tile(HW, 2 * C)
    grid = (B, HW // t)
    w_cat, b_cat, w_fus = p["w_cat"], p["b_cat"], p["w_fus"]
    # split the concat / fusion weights on the host (tiny, static slices) so
    # the kernel never slices along the sublane axis.
    w11, w12 = w_cat[:C, :C], w_cat[:C, C:]
    w21, w22 = w_cat[C:, :C], w_cat[C:, C:]
    b1, b2 = b_cat[:C].reshape(C, 1), b_cat[C:].reshape(C, 1)
    wf1, wf2 = w_fus[:, :C], w_fus[:, C:]
    bmt, bf = p["b_mt"].reshape(C, 1), p["b_fus"].reshape(C, 1)

    def full(shape):
        return pl.BlockSpec(shape, lambda bi, j: (0, 0))

    io_spec = pl.BlockSpec((None, C, t), lambda bi, j: (bi, 0, j))
    return pl.pallas_call(
        _ddf_kernel,
        out_shape=jax.ShapeDtypeStruct((B, C, HW), x3.dtype),
        grid=grid,
        in_specs=[io_spec, io_spec,
                  full((C, C)), full((C, 1)),
                  full((C, C)), full((C, C)), full((C, 1)),
                  full((C, C)), full((C, C)), full((C, 1)),
                  full((C, C)), full((C, C)), full((C, 1))],
        out_specs=pl.BlockSpec((None, C, t), lambda bi, j: (bi, 0, j)),
        compiler_params=pltpu.CompilerParams(
            dimension_semantics=("parallel", "parallel")),
    )(x3, m3, p["w_mt"], bmt, w11, w12, b1, w21, w22, b2, wf1, wf2, bf)


# --------------------------------------------------------------------------
# kernel 3: 3x3 depthwise conv (padding=1).  Halo supplied by a host-side pad.
# --------------------------------------------------------------------------
def _dwconv3x3_kernel(xp_ref, w_ref, b_ref, o_ref):
    f32 = jnp.float32
    tc, H, W = o_ref.shape
    w = w_ref[...].astype(f32)                       # (tc, 3, 3)
    acc = jnp.zeros((tc, H, W), f32)
    for di in range(3):
        for dj in range(3):
            patch = xp_ref[:, di:di + H, dj:dj + W].astype(f32)
            acc = acc + patch * w[:, di:di + 1, dj:dj + 1]
    acc = acc + b_ref[...].astype(f32)               # (tc, 1, 1) broadcast
    o_ref[...] = acc.astype(o_ref.dtype)


def dwconv3x3(x4, w, b):
    """x4: (B, C, H, W); w: (C, 3, 3); b: (C,). 'same' depthwise conv."""
    B, C, H, W = x4.shape
    xp = jnp.pad(x4, ((0, 0), (0, 0), (1, 1), (1, 1)))
    Hp, Wp = H + 2, W + 2
    tc = _largest_divisor_leq(C, max(1, (2 * 1024 * 1024) // (Hp * Wp * 4)))
    grid = (B, C // tc)
    return pl.pallas_call(
        _dwconv3x3_kernel,
        out_shape=jax.ShapeDtypeStruct((B, C, H, W), x4.dtype),
        grid=grid,
        in_specs=[
            pl.BlockSpec((None, tc, Hp, Wp), lambda bi, ci: (bi, ci, 0, 0)),
            pl.BlockSpec((tc, 3, 3), lambda bi, ci: (ci, 0, 0)),
            pl.BlockSpec((tc, 1, 1), lambda bi, ci: (ci, 0, 0)),
        ],
        out_specs=pl.BlockSpec((None, tc, H, W), lambda bi, ci: (bi, ci, 0, 0)),
        compiler_params=pltpu.CompilerParams(
            dimension_semantics=("parallel", "parallel")),
    )(xp, w, b.reshape(C, 1, 1))


# --------------------------------------------------------------------------
# kernel 4: per-(batch, head) channel attention
#   q,k,v: (c_head, HW)  ->  L2-normalize over HW, attn=(q@k^T)*temp,
#   softmax over channels, out = attn @ v
# --------------------------------------------------------------------------
def _attn_kernel(t_ref, q_ref, k_ref, v_ref, o_ref):
    f32 = jnp.float32
    hi = pl.program_id(1)
    q = q_ref[...].astype(f32)                       # (ch, HW)
    k = k_ref[...].astype(f32)
    v = v_ref[...].astype(f32)
    eps = 1e-12                                      # F.normalize default

    def l2norm(a):
        n = jnp.sqrt(jnp.sum(a * a, axis=-1, keepdims=True))
        return a / jnp.maximum(n, eps)

    qn, kn, vn = l2norm(q), l2norm(k), l2norm(v)
    temp = t_ref[hi]                                 # per-head scalar (SMEM)
    attn = jax.lax.dot_general(                      # q @ k^T  -> (ch, ch)
        qn, kn, (((1,), (1,)), ((), ())), preferred_element_type=f32) * temp
    attn = attn - jnp.max(attn, axis=-1, keepdims=True)
    e = jnp.exp(attn)
    p = e / jnp.sum(e, axis=-1, keepdims=True)
    out = jnp.dot(p, vn, preferred_element_type=f32)  # (ch, HW)
    o_ref[...] = out.astype(o_ref.dtype)


def channel_attention(qkv_heads, temperature):
    """qkv_heads: (B, 3*nh, ch, HW) with [q | k | v] head blocks along axis 1."""
    B, three_nh, ch, HW = qkv_heads.shape
    nh = three_nh // 3
    grid = (B, nh)
    qspec = pl.BlockSpec((None, None, ch, HW), lambda bi, hi: (bi, hi, 0, 0))
    kspec = pl.BlockSpec((None, None, ch, HW), lambda bi, hi: (bi, nh + hi, 0, 0))
    vspec = pl.BlockSpec((None, None, ch, HW), lambda bi, hi: (bi, 2 * nh + hi, 0, 0))
    tspec = pl.BlockSpec(memory_space=pltpu.MemorySpace.SMEM)
    cost = pl.CostEstimate(
        flops=4 * B * nh * ch * ch * HW + 12 * B * nh * ch * HW,
        transcendentals=B * nh * ch * (ch + 3),
        bytes_accessed=4 * 4 * B * nh * ch * HW)
    return pl.pallas_call(
        _attn_kernel,
        out_shape=jax.ShapeDtypeStruct((B, nh, ch, HW), qkv_heads.dtype),
        grid=grid,
        in_specs=[tspec, qspec, kspec, vspec],
        out_specs=pl.BlockSpec((None, None, ch, HW), lambda bi, hi: (bi, hi, 0, 0)),
        compiler_params=pltpu.CompilerParams(
            dimension_semantics=("parallel", "parallel")),
        cost_estimate=cost,
    )(temperature, qkv_heads, qkv_heads, qkv_heads)


# --------------------------------------------------------------------------
# full Self_Attention forward
# --------------------------------------------------------------------------
@functools.partial(jax.jit, static_argnames=("num_heads", "fusion_in_self_attention"))
def self_attention_forward(x, x_mask, params, num_heads,
                           fusion_in_self_attention=True):
    """x, x_mask: (B, C, H, W) NCHW. Returns (B, C, H, W)."""
    B, C, H, W = x.shape
    HW = H * W
    ch = C // num_heads
    x3 = x.reshape(B, C, HW)
    if fusion_in_self_attention:
        xf = dual_direction_fusion(x3, x_mask.reshape(B, C, HW), params)
    else:
        xf = x3
    qkv = conv1x1(xf, params["w_qkv"], params["b_qkv"])            # (B, 3C, HW)
    qkv = dwconv3x3(qkv.reshape(B, 3 * C, H, W),
                    params["w_dw"], params["b_dw"])                # (B, 3C, H, W)
    qkv_heads = qkv.reshape(B, 3 * num_heads, ch, HW)              # free reshape
    attn_out = channel_attention(qkv_heads, params["temperature"]) # (B, nh, ch, HW)
    out = conv1x1(attn_out.reshape(B, C, HW), params["w_po"], params["b_po"])
    return out.reshape(B, C, H, W)


# --------------------------------------------------------------------------
# pure-JAX reference (for the self-check)
# --------------------------------------------------------------------------
def _reference(x, x_mask, p, num_heads):
    hi = jax.lax.Precision.HIGHEST
    B, C, H, W = x.shape

    def c1x1(y, w, b):
        return jnp.einsum("oc,bchw->bohw", w, y, precision=hi) \
            + b[None, :, None, None]

    mt = c1x1(x_mask, p["w_mt"], p["b_mt"])
    cc = c1x1(jnp.concatenate([x, mt], axis=1), p["w_cat"], p["b_cat"])
    c1, c2 = cc[:, :C], cc[:, C:]
    out1 = c1 * x + x
    out2 = c2 * mt + mt
    fus = c1x1(jnp.concatenate([out1, out2], axis=1), p["w_fus"], p["b_fus"])
    xf = fus + x

    qkv = c1x1(xf, p["w_qkv"], p["b_qkv"])
    qkv = jax.lax.conv_general_dilated(
        qkv, p["w_dw"].reshape(3 * C, 1, 3, 3), window_strides=(1, 1),
        padding=((1, 1), (1, 1)), feature_group_count=3 * C,
        dimension_numbers=("NCHW", "OIHW", "NCHW"),
        precision=hi) + p["b_dw"][None, :, None, None]
    q, k, v = jnp.split(qkv, 3, axis=1)
    ch = C // num_heads

    def rsh(t):
        return t.reshape(B, num_heads, ch, H * W)

    def l2n(t):
        n = jnp.sqrt(jnp.sum(t * t, axis=-1, keepdims=True))
        return t / jnp.maximum(n, 1e-12)

    q, k, v = l2n(rsh(q)), l2n(rsh(k)), l2n(rsh(v))
    attn = jnp.einsum("bhcn,bhdn->bhcd", q, k, precision=hi) \
        * p["temperature"][None, :, None, None]
    attn = jax.nn.softmax(attn, axis=-1)
    out = jnp.einsum("bhcd,bhdn->bhcn", attn, v, precision=hi)
    out = out.reshape(B, C, H, W)
    return c1x1(out, p["w_po"], p["b_po"])


# --------------------------------------------------------------------------
if __name__ == "__main__":
    B, C, H, W = 2, 4, 16, 16
    num_heads = 2

    key = jax.random.PRNGKey(0)
    ks = jax.random.split(key, 16)

    def w_init(k, shape, fan_in):
        return jax.random.normal(k, shape, dtype=jnp.float32) / jnp.sqrt(float(fan_in))

    params = {
        "w_mt":  w_init(ks[0], (C, C), C),
        "b_mt":  0.1 * jax.random.normal(ks[1], (C,), dtype=jnp.float32),
        "w_cat": w_init(ks[2], (2 * C, 2 * C), 2 * C),
        "b_cat": 0.1 * jax.random.normal(ks[3], (2 * C,), dtype=jnp.float32),
        "w_fus": w_init(ks[4], (C, 2 * C), 2 * C),
        "b_fus": 0.1 * jax.random.normal(ks[5], (C,), dtype=jnp.float32),
        "w_qkv": w_init(ks[6], (3 * C, C), C),
        "b_qkv": 0.1 * jax.random.normal(ks[7], (3 * C,), dtype=jnp.float32),
        "w_dw":  w_init(ks[8], (3 * C, 3, 3), 9),
        "b_dw":  0.1 * jax.random.normal(ks[9], (3 * C,), dtype=jnp.float32),
        "w_po":  w_init(ks[10], (C, C), C),
        "b_po":  0.1 * jax.random.normal(ks[11], (C,), dtype=jnp.float32),
        "temperature": jnp.ones((num_heads,), dtype=jnp.float32),  # init = ones
    }
    x = jax.random.normal(ks[12], (B, C, H, W), dtype=jnp.float32)
    x_mask = jax.random.normal(ks[13], (B, C, H, W), dtype=jnp.float32)

    out = self_attention_forward(x, x_mask, params, num_heads=num_heads,
                                 fusion_in_self_attention=True)
    out = jax.block_until_ready(out)

    ref = _reference(x, x_mask, params, num_heads)
    assert out.shape == (B, C, H, W)
    err = float(jnp.max(jnp.abs(out - ref)))
    assert err < 2e-3, f"max abs err {err}"

    print("KERNEL_OK")
</pallas_src>

<mosaic_0001>
module attributes {stable_mosaic.version = 11 : i64} {
  func.func @_ddf_kernel(%arg0: i32, %arg1: i32, %arg2: memref<1x4x256xf32, #tpu.memory_space<vmem>>, %arg3: memref<1x4x256xf32, #tpu.memory_space<vmem>>, %arg4: memref<4x4xf32, #tpu.memory_space<vmem>>, %arg5: memref<4x1xf32, #tpu.memory_space<vmem>>, %arg6: memref<4x4xf32, #tpu.memory_space<vmem>>, %arg7: memref<4x4xf32, #tpu.memory_space<vmem>>, %arg8: memref<4x1xf32, #tpu.memory_space<vmem>>, %arg9: memref<4x4xf32, #tpu.memory_space<vmem>>, %arg10: memref<4x4xf32, #tpu.memory_space<vmem>>, %arg11: memref<4x1xf32, #tpu.memory_space<vmem>>, %arg12: memref<4x4xf32, #tpu.memory_space<vmem>>, %arg13: memref<4x4xf32, #tpu.memory_space<vmem>>, %arg14: memref<4x1xf32, #tpu.memory_space<vmem>>, %arg15: memref<1x4x256xf32, #tpu.memory_space<vmem>>) attributes {dimension_semantics = [#tpu.dimension_semantics<parallel>, #tpu.dimension_semantics<parallel>], iteration_bounds = array<i64: 2, 1>, scalar_prefetch = 0 : i64, scratch_operands = 0 : i64, tpu.core_type = #tpu.core_type<tc>, window_params = [{transform_indices = @transform_0, window_bounds = array<i64: 1, 4, 256>}, {transform_indices = @transform_1, window_bounds = array<i64: 1, 4, 256>}, {pipeline_mode = #tpu.pipeline_mode<synchronous>, transform_indices = @transform_2, window_bounds = array<i64: 4, 4>}, {pipeline_mode = #tpu.pipeline_mode<synchronous>, transform_indices = @transform_3, window_bounds = array<i64: 4, 1>}, {pipeline_mode = #tpu.pipeline_mode<synchronous>, transform_indices = @transform_4, window_bounds = array<i64: 4, 4>}, {pipeline_mode = #tpu.pipeline_mode<synchronous>, transform_indices = @transform_5, window_bounds = array<i64: 4, 4>}, {pipeline_mode = #tpu.pipeline_mode<synchronous>, transform_indices = @transform_6, window_bounds = array<i64: 4, 1>}, {pipeline_mode = #tpu.pipeline_mode<synchronous>, transform_indices = @transform_7, window_bounds = array<i64: 4, 4>}, {pipeline_mode = #tpu.pipeline_mode<synchronous>, transform_indices = @transform_8, window_bounds = array<i64: 4, 4>}, {pipeline_mode = #tpu.pipeline_mode<synchronous>, transform_indices = @transform_9, window_bounds = array<i64: 4, 1>}, {pipeline_mode = #tpu.pipeline_mode<synchronous>, transform_indices = @transform_10, window_bounds = array<i64: 4, 4>}, {pipeline_mode = #tpu.pipeline_mode<synchronous>, transform_indices = @transform_11, window_bounds = array<i64: 4, 4>}, {pipeline_mode = #tpu.pipeline_mode<synchronous>, transform_indices = @transform_12, window_bounds = array<i64: 4, 1>}, {transform_indices = @transform_13, window_bounds = array<i64: 1, 4, 256>}]} {
    %c0 = arith.constant 0 : index
    %c0_0 = arith.constant 0 : index
    %c0_1 = arith.constant 0 : index
    %0 = vector.load %arg2[%c0, %c0_0, %c0_1] : memref<1x4x256xf32, #tpu.memory_space<vmem>>, vector<1x4x256xf32>
    %1 = vector.shape_cast %0 : vector<1x4x256xf32> to vector<4x256xf32>
    %c0_2 = arith.constant 0 : index
    %c0_3 = arith.constant 0 : index
    %c0_4 = arith.constant 0 : index
    %2 = vector.load %arg3[%c0_2, %c0_3, %c0_4] : memref<1x4x256xf32, #tpu.memory_space<vmem>>, vector<1x4x256xf32>
    %3 = vector.shape_cast %2 : vector<1x4x256xf32> to vector<4x256xf32>
    %c0_5 = arith.constant 0 : index
    %c0_6 = arith.constant 0 : index
    %4 = vector.load %arg4[%c0_5, %c0_6] : memref<4x4xf32, #tpu.memory_space<vmem>>, vector<4x4xf32>
    %cst = arith.constant dense<0.000000e+00> : vector<4x256xf32>
    %5 = tpu.matmul %4, %3, %cst {dimension_numbers = #tpu.dot_dimension_numbers<[1], [0], [0], [1], [0, 0, 1, 1], [], []>} : vector<4x4xf32>, vector<4x256xf32>, vector<4x256xf32> -> vector<4x256xf32>
    %c0_7 = arith.constant 0 : index
    %c0_8 = arith.constant 0 : index
    %6 = vector.load %arg5[%c0_7, %c0_8] : memref<4x1xf32, #tpu.memory_space<vmem>>, vector<4x1xf32>
    %7 = vector.broadcast %6 : vector<4x1xf32> to vector<4x256xf32>
    %8 = arith.addf %5, %7 : vector<4x256xf32>
    %c0_9 = arith.constant 0 : index
    %c0_10 = arith.constant 0 : index
    %9 = vector.load %arg6[%c0_9, %c0_10] : memref<4x4xf32, #tpu.memory_space<vmem>>, vector<4x4xf32>
    %cst_11 = arith.constant dense<0.000000e+00> : vector<4x256xf32>
    %10 = tpu.matmul %9, %1, %cst_11 {dimension_numbers = #tpu.dot_dimension_numbers<[1], [0], [0], [1], [0, 0, 1, 1], [], []>} : vector<4x4xf32>, vector<4x256xf32>, vector<4x256xf32> -> vector<4x256xf32>
    %c0_12 = arith.constant 0 : index
    %c0_13 = arith.constant 0 : index
    %11 = vector.load %arg7[%c0_12, %c0_13] : memref<4x4xf32, #tpu.memory_space<vmem>>, vector<4x4xf32>
    %cst_14 = arith.constant dense<0.000000e+00> : vector<4x256xf32>
    %12 = tpu.matmul %11, %8, %cst_14 {dimension_numbers = #tpu.dot_dimension_numbers<[1], [0], [0], [1], [0, 0, 1, 1], [], []>} : vector<4x4xf32>, vector<4x256xf32>, vector<4x256xf32> -> vector<4x256xf32>
    %13 = arith.addf %10, %12 : vector<4x256xf32>
    %c0_15 = arith.constant 0 : index
    %c0_16 = arith.constant 0 : index
    %14 = vector.load %arg8[%c0_15, %c0_16] : memref<4x1xf32, #tpu.memory_space<vmem>>, vector<4x1xf32>
    %15 = vector.broadcast %14 : vector<4x1xf32> to vector<4x256xf32>
    %16 = arith.addf %13, %15 : vector<4x256xf32>
    %c0_17 = arith.constant 0 : index
    %c0_18 = arith.constant 0 : index
    %17 = vector.load %arg9[%c0_17, %c0_18] : memref<4x4xf32, #tpu.memory_space<vmem>>, vector<4x4xf32>
    %cst_19 = arith.constant dense<0.000000e+00> : vector<4x256xf32>
    %18 = tpu.matmul %17, %1, %cst_19 {dimension_numbers = #tpu.dot_dimension_numbers<[1], [0], [0], [1], [0, 0, 1, 1], [], []>} : vector<4x4xf32>, vector<4x256xf32>, vector<4x256xf32> -> vector<4x256xf32>
    %c0_20 = arith.constant 0 : index
    %c0_21 = arith.constant 0 : index
    %19 = vector.load %arg10[%c0_20, %c0_21] : memref<4x4xf32, #tpu.memory_space<vmem>>, vector<4x4xf32>
    %cst_22 = arith.constant dense<0.000000e+00> : vector<4x256xf32>
    %20 = tpu.matmul %19, %8, %cst_22 {dimension_numbers = #tpu.dot_dimension_numbers<[1], [0], [0], [1], [0, 0, 1, 1], [], []>} : vector<4x4xf32>, vector<4x256xf32>, vector<4x256xf32> -> vector<4x256xf32>
    %21 = arith.addf %18, %20 : vector<4x256xf32>
    %c0_23 = arith.constant 0 : index
    %c0_24 = arith.constant 0 : index
    %22 = vector.load %arg11[%c0_23, %c0_24] : memref<4x1xf32, #tpu.memory_space<vmem>>, vector<4x1xf32>
    %23 = vector.broadcast %22 : vector<4x1xf32> to vector<4x256xf32>
    %24 = arith.addf %21, %23 : vector<4x256xf32>
    %25 = arith.mulf %16, %1 : vector<4x256xf32>
    %26 = arith.addf %25, %1 : vector<4x256xf32>
    %27 = arith.mulf %24, %8 : vector<4x256xf32>
    %28 = arith.addf %27, %8 : vector<4x256xf32>
    %c0_25 = arith.constant 0 : index
    %c0_26 = arith.constant 0 : index
    %29 = vector.load %arg12[%c0_25, %c0_26] : memref<4x4xf32, #tpu.memory_space<vmem>>, vector<4x4xf32>
    %cst_27 = arith.constant dense<0.000000e+00> : vector<4x256xf32>
    %30 = tpu.matmul %29, %26, %cst_27 {dimension_numbers = #tpu.dot_dimension_numbers<[1], [0], [0], [1], [0, 0, 1, 1], [], []>} : vector<4x4xf32>, vector<4x256xf32>, vector<4x256xf32> -> vector<4x256xf32>
    %c0_28 = arith.constant 0 : index
    %c0_29 = arith.constant 0 : index
    %31 = vector.load %arg13[%c0_28, %c0_29] : memref<4x4xf32, #tpu.memory_space<vmem>>, vector<4x4xf32>
    %cst_30 = arith.constant dense<0.000000e+00> : vector<4x256xf32>
    %32 = tpu.matmul %31, %28, %cst_30 {dimension_numbers = #tpu.dot_dimension_numbers<[1], [0], [0], [1], [0, 0, 1, 1], [], []>} : vector<4x4xf32>, vector<4x256xf32>, vector<4x256xf32> -> vector<4x256xf32>
    %33 = arith.addf %30, %32 : vector<4x256xf32>
    %c0_31 = arith.constant 0 : index
    %c0_32 = arith.constant 0 : index
    %34 = vector.load %arg14[%c0_31, %c0_32] : memref<4x1xf32, #tpu.memory_space<vmem>>, vector<4x1xf32>
    %35 = vector.broadcast %34 : vector<4x1xf32> to vector<4x256xf32>
    %36 = arith.addf %33, %35 : vector<4x256xf32>
    %37 = arith.addf %36, %1 : vector<4x256xf32>
    %c0_33 = arith.constant 0 : index
    %c0_34 = arith.constant 0 : index
    %c0_35 = arith.constant 0 : index
    %38 = vector.load %arg15[%c0_33, %c0_34, %c0_35] : memref<1x4x256xf32, #tpu.memory_space<vmem>>, vector<1x4x256xf32>
    %39 = vector.shape_cast %38 : vector<1x4x256xf32> to vector<4x256xf32>
    %40 = vector.shape_cast %37 : vector<4x256xf32> to vector<1x4x256xf32>
    tpu.vector_store %arg15[%c0_33, %c0_34, %c0_35], %40 {strides = array<i32>} : memref<1x4x256xf32, #tpu.memory_space<vmem>>, vector<1x4x256xf32>,
    return
  }
  func.func @transform_0(%arg0: i32, %arg1: i32) -> (i32, i32, i32) {
    %c0_i32 = arith.constant 0 : i32
    %c0_i32_0 = arith.constant 0 : i32
    return %arg0, %c0_i32, %arg1 : i32, i32, i32
  }
  func.func @transform_1(%arg0: i32, %arg1: i32) -> (i32, i32, i32) {
    %c0_i32 = arith.constant 0 : i32
    %c0_i32_0 = arith.constant 0 : i32
    return %arg0, %c0_i32, %arg1 : i32, i32, i32
  }
  func.func @transform_2(%arg0: i32, %arg1: i32) -> (i32, i32) {
    %c0_i32 = arith.constant 0 : i32
    %c0_i32_0 = arith.constant 0 : i32
    %c0_i32_1 = arith.constant 0 : i32
    return %c0_i32, %c0_i32_0 : i32, i32
  }
  func.func @transform_3(%arg0: i32, %arg1: i32) -> (i32, i32) {
    %c0_i32 = arith.constant 0 : i32
    %c0_i32_0 = arith.constant 0 : i32
    %c0_i32_1 = arith.constant 0 : i32
    return %c0_i32, %c0_i32_0 : i32, i32
  }
  func.func @transform_4(%arg0: i32, %arg1: i32) -> (i32, i32) {
    %c0_i32 = arith.constant 0 : i32
    %c0_i32_0 = arith.constant 0 : i32
    %c0_i32_1 = arith.constant 0 : i32
    return %c0_i32, %c0_i32_0 : i32, i32
  }
  func.func @transform_5(%arg0: i32, %arg1: i32) -> (i32, i32) {
    %c0_i32 = arith.constant 0 : i32
    %c0_i32_0 = arith.constant 0 : i32
    %c0_i32_1 = arith.constant 0 : i32
    return %c0_i32, %c0_i32_0 : i32, i32
  }
  func.func @transform_6(%arg0: i32, %arg1: i32) -> (i32, i32) {
    %c0_i32 = arith.constant 0 : i32
    %c0_i32_0 = arith.constant 0 : i32
    %c0_i32_1 = arith.constant 0 : i32
    return %c0_i32, %c0_i32_0 : i32, i32
  }
  func.func @transform_7(%arg0: i32, %arg1: i32) -> (i32, i32) {
    %c0_i32 = arith.constant 0 : i32
    %c0_i32_0 = arith.constant 0 : i32
    %c0_i32_1 = arith.constant 0 : i32
    return %c0_i32, %c0_i32_0 : i32, i32
  }
  func.func @transform_8(%arg0: i32, %arg1: i32) -> (i32, i32) {
    %c0_i32 = arith.constant 0 : i32
    %c0_i32_0 = arith.constant 0 : i32
    %c0_i32_1 = arith.constant 0 : i32
    return %c0_i32, %c0_i32_0 : i32, i32
  }
  func.func @transform_9(%arg0: i32, %arg1: i32) -> (i32, i32) {
    %c0_i32 = arith.constant 0 : i32
    %c0_i32_0 = arith.constant 0 : i32
    %c0_i32_1 = arith.constant 0 : i32
    return %c0_i32, %c0_i32_0 : i32, i32
  }
  func.func @transform_10(%arg0: i32, %arg1: i32) -> (i32, i32) {
    %c0_i32 = arith.constant 0 : i32
    %c0_i32_0 = arith.constant 0 : i32
    %c0_i32_1 = arith.constant 0 : i32
    return %c0_i32, %c0_i32_0 : i32, i32
  }
  func.func @transform_11(%arg0: i32, %arg1: i32) -> (i32, i32) {
    %c0_i32 = arith.constant 0 : i32
    %c0_i32_0 = arith.constant 0 : i32
    %c0_i32_1 = arith.constant 0 : i32
    return %c0_i32, %c0_i32_0 : i32, i32
  }
  func.func @transform_12(%arg0: i32, %arg1: i32) -> (i32, i32) {
    %c0_i32 = arith.constant 0 : i32
    %c0_i32_0 = arith.constant 0 : i32
    %c0_i32_1 = arith.constant 0 : i32
    return %c0_i32, %c0_i32_0 : i32, i32
  }
  func.func @transform_13(%arg0: i32, %arg1: i32) -> (i32, i32, i32) {
    %c0_i32 = arith.constant 0 : i32
    %c0_i32_0 = arith.constant 0 : i32
    return %arg0, %c0_i32, %arg1 : i32, i32, i32
  }
}

module attributes {stable_mosaic.version = 11 : i64} {
  func.func @_pointwise_kernel(%arg0: i32, %arg1: i32, %arg2: memref<1x4x256xf32, #tpu.memory_space<vmem>>, %arg3: memref<12x4xf32, #tpu.memory_space<vmem>>, %arg4: memref<12x1xf32, #tpu.memory_space<vmem>>, %arg5: memref<1x12x256xf32, #tpu.memory_space<vmem>>) attributes {dimension_semantics = [#tpu.dimension_semantics<parallel>, #tpu.dimension_semantics<parallel>], iteration_bounds = array<i64: 2, 1>, scalar_prefetch = 0 : i64, scratch_operands = 0 : i64, tpu.core_type = #tpu.core_type<tc>, window_params = [{transform_indices = @transform_0, window_bounds = array<i64: 1, 4, 256>}, {pipeline_mode = #tpu.pipeline_mode<synchronous>, transform_indices = @transform_1, window_bounds = array<i64: 12, 4>}, {pipeline_mode = #tpu.pipeline_mode<synchronous>, transform_indices = @transform_2, window_bounds = array<i64: 12, 1>}, {transform_indices = @transform_3, window_bounds = array<i64: 1, 12, 256>}]} {
    %c0 = arith.constant 0 : index
    %c0_0 = arith.constant 0 : index
    %c0_1 = arith.constant 0 : index
    %0 = vector.load %arg2[%c0, %c0_0, %c0_1] : memref<1x4x256xf32, #tpu.memory_space<vmem>>, vector<1x4x256xf32>
    %1 = vector.shape_cast %0 : vector<1x4x256xf32> to vector<4x256xf32>
    %c0_2 = arith.constant 0 : index
    %c0_3 = arith.constant 0 : index
    %2 = vector.load %arg3[%c0_2, %c0_3] : memref<12x4xf32, #tpu.memory_space<vmem>>, vector<12x4xf32>
    %c0_4 = arith.constant 0 : index
    %c0_5 = arith.constant 0 : index
    %3 = vector.load %arg4[%c0_4, %c0_5] : memref<12x1xf32, #tpu.memory_space<vmem>>, vector<12x1xf32>
    %cst = arith.constant dense<0.000000e+00> : vector<12x256xf32>
    %4 = tpu.matmul %2, %1, %cst {dimension_numbers = #tpu.dot_dimension_numbers<[1], [0], [0], [1], [0, 0, 1, 1], [], []>} : vector<12x4xf32>, vector<4x256xf32>, vector<12x256xf32> -> vector<12x256xf32>
    %5 = vector.broadcast %3 : vector<12x1xf32> to vector<12x256xf32>
    %6 = arith.addf %4, %5 : vector<12x256xf32>
    %c0_6 = arith.constant 0 : index
    %c0_7 = arith.constant 0 : index
    %c0_8 = arith.constant 0 : index
    %7 = vector.load %arg5[%c0_6, %c0_7, %c0_8] : memref<1x12x256xf32, #tpu.memory_space<vmem>>, vector<1x12x256xf32>
    %8 = vector.shape_cast %7 : vector<1x12x256xf32> to vector<12x256xf32>
    %9 = vector.shape_cast %6 : vector<12x256xf32> to vector<1x12x256xf32>
    tpu.vector_store %arg5[%c0_6, %c0_7, %c0_8], %9 {strides = array<i32>} : memref<1x12x256xf32, #tpu.memory_space<vmem>>, vector<1x12x256xf32>,
    return
  }
  func.func @transform_0(%arg0: i32, %arg1: i32) -> (i32, i32, i32) {
    %c0_i32 = arith.constant 0 : i32
    %c0_i32_0 = arith.constant 0 : i32
    return %arg0, %c0_i32, %arg1 : i32, i32, i32
  }
  func.func @transform_1(%arg0: i32, %arg1: i32) -> (i32, i32) {
    %c0_i32 = arith.constant 0 : i32
    %c0_i32_0 = arith.constant 0 : i32
    %c0_i32_1 = arith.constant 0 : i32
    return %c0_i32, %c0_i32_0 : i32, i32
  }
  func.func @transform_2(%arg0: i32, %arg1: i32) -> (i32, i32) {
    %c0_i32 = arith.constant 0 : i32
    %c0_i32_0 = arith.constant 0 : i32
    %c0_i32_1 = arith.constant 0 : i32
    return %c0_i32, %c0_i32_0 : i32, i32
  }
  func.func @transform_3(%arg0: i32, %arg1: i32) -> (i32, i32, i32) {
    %c0_i32 = arith.constant 0 : i32
    %c0_i32_0 = arith.constant 0 : i32
    return %arg0, %c0_i32, %arg1 : i32, i32, i32
  }
}

module attributes {stable_mosaic.version = 11 : i64} {
  func.func @_dwconv3x3_kernel(%arg0: i32, %arg1: i32, %arg2: memref<1x12x18x18xf32, #tpu.memory_space<vmem>>, %arg3: memref<12x3x3xf32, #tpu.memory_space<vmem>>, %arg4: memref<12x1x1xf32, #tpu.memory_space<vmem>>, %arg5: memref<1x12x16x16xf32, #tpu.memory_space<vmem>>) attributes {dimension_semantics = [#tpu.dimension_semantics<parallel>, #tpu.dimension_semantics<parallel>], iteration_bounds = array<i64: 2, 1>, scalar_prefetch = 0 : i64, scratch_operands = 0 : i64, tpu.core_type = #tpu.core_type<tc>, window_params = [{transform_indices = @transform_0, window_bounds = array<i64: 1, 12, 18, 18>}, {transform_indices = @transform_1, window_bounds = array<i64: 12, 3, 3>}, {transform_indices = @transform_2, window_bounds = array<i64: 12, 1, 1>}, {transform_indices = @transform_3, window_bounds = array<i64: 1, 12, 16, 16>}]} {
    %c0 = arith.constant 0 : index
    %c0_0 = arith.constant 0 : index
    %c0_1 = arith.constant 0 : index
    %0 = vector.load %arg3[%c0, %c0_0, %c0_1] : memref<12x3x3xf32, #tpu.memory_space<vmem>>, vector<12x3x3xf32>
    %cst = arith.constant 0.000000e+00 : f32
    %1 = vector.broadcast %cst : f32 to vector<12x16x16xf32>
    %c0_2 = arith.constant 0 : index
    %c0_3 = arith.constant 0 : index
    %c0_4 = arith.constant 0 : index
    %c0_5 = arith.constant 0 : index
    %2 = vector.load %arg2[%c0_2, %c0_3, %c0_4, %c0_5] : memref<1x12x18x18xf32, #tpu.memory_space<vmem>>, vector<1x12x16x16xf32>
    %3 = vector.shape_cast %2 : vector<1x12x16x16xf32> to vector<12x16x16xf32>
    %4 = vector.extract_strided_slice %0 {offsets = [0, 0, 0], sizes = [12, 1, 1], strides = [1, 1, 1]} : vector<12x3x3xf32> to vector<12x1x1xf32>
    %5 = vector.broadcast %4 : vector<12x1x1xf32> to vector<12x16x16xf32>
    %6 = arith.mulf %3, %5 : vector<12x16x16xf32>
    %7 = arith.addf %1, %6 : vector<12x16x16xf32>
    %c0_6 = arith.constant 0 : index
    %c0_7 = arith.constant 0 : index
    %c0_8 = arith.constant 0 : index
    %c1 = arith.constant 1 : index
    %8 = vector.load %arg2[%c0_6, %c0_7, %c0_8, %c1] : memref<1x12x18x18xf32, #tpu.memory_space<vmem>>, vector<1x12x16x16xf32>
    %9 = vector.shape_cast %8 : vector<1x12x16x16xf32> to vector<12x16x16xf32>
    %10 = vector.extract_strided_slice %0 {offsets = [0, 0, 1], sizes = [12, 1, 1], strides = [1, 1, 1]} : vector<12x3x3xf32> to vector<12x1x1xf32>
    %11 = vector.broadcast %10 : vector<12x1x1xf32> to vector<12x16x16xf32>
    %12 = arith.mulf %9, %11 : vector<12x16x16xf32>
    %13 = arith.addf %7, %12 : vector<12x16x16xf32>
    %c0_9 = arith.constant 0 : index
    %c0_10 = arith.constant 0 : index
    %c0_11 = arith.constant 0 : index
    %c2 = arith.constant 2 : index
    %14 = vector.load %arg2[%c0_9, %c0_10, %c0_11, %c2] : memref<1x12x18x18xf32, #tpu.memory_space<vmem>>, vector<1x12x16x16xf32>
    %15 = vector.shape_cast %14 : vector<1x12x16x16xf32> to vector<12x16x16xf32>
    %16 = vector.extract_strided_slice %0 {offsets = [0, 0, 2], sizes = [12, 1, 1], strides = [1, 1, 1]} : vector<12x3x3xf32> to vector<12x1x1xf32>
    %17 = vector.broadcast %16 : vector<12x1x1xf32> to vector<12x16x16xf32>
    %18 = arith.mulf %15, %17 : vector<12x16x16xf32>
    %19 = arith.addf %13, %18 : vector<12x16x16xf32>
    %c0_12 = arith.constant 0 : index
    %c0_13 = arith.constant 0 : index
    %c1_14 = arith.constant 1 : index
    %c0_15 = arith.constant 0 : index
    %20 = vector.load %arg2[%c0_12, %c0_13, %c1_14, %c0_15] : memref<1x12x18x18xf32, #tpu.memory_space<vmem>>, vector<1x12x16x16xf32>
    %21 = vector.shape_cast %20 : vector<1x12x16x16xf32> to vector<12x16x16xf32>
    %22 = vector.extract_strided_slice %0 {offsets = [0, 1, 0], sizes = [12, 1, 1], strides = [1, 1, 1]} : vector<12x3x3xf32> to vector<12x1x1xf32>
    %23 = vector.broadcast %22 : vector<12x1x1xf32> to vector<12x16x16xf32>
    %24 = arith.mulf %21, %23 : vector<12x16x16xf32>
    %25 = arith.addf %19, %24 : vector<12x16x16xf32>
    %c0_16 = arith.constant 0 : index
    %c0_17 = arith.constant 0 : index
    %c1_18 = arith.constant 1 : index
    %c1_19 = arith.constant 1 : index
    %26 = vector.load %arg2[%c0_16, %c0_17, %c1_18, %c1_19] : memref<1x12x18x18xf32, #tpu.memory_space<vmem>>, vector<1x12x16x16xf32>
    %27 = vector.shape_cast %26 : vector<1x12x16x16xf32> to vector<12x16x16xf32>
    %28 = vector.extract_strided_slice %0 {offsets = [0, 1, 1], sizes = [12, 1, 1], strides = [1, 1, 1]} : vector<12x3x3xf32> to vector<12x1x1xf32>
    %29 = vector.broadcast %28 : vector<12x1x1xf32> to vector<12x16x16xf32>
    %30 = arith.mulf %27, %29 : vector<12x16x16xf32>
    %31 = arith.addf %25, %30 : vector<12x16x16xf32>
    %c0_20 = arith.constant 0 : index
    %c0_21 = arith.constant 0 : index
    %c1_22 = arith.constant 1 : index
    %c2_23 = arith.constant 2 : index
    %32 = vector.load %arg2[%c0_20, %c0_21, %c1_22, %c2_23] : memref<1x12x18x18xf32, #tpu.memory_space<vmem>>, vector<1x12x16x16xf32>
    %33 = vector.shape_cast %32 : vector<1x12x16x16xf32> to vector<12x16x16xf32>
    %34 = vector.extract_strided_slice %0 {offsets = [0, 1, 2], sizes = [12, 1, 1], strides = [1, 1, 1]} : vector<12x3x3xf32> to vector<12x1x1xf32>
    %35 = vector.broadcast %34 : vector<12x1x1xf32> to vector<12x16x16xf32>
    %36 = arith.mulf %33, %35 : vector<12x16x16xf32>
    %37 = arith.addf %31, %36 : vector<12x16x16xf32>
    %c0_24 = arith.constant 0 : index
    %c0_25 = arith.constant 0 : index
    %c2_26 = arith.constant 2 : index
    %c0_27 = arith.constant 0 : index
    %38 = vector.load %arg2[%c0_24, %c0_25, %c2_26, %c0_27] : memref<1x12x18x18xf32, #tpu.memory_space<vmem>>, vector<1x12x16x16xf32>
    %39 = vector.shape_cast %38 : vector<1x12x16x16xf32> to vector<12x16x16xf32>
    %40 = vector.extract_strided_slice %0 {offsets = [0, 2, 0], sizes = [12, 1, 1], strides = [1, 1, 1]} : vector<12x3x3xf32> to vector<12x1x1xf32>
    %41 = vector.broadcast %40 : vector<12x1x1xf32> to vector<12x16x16xf32>
    %42 = arith.mulf %39, %41 : vector<12x16x16xf32>
    %43 = arith.addf %37, %42 : vector<12x16x16xf32>
    %c0_28 = arith.constant 0 : index
    %c0_29 = arith.constant 0 : index
    %c2_30 = arith.constant 2 : index
    %c1_31 = arith.constant 1 : index
    %44 = vector.load %arg2[%c0_28, %c0_29, %c2_30, %c1_31] : memref<1x12x18x18xf32, #tpu.memory_space<vmem>>, vector<1x12x16x16xf32>
    %45 = vector.shape_cast %44 : vector<1x12x16x16xf32> to vector<12x16x16xf32>
    %46 = vector.extract_strided_slice %0 {offsets = [0, 2, 1], sizes = [12, 1, 1], strides = [1, 1, 1]} : vector<12x3x3xf32> to vector<12x1x1xf32>
    %47 = vector.broadcast %46 : vector<12x1x1xf32> to vector<12x16x16xf32>
    %48 = arith.mulf %45, %47 : vector<12x16x16xf32>
    %49 = arith.addf %43, %48 : vector<12x16x16xf32>
    %c0_32 = arith.constant 0 : index
    %c0_33 = arith.constant 0 : index
    %c2_34 = arith.constant 2 : index
    %c2_35 = arith.constant 2 : index
    %50 = vector.load %arg2[%c0_32, %c0_33, %c2_34, %c2_35] : memref<1x12x18x18xf32, #tpu.memory_space<vmem>>, vector<1x12x16x16xf32>
    %51 = vector.shape_cast %50 : vector<1x12x16x16xf32> to vector<12x16x16xf32>
    %52 = vector.extract_strided_slice %0 {offsets = [0, 2, 2], sizes = [12, 1, 1], strides = [1, 1, 1]} : vector<12x3x3xf32> to vector<12x1x1xf32>
    %53 = vector.broadcast %52 : vector<12x1x1xf32> to vector<12x16x16xf32>
    %54 = arith.mulf %51, %53 : vector<12x16x16xf32>
    %55 = arith.addf %49, %54 : vector<12x16x16xf32>
    %c0_36 = arith.constant 0 : index
    %c0_37 = arith.constant 0 : index
    %c0_38 = arith.constant 0 : index
    %56 = vector.load %arg4[%c0_36, %c0_37, %c0_38] : memref<12x1x1xf32, #tpu.memory_space<vmem>>, vector<12x1x1xf32>
    %57 = vector.broadcast %56 : vector<12x1x1xf32> to vector<12x16x16xf32>
    %58 = arith.addf %55, %57 : vector<12x16x16xf32>
    %c0_39 = arith.constant 0 : index
    %c0_40 = arith.constant 0 : index
    %c0_41 = arith.constant 0 : index
    %c0_42 = arith.constant 0 : index
    %59 = vector.load %arg5[%c0_39, %c0_40, %c0_41, %c0_42] : memref<1x12x16x16xf32, #tpu.memory_space<vmem>>, vector<1x12x16x16xf32>
    %60 = vector.shape_cast %59 : vector<1x12x16x16xf32> to vector<12x16x16xf32>
    %61 = vector.shape_cast %58 : vector<12x16x16xf32> to vector<1x12x16x16xf32>
    tpu.vector_store %arg5[%c0_39, %c0_40, %c0_41, %c0_42], %61 {strides = array<i32>} : memref<1x12x16x16xf32, #tpu.memory_space<vmem>>, vector<1x12x16x16xf32>,
    return
  }
  func.func @transform_0(%arg0: i32, %arg1: i32) -> (i32, i32, i32, i32) {
    %c0_i32 = arith.constant 0 : i32
    %c0_i32_0 = arith.constant 0 : i32
    %c0_i32_1 = arith.constant 0 : i32
    return %arg0, %arg1, %c0_i32, %c0_i32_0 : i32, i32, i32, i32
  }
  func.func @transform_1(%arg0: i32, %arg1: i32) -> (i32, i32, i32) {
    %c0_i32 = arith.constant 0 : i32
    %c0_i32_0 = arith.constant 0 : i32
    %c0_i32_1 = arith.constant 0 : i32
    return %arg1, %c0_i32, %c0_i32_0 : i32, i32, i32
  }
  func.func @transform_2(%arg0: i32, %arg1: i32) -> (i32, i32, i32) {
    %c0_i32 = arith.constant 0 : i32
    %c0_i32_0 = arith.constant 0 : i32
    %c0_i32_1 = arith.constant 0 : i32
    return %arg1, %c0_i32, %c0_i32_0 : i32, i32, i32
  }
  func.func @transform_3(%arg0: i32, %arg1: i32) -> (i32, i32, i32, i32) {
    %c0_i32 = arith.constant 0 : i32
    %c0_i32_0 = arith.constant 0 : i32
    %c0_i32_1 = arith.constant 0 : i32
    return %arg0, %arg1, %c0_i32, %c0_i32_0 : i32, i32, i32, i32
  }
}

module attributes {stable_mosaic.version = 11 : i64} {
  func.func @_attn_kernel(%arg0: i32, %arg1: i32, %arg2: memref<2xf32, #tpu.memory_space<smem>>, %arg3: memref<1x1x2x256xf32, #tpu.memory_space<vmem>>, %arg4: memref<1x1x2x256xf32, #tpu.memory_space<vmem>>, %arg5: memref<1x1x2x256xf32, #tpu.memory_space<vmem>>, %arg6: memref<1x1x2x256xf32, #tpu.memory_space<vmem>>) attributes {dimension_semantics = [#tpu.dimension_semantics<parallel>, #tpu.dimension_semantics<parallel>], iteration_bounds = array<i64: 2, 2>, scalar_prefetch = 0 : i64, scratch_operands = 0 : i64, tpu.core_type = #tpu.core_type<tc>, window_params = [{transform_indices = @transform_0, window_bounds = array<i64: 2>}, {transform_indices = @transform_1, window_bounds = array<i64: 1, 1, 2, 256>}, {transform_indices = @transform_2, window_bounds = array<i64: 1, 1, 2, 256>}, {transform_indices = @transform_3, window_bounds = array<i64: 1, 1, 2, 256>}, {transform_indices = @transform_4, window_bounds = array<i64: 1, 1, 2, 256>}]} {
    %c0 = arith.constant 0 : index
    %c0_0 = arith.constant 0 : index
    %c0_1 = arith.constant 0 : index
    %c0_2 = arith.constant 0 : index
    %0 = vector.load %arg3[%c0, %c0_0, %c0_1, %c0_2] : memref<1x1x2x256xf32, #tpu.memory_space<vmem>>, vector<1x1x2x256xf32>
    %1 = vector.shape_cast %0 : vector<1x1x2x256xf32> to vector<2x256xf32>
    %c0_3 = arith.constant 0 : index
    %c0_4 = arith.constant 0 : index
    %c0_5 = arith.constant 0 : index
    %c0_6 = arith.constant 0 : index
    %2 = vector.load %arg4[%c0_3, %c0_4, %c0_5, %c0_6] : memref<1x1x2x256xf32, #tpu.memory_space<vmem>>, vector<1x1x2x256xf32>
    %3 = vector.shape_cast %2 : vector<1x1x2x256xf32> to vector<2x256xf32>
    %c0_7 = arith.constant 0 : index
    %c0_8 = arith.constant 0 : index
    %c0_9 = arith.constant 0 : index
    %c0_10 = arith.constant 0 : index
    %4 = vector.load %arg5[%c0_7, %c0_8, %c0_9, %c0_10] : memref<1x1x2x256xf32, #tpu.memory_space<vmem>>, vector<1x1x2x256xf32>
    %5 = vector.shape_cast %4 : vector<1x1x2x256xf32> to vector<2x256xf32>
    %6 = arith.mulf %1, %1 : vector<2x256xf32>
    %cst = arith.constant dense<0.000000e+00> : vector<2xf32>
    %7 = vector.multi_reduction <add>, %6, %cst [1] : vector<2x256xf32> to vector<2xf32>
    %8 = vector.shape_cast %7 : vector<2xf32> to vector<2x1xf32>
    %9 = math.sqrt %8 : vector<2x1xf32>
    %cst_11 = arith.constant 9.99999996E-13 : f32
    %10 = vector.broadcast %cst_11 : f32 to vector<2x1xf32>
    %11 = arith.maximumf %9, %10 : vector<2x1xf32>
    %12 = vector.broadcast %11 : vector<2x1xf32> to vector<2x256xf32>
    %13 = arith.divf %1, %12 : vector<2x256xf32>
    %14 = arith.mulf %3, %3 : vector<2x256xf32>
    %cst_12 = arith.constant dense<0.000000e+00> : vector<2xf32>
    %15 = vector.multi_reduction <add>, %14, %cst_12 [1] : vector<2x256xf32> to vector<2xf32>
    %16 = vector.shape_cast %15 : vector<2xf32> to vector<2x1xf32>
    %17 = math.sqrt %16 : vector<2x1xf32>
    %cst_13 = arith.constant 9.99999996E-13 : f32
    %18 = vector.broadcast %cst_13 : f32 to vector<2x1xf32>
    %19 = arith.maximumf %17, %18 : vector<2x1xf32>
    %20 = vector.broadcast %19 : vector<2x1xf32> to vector<2x256xf32>
    %21 = arith.divf %3, %20 : vector<2x256xf32>
    %22 = arith.mulf %5, %5 : vector<2x256xf32>
    %cst_14 = arith.constant dense<0.000000e+00> : vector<2xf32>
    %23 = vector.multi_reduction <add>, %22, %cst_14 [1] : vector<2x256xf32> to vector<2xf32>
    %24 = vector.shape_cast %23 : vector<2xf32> to vector<2x1xf32>
    %25 = math.sqrt %24 : vector<2x1xf32>
    %cst_15 = arith.constant 9.99999996E-13 : f32
    %26 = vector.broadcast %cst_15 : f32 to vector<2x1xf32>
    %27 = arith.maximumf %25, %26 : vector<2x1xf32>
    %28 = vector.broadcast %27 : vector<2x1xf32> to vector<2x256xf32>
    %29 = arith.divf %5, %28 : vector<2x256xf32>
    %30 = arith.index_cast %arg1 : i32 to index
    %31 = memref.load %arg2[%30] : memref<2xf32, #tpu.memory_space<smem>>
    %cst_16 = arith.constant dense<0.000000e+00> : vector<2x2xf32>
    %32 = tpu.matmul %13, %21, %cst_16 {dimension_numbers = #tpu.dot_dimension_numbers<[1], [1], [0], [0], [0, 0, 1, 0], [], []>} : vector<2x256xf32>, vector<2x256xf32>, vector<2x2xf32> -> vector<2x2xf32>
    %33 = vector.broadcast %31 : f32 to vector<2x2xf32>
    %34 = arith.mulf %32, %33 : vector<2x2xf32>
    %cst_17 = arith.constant dense<0xFF800000> : vector<2xf32>
    %35 = vector.multi_reduction <maximumf>, %34, %cst_17 [1] : vector<2x2xf32> to vector<2xf32>
    %36 = vector.shape_cast %35 : vector<2xf32> to vector<2x1xf32>
    %37 = vector.broadcast %36 : vector<2x1xf32> to vector<2x2xf32>
    %38 = arith.subf %34, %37 : vector<2x2xf32>
    %39 = math.exp %38 : vector<2x2xf32>
    %cst_18 = arith.constant dense<0.000000e+00> : vector<2xf32>
    %40 = vector.multi_reduction <add>, %39, %cst_18 [1] : vector<2x2xf32> to vector<2xf32>
    %41 = vector.shape_cast %40 : vector<2xf32> to vector<2x1xf32>
    %42 = vector.broadcast %41 : vector<2x1xf32> to vector<2x2xf32>
    %43 = arith.divf %39, %42 : vector<2x2xf32>
    %cst_19 = arith.constant dense<0.000000e+00> : vector<2x256xf32>
    %44 = tpu.matmul %43, %29, %cst_19 {dimension_numbers = #tpu.dot_dimension_numbers<[1], [0], [0], [1], [0, 0, 1, 1], [], []>} : vector<2x2xf32>, vector<2x256xf32>, vector<2x256xf32> -> vector<2x256xf32>
    %c0_20 = arith.constant 0 : index
    %c0_21 = arith.constant 0 : index
    %c0_22 = arith.constant 0 : index
    %c0_23 = arith.constant 0 : index
    %45 = vector.load %arg6[%c0_20, %c0_21, %c0_22, %c0_23] : memref<1x1x2x256xf32, #tpu.memory_space<vmem>>, vector<1x1x2x256xf32>
    %46 = vector.shape_cast %45 : vector<1x1x2x256xf32> to vector<2x256xf32>
    %47 = vector.shape_cast %44 : vector<2x256xf32> to vector<1x1x2x256xf32>
    tpu.vector_store %arg6[%c0_20, %c0_21, %c0_22, %c0_23], %47 {strides = array<i32>} : memref<1x1x2x256xf32, #tpu.memory_space<vmem>>, vector<1x1x2x256xf32>,
    return
  }
  func.func @transform_0(%arg0: i32, %arg1: i32) -> i32 {
    %c0_i32 = arith.constant 0 : i32
    %c0_i32_0 = arith.constant 0 : i32
    return %c0_i32 : i32
  }
  func.func @transform_1(%arg0: i32, %arg1: i32) -> (i32, i32, i32, i32) {
    %c0_i32 = arith.constant 0 : i32
    %c0_i32_0 = arith.constant 0 : i32
    %c0_i32_1 = arith.constant 0 : i32
    return %arg0, %arg1, %c0_i32, %c0_i32_0 : i32, i32, i32, i32
  }
  func.func @transform_2(%arg0: i32, %arg1: i32) -> (i32, i32, i32, i32) {
    %c2_i32 = arith.constant 2 : i32
    %0 = arith.addi %c2_i32, %arg1 : i32
    %c0_i32 = arith.constant 0 : i32
    %c0_i32_0 = arith.constant 0 : i32
    %c0_i32_1 = arith.constant 0 : i32
    return %arg0, %0, %c0_i32, %c0_i32_0 : i32, i32, i32, i32
  }
  func.func @transform_3(%arg0: i32, %arg1: i32) -> (i32, i32, i32, i32) {
    %c4_i32 = arith.constant 4 : i32
    %0 = arith.addi %c4_i32, %arg1 : i32
    %c0_i32 = arith.constant 0 : i32
    %c0_i32_0 = arith.constant 0 : i32
    %c0_i32_1 = arith.constant 0 : i32
    return %arg0, %0, %c0_i32, %c0_i32_0 : i32, i32, i32, i32
  }
  func.func @transform_4(%arg0: i32, %arg1: i32) -> (i32, i32, i32, i32) {
    %c0_i32 = arith.constant 0 : i32
    %c0_i32_0 = arith.constant 0 : i32
    %c0_i32_1 = arith.constant 0 : i32
    return %arg0, %arg1, %c0_i32, %c0_i32_0 : i32, i32, i32, i32
  }
}

module attributes {stable_mosaic.version = 11 : i64} {
  func.func @_pointwise_kernel(%arg0: i32, %arg1: i32, %arg2: memref<1x4x256xf32, #tpu.memory_space<vmem>>, %arg3: memref<4x4xf32, #tpu.memory_space<vmem>>, %arg4: memref<4x1xf32, #tpu.memory_space<vmem>>, %arg5: memref<1x4x256xf32, #tpu.memory_space<vmem>>) attributes {dimension_semantics = [#tpu.dimension_semantics<parallel>, #tpu.dimension_semantics<parallel>], iteration_bounds = array<i64: 2, 1>, scalar_prefetch = 0 : i64, scratch_operands = 0 : i64, tpu.core_type = #tpu.core_type<tc>, window_params = [{transform_indices = @transform_0, window_bounds = array<i64: 1, 4, 256>}, {pipeline_mode = #tpu.pipeline_mode<synchronous>, transform_indices = @transform_1, window_bounds = array<i64: 4, 4>}, {pipeline_mode = #tpu.pipeline_mode<synchronous>, transform_indices = @transform_2, window_bounds = array<i64: 4, 1>}, {transform_indices = @transform_3, window_bounds = array<i64: 1, 4, 256>}]} {
    %c0 = arith.constant 0 : index
    %c0_0 = arith.constant 0 : index
    %c0_1 = arith.constant 0 : index
    %0 = vector.load %arg2[%c0, %c0_0, %c0_1] : memref<1x4x256xf32, #tpu.memory_space<vmem>>, vector<1x4x256xf32>
    %1 = vector.shape_cast %0 : vector<1x4x256xf32> to vector<4x256xf32>
    %c0_2 = arith.constant 0 : index
    %c0_3 = arith.constant 0 : index
    %2 = vector.load %arg3[%c0_2, %c0_3] : memref<4x4xf32, #tpu.memory_space<vmem>>, vector<4x4xf32>
    %c0_4 = arith.constant 0 : index
    %c0_5 = arith.constant 0 : index
    %3 = vector.load %arg4[%c0_4, %c0_5] : memref<4x1xf32, #tpu.memory_space<vmem>>, vector<4x1xf32>
    %cst = arith.constant dense<0.000000e+00> : vector<4x256xf32>
    %4 = tpu.matmul %2, %1, %cst {dimension_numbers = #tpu.dot_dimension_numbers<[1], [0], [0], [1], [0, 0, 1, 1], [], []>} : vector<4x4xf32>, vector<4x256xf32>, vector<4x256xf32> -> vector<4x256xf32>
    %5 = vector.broadcast %3 : vector<4x1xf32> to vector<4x256xf32>
    %6 = arith.addf %4, %5 : vector<4x256xf32>
    %c0_6 = arith.constant 0 : index
    %c0_7 = arith.constant 0 : index
    %c0_8 = arith.constant 0 : index
    %7 = vector.load %arg5[%c0_6, %c0_7, %c0_8] : memref<1x4x256xf32, #tpu.memory_space<vmem>>, vector<1x4x256xf32>
    %8 = vector.shape_cast %7 : vector<1x4x256xf32> to vector<4x256xf32>
    %9 = vector.shape_cast %6 : vector<4x256xf32> to vector<1x4x256xf32>
    tpu.vector_store %arg5[%c0_6, %c0_7, %c0_8], %9 {strides = array<i32>} : memref<1x4x256xf32, #tpu.memory_space<vmem>>, vector<1x4x256xf32>,
    return
  }
  func.func @transform_0(%arg0: i32, %arg1: i32) -> (i32, i32, i32) {
    %c0_i32 = arith.constant 0 : i32
    %c0_i32_0 = arith.constant 0 : i32
    return %arg0, %c0_i32, %arg1 : i32, i32, i32
  }
  func.func @transform_1(%arg0: i32, %arg1: i32) -> (i32, i32) {
    %c0_i32 = arith.constant 0 : i32
    %c0_i32_0 = arith.constant 0 : i32
    %c0_i32_1 = arith.constant 0 : i32
    return %c0_i32, %c0_i32_0 : i32, i32
  }
  func.func @transform_2(%arg0: i32, %arg1: i32) -> (i32, i32) {
    %c0_i32 = arith.constant 0 : i32
    %c0_i32_0 = arith.constant 0 : i32
    %c0_i32_1 = arith.constant 0 : i32
    return %c0_i32, %c0_i32_0 : i32, i32
  }
  func.func @transform_3(%arg0: i32, %arg1: i32) -> (i32, i32, i32) {
    %c0_i32 = arith.constant 0 : i32
    %c0_i32_0 = arith.constant 0 : i32
    return %arg0, %c0_i32, %arg1 : i32, i32, i32
  }
}

</mosaic_0001>

<llo_original>
// kernel: self_attention_forward.6
$region0: #{self_attention_forward.6}
  #allocation0 [shape = 'u32[]', space=smem, size = 0x4, offset = 0x4, fixed_abs, tag = 'smem constant byte address 0x4 - core index']
  #allocation1 [shape = 'u32[72,128]{1,0:T(1,128)}', space=vmem, size = 0x9000, scoped, tag = 'internal scratch']
  %s0 = inlined_call_operand.vmem [shape: f32[2,4,256], index: 0, kind: input, shape index: {}]
  %s1 = inlined_call_operand.vmem [shape: f32[12,4], index: 1, kind: input, shape index: {}]
  %s2 = inlined_call_operand.vmem [shape: f32[12,1], index: 2, kind: input, shape index: {}]
  %s3 = inlined_call_operand.vmem [shape: f32[2,12,256], index: 3, kind: output, shape index: {}]
  %s4 = sld [smem:[#allocation0]]
  $region45: #{self_attention_forward.6} parent=0
    _
  %s6 = ssub.s32 1, %s4
  %s7 = scalar_select 0, %s6, %s4
  loop: start=0, step=1, limit=4
  $region2: #{self_attention_forward.6} parent=0 // loop_pre_header
    _
  $region3: #{self_attention_forward.6} parent=0 // loop_header
    %s9 = sphi 0, %s13
    %p10 = scmp.ge.s32.totalorder %s9, 4
    %s16 = sphi 0, %s28
    %s17 = sphi 0, %s24
    %s18 = sphi 0, %s16
    %s19 = sphi 0, %s17
    %s20 = sphi 0, %s18
    %s21 = sphi 0, %s19
    %s33 = sphi 0, %s35
    %s36 = sphi 0, %s33
    %s37 = sphi 0, %s36
    %s53 = sphi 0, %s37
    %s57 = sphi 0, %s57
    %s59 = sphi 0, %s57
    %s60 = sphi 0, %s59
    %s74 = sphi 0, %s60
    %s78 = sphi 0, %s78
    %s80 = sphi 0, %s78
    %s81 = sphi 0, %s80
    %s95 = sphi 0, %s81
    %s103 = sphi 0, %s105
    %s106 = sphi 0, %s103
    %s107 = sphi 0, %s106
    %s123 = sphi 0, %s107
  $region4: #{self_attention_forward.6} parent=0 // loop_header_branch
    %12 = sbr.rel (%p10) target = $region8
  $region5: #{self_attention_forward.6} parent=0 // loop_body
    %s14 = ssub.s32 %s9, 1
    %s15 = ssub.s32 %s9, 2
    %s22 = sadd.s32 1, %s17
    %p23 = scmp.ge.s32.totalorder %s22, 1
    %s24 = scalar_select %p23, 0, %s22
    %s25 = sadd.s32 1, %s16
    %s26 = scalar_select %p23, %s25, %s16
    %p27 = scmp.ge.s32.totalorder %s26, 2
    %s28 = scalar_select %p27, 0, %s26
    %s29 = ssub.s32 %s16, %s28
    %s30 = ssub.s32 %s17, %s24
    %s31 = sor.u32 %s29, %s30
    %p32 = scmp.eq.s32.totalorder %s31, 0
    %s34 = sadd.s32 %s33, 1
    %s35 = scalar_select %p32, %s33, %s34
    %p38 = pneg %p32
    %p39 = scmp.eq.s32.totalorder %s9, 1
    %p40 = por %p38, %p39
    %p41 = scmp.ne.s32.totalorder %s33, %s36
    %p42 = scmp.eq.s32.totalorder %s9, 0
    %p43 = por %p41, %p42
    %p44 = scmp.ne.s32.totalorder %s33, %s36
    %p45 = scmp.eq.s32.totalorder %s14, 1
    %p46 = por %p44, %p45
    %p47 = scmp.ne.s32.totalorder %s36, %s37
    %p48 = scmp.eq.s32.totalorder %s14, 0
    %p49 = por %p47, %p48
    %p50 = scmp.ne.s32.totalorder %s36, %s37
    %p51 = scmp.eq.s32.totalorder %s15, 1
    %p52 = por %p50, %p51
    %p54 = scmp.ne.s32.totalorder %s37, %s53
    %p55 = scmp.eq.s32.totalorder %s15, 0
    %p56 = por %p54, %p55
    %s58 = sadd.s32 %s57, 1
    %p61 = scmp.eq.s32.totalorder %s9, 1
    %p62 = scmp.ne.s32.totalorder %s57, %s59
    %p63 = scmp.eq.s32.totalorder %s9, 0
    %p64 = por %p62, %p63
    %p65 = scmp.ne.s32.totalorder %s57, %s59
    %p66 = scmp.eq.s32.totalorder %s14, 1
    %p67 = por %p65, %p66
    %p68 = scmp.ne.s32.totalorder %s59, %s60
    %p69 = scmp.eq.s32.totalorder %s14, 0
    %p70 = por %p68, %p69
    %p71 = scmp.ne.s32.totalorder %s59, %s60
    %p72 = scmp.eq.s32.totalorder %s15, 1
    %p73 = por %p71, %p72
    %p75 = scmp.ne.s32.totalorder %s60, %s74
    %p76 = scmp.eq.s32.totalorder %s15, 0
    %p77 = por %p75, %p76
    %s79 = sadd.s32 %s78, 1
    %p82 = scmp.eq.s32.totalorder %s9, 1
    %p83 = scmp.ne.s32.totalorder %s78, %s80
    %p84 = scmp.eq.s32.totalorder %s9, 0
    %p85 = por %p83, %p84
    %p86 = scmp.ne.s32.totalorder %s78, %s80
    %p87 = scmp.eq.s32.totalorder %s14, 1
    %p88 = por %p86, %p87
    %p89 = scmp.ne.s32.totalorder %s80, %s81
    %p90 = scmp.eq.s32.totalorder %s14, 0
    %p91 = por %p89, %p90
    %p92 = scmp.ne.s32.totalorder %s80, %s81
    %p93 = scmp.eq.s32.totalorder %s15, 1
    %p94 = por %p92, %p93
    %p96 = scmp.ne.s32.totalorder %s81, %s95
    %p97 = scmp.eq.s32.totalorder %s15, 0
    %p98 = por %p96, %p97
    %s99 = ssub.s32 %s16, %s28
    %s100 = ssub.s32 %s17, %s24
    %s101 = sor.u32 %s99, %s100
    %p102 = scmp.eq.s32.totalorder %s101, 0
    %s104 = sadd.s32 %s103, 1
    %s105 = scalar_select %p102, %s103, %s104
    %p108 = pneg %p102
    %p109 = scmp.eq.s32.totalorder %s9, 1
    %p110 = por %p108, %p109
    %p111 = scmp.ne.s32.totalorder %s103, %s106
    %p112 = scmp.eq.s32.totalorder %s9, 0
    %p113 = por %p111, %p112
    %p114 = scmp.ne.s32.totalorder %s103, %s106
    %p115 = scmp.eq.s32.totalorder %s14, 1
    %p116 = por %p114, %p115
    %p117 = scmp.ne.s32.totalorder %s106, %s107
    %p118 = scmp.eq.s32.totalorder %s14, 0
    %p119 = por %p117, %p118
    %p120 = scmp.ne.s32.totalorder %s106, %s107
    %p121 = scmp.eq.s32.totalorder %s15, 1
    %p122 = por %p120, %p121
    %p124 = scmp.ne.s32.totalorder %s107, %s123
    %p125 = scmp.eq.s32.totalorder %s15, 0
    %p126 = por %p124, %p125
    %p127 = scmp.le.s32.totalorder 1, %s9
    %p128 = scmp.lt.s32.totalorder %s9, 3
    %p129 = pnand %p127, %p128
    %p130 = pneg %p129
    // Predicated region
    $region9: #{self_attention_forward.6} parent=5 // pred_check
      _
    $region10: #{self_attention_forward.6} parent=5 // pred_check_branch
      %132 = sbr.rel (%p129) target = $region12
    $region11: #{self_attention_forward.6} parent=5 // pred_region
      %s133 = ssub.s32 %s9, 1
      // Predicated region
      $region13: #{self_attention_forward.6} parent=11 // pred_check
        %p134 = pneg %p70
      $region14: #{self_attention_forward.6} parent=11 // pred_check_branch
        %136 = sbr.rel (%p134) target = $region16
      $region15: #{self_attention_forward.6} parent=11 // pred_region
        _
      $region16: #{self_attention_forward.6} parent=11 // pred_fallthru
        _
      // Predicated region
      $region17: #{self_attention_forward.6} parent=11 // pred_check
        %p137 = pneg %p91
      $region18: #{self_attention_forward.6} parent=11 // pred_check_branch
        %139 = sbr.rel (%p137) target = $region20
      $region19: #{self_attention_forward.6} parent=11 // pred_region
        _
      $region20: #{self_attention_forward.6} parent=11 // pred_fallthru
        _
    $region12: #{self_attention_forward.6} parent=5 // pred_fallthru
      _
    %p140 = scmp.lt.s32.totalorder %s9, 2
    // Predicated region
    $region21: #{self_attention_forward.6} parent=5 // pred_check
      %p141 = pneg %p140
    $region22: #{self_attention_forward.6} parent=5 // pred_check_branch
      %143 = sbr.rel (%p141) target = $region24
    $region23: #{self_attention_forward.6} parent=5 // pred_region
      // Predicated region
      $region25: #{self_attention_forward.6} parent=23 // pred_check
        %p144 = pneg %p43
      $region26: #{self_attention_forward.6} parent=23 // pred_check_branch
        %146 = sbr.rel (%p144) target = $region28
      $region27: #{self_attention_forward.6} parent=23 // pred_region
        %s147 = smul.u32 2, %s17
        %p148 = scmp.lt.s32.totalorder %s16, 1
        %s149 = scalar_select %p148, %s16, 1
        %p150 = scmp.lt.s32.totalorder %s147, 1
        %s151 = scalar_select %p150, %s147, 1
        %s152 = smul.addr %s149, 2
        %s153 = sadd.s32 %s151, %s152
        %s154 = smul.addr %s153, 4
        %s155 = scalar_lea.vmem %s0, %s154
        %s156 = smul.u32 2, %s17
      $region28: #{self_attention_forward.6} parent=23 // pred_fallthru
        _
    $region24: #{self_attention_forward.6} parent=5 // pred_fallthru
      _
    %p157 = scmp.le.s32.totalorder 1, %s9
    %p158 = scmp.lt.s32.totalorder %s9, 3
    %p159 = pnand %p157, %p158
    %p160 = pneg %p159
    // Predicated region
    $region29: #{self_attention_forward.6} parent=5 // pred_check
      _
    $region30: #{self_attention_forward.6} parent=5 // pred_check_branch
      %162 = sbr.rel (%p159) target = $region32
    $region31: #{self_attention_forward.6} parent=5 // pred_region
      %s163 = ssub.s32 %s9, 1
      %s164 = smul.u32 2, %s19
      %p165 = scmp.lt.s32.totalorder %s18, 1
      %s166 = scalar_select %p165, %s18, 1
      %p167 = scmp.lt.s32.totalorder %s164, 1
      %s168 = scalar_select %p167, %s164, 1
      %s169 = smul.addr %s166, 2
      %s170 = sadd.s32 %s168, %s169
      %s171 = smul.addr %s170, 4
      %s172 = scalar_lea.vmem %s0, %s171
      %p173 = pneg %p49
      %p174 = pneg %p46
      %p175 = pneg %p70
      %p176 = pneg %p67
      %p177 = pneg %p91
      %p178 = pneg %p88
      %p179 = pneg %p119
      %p180 = pneg %p116
      %s181 = smul.u32 2, %s19
      %p182 = scmp.lt.s32.totalorder %s18, 1
      %s183 = scalar_select %p182, %s18, 1
      %p184 = scmp.lt.s32.totalorder %s181, 1
      %s185 = scalar_select %p184, %s181, 1
      %s186 = smul.addr %s183, 4
      %s187 = sadd.s32 %s185, %s186
      %s188 = smul.addr %s187, 8
      %s189 = scalar_lea.vmem %s3, %s188
      %s190 = smul.u32 2, %s19
      %p191 = scmp.lt.s32.totalorder %s18, 1
      %s192 = scalar_select %p191, %s18, 1
      %p193 = scmp.lt.s32.totalorder %s190, 1
      %s194 = scalar_select %p193, %s190, 1
      %s195 = smul.addr %s192, 2
      %s196 = sadd.s32 %s194, %s195
      %s197 = smul.addr %s196, 4
      %s198 = scalar_lea.vmem %s0, %s197
      %s199 = smul.u32 2, %s19
      %s200 = smul.u32 2, %s19
      %p201 = scmp.lt.s32.totalorder %s18, 1
      %s202 = scalar_select %p201, %s18, 1
      %p203 = scmp.lt.s32.totalorder %s200, 1
      %s204 = scalar_select %p203, %s200, 1
      %s205 = smul.addr %s202, 4
      %s206 = sadd.s32 %s204, %s205
      %s207 = smul.addr %s206, 8
      %s208 = scalar_lea.vmem %s3, %s207
      %s209 = smul.u32 2, %s19
      %v210 = vld [vmem:[%s198] sm:$0xff]
      %v211 = vld [vmem:[%s1] sm:$0xff]
      %v212 = vld [vmem:[%s1 + $0x8] sm:$0xf]
      %v213 = vld [vmem:[%s2] sm:$0xff]
      %v214 = vld [vmem:[%s2 + $0x8] sm:$0xf]
      %216 = vset.pattern.permute.xlu0 0
      %217 = vperm.xlu0 %216, %v213
      %v218 = vpop.permute.xlu0 %217
      %221 = vset.pattern.permute.xlu0 0
      %222 = vperm.xlu0 %221, %v214
      %v223 = vpop.permute.xlu0 %222
      %226 = vst [vmem:[#allocation1] ss:$2 sm:$0xff] %v210
      %v227 = vld.sshfl [vmem:[#allocation1] sm:$0xff pattern:$0x75316420]
      %v228 = vld.sshfl [vmem:[#allocation1 + $0x8] sm:$0xff pattern:$0x75316420]
      %vm229 = vcmask 31744
      %v231 = vsel %vm229, %v211, 0
      %v234 = vsel %vm229, %v212, 0
      %vm236 = vcmask 1043456
      %v237 = vsel %vm236, %v227, 0
      %v239 = vsel %vm236, %v228, 0
      %241 = vmatpush.msra.mxu0 0.0
      %242 = vmatpush.msra.mxu0 0.0
      %243 = vmatpush.msra.mxu0 0.0
      %244 = vmatpush.msra.mxu0 0.0
      %245 = vmatpush.msra.mxu0 0.0
      %246 = vmatpush.msra.mxu0 0.0
      %247 = vmatpush.msra.mxu0 0.0
      %248 = vmatpush.msra.mxu0 0.0
      %249 = vmatpush.msra.mxu0 0.0
      %250 = vmatpush.msra.mxu0 0.0
      %251 = vmatpush.msra.mxu0 0.0
      %252 = vmatpush.msra.mxu0 0.0
      %253 = vmatpush.msra.mxu0 0.0
      %254 = vmatpush.msra.mxu0 0.0
      %255 = vmatpush.msra.mxu0 0.0
      %256 = vmatpush.msra.mxu0 %v237
      %257 = vmatmul.f32.gmra.mxu0 %v231
      %v258 = vpop.f32.mrf.mxu0
      %v259 = vadd.f32 %v218, %v258
      %260 = vmatmul.f32.gmra.mxu0 %v234
      %v261 = vpop.f32.mrf.mxu0
      %v262 = vadd.f32 %v223, %v261
      %263 = vdwg.mxu0
      %264 = vmatpush.msra.mxu0 0.0
      %265 = vmatpush.msra.mxu0 0.0
      %266 = vmatpush.msra.mxu0 0.0
      %267 = vmatpush.msra.mxu0 0.0
      %268 = vmatpush.msra.mxu0 0.0
      %269 = vmatpush.msra.mxu0 0.0
      %270 = vmatpush.msra.mxu0 0.0
      %271 = vmatpush.msra.mxu0 0.0
      %272 = vmatpush.msra.mxu0 0.0
      %273 = vmatpush.msra.mxu0 0.0
      %274 = vmatpush.msra.mxu0 0.0
      %275 = vmatpush.msra.mxu0 0.0
      %276 = vmatpush.msra.mxu0 0.0
      %277 = vmatpush.msra.mxu0 0.0
      %278 = vmatpush.msra.mxu0 0.0
      %279 = vmatpush.msra.mxu0 %v239
      %280 = vmatmul.f32.gmra.mxu0 %v231
      %v281 = vpop.f32.mrf.mxu0
      %v282 = vadd.f32 %v218, %v281
      %283 = vmatmul.f32.gmra.mxu0 %v234
      %v284 = vpop.f32.mrf.mxu0
      %v285 = vadd.f32 %v223, %v284
      %286 = vdwg.mxu0
      %287 = vst [vmem:[%s208] sm:$0xff] %v259
      %288 = vst [vmem:[%s208 + $0x8] sm:$0xff] %v282
      %289 = vst [vmem:[%s208 + $0x10] sm:$0xf] %v262
      %290 = vst [vmem:[%s208 + $0x18] sm:$0xf] %v285
      %s291 = smul.u32 2, %s19
      %p292 = scmp.lt.s32.totalorder %s18, 1
      %s293 = scalar_select %p292, %s18, 1
      %p294 = scmp.lt.s32.totalorder %s291, 1
      %s295 = scalar_select %p294, %s291, 1
      %s296 = smul.addr %s293, 4
      %s297 = sadd.s32 %s295, %s296
      %s298 = smul.addr %s297, 8
      %s299 = scalar_lea.vmem %s3, %s298
      // Predicated region
      $region33: #{self_attention_forward.6} parent=31 // pred_check
        %p300 = pneg %p116
      $region34: #{self_attention_forward.6} parent=31 // pred_check_branch
        %302 = sbr.rel (%p300) target = $region36
      $region35: #{self_attention_forward.6} parent=31 // pred_region
        %s303 = smul.u32 2, %s19
      $region36: #{self_attention_forward.6} parent=31 // pred_fallthru
        _
    $region32: #{self_attention_forward.6} parent=5 // pred_fallthru
      _
    %p304 = scmp.le.s32.totalorder 2, %s9
    // Predicated region
    $region37: #{self_attention_forward.6} parent=5 // pred_check
      %p305 = pneg %p304
    $region38: #{self_attention_forward.6} parent=5 // pred_check_branch
      %307 = sbr.rel (%p305) target = $region40
    $region39: #{self_attention_forward.6} parent=5 // pred_region
      %s308 = ssub.s32 %s9, 2
      // Predicated region
      $region41: #{self_attention_forward.6} parent=39 // pred_check
        %p309 = pneg %p122
      $region42: #{self_attention_forward.6} parent=39 // pred_check_branch
        %311 = sbr.rel (%p309) target = $region44
      $region43: #{self_attention_forward.6} parent=39 // pred_region
        %s312 = smul.u32 2, %s21
        %p313 = scmp.lt.s32.totalorder %s20, 1
        %s314 = scalar_select %p313, %s20, 1
        %p315 = scmp.lt.s32.totalorder %s312, 1
        %s316 = scalar_select %p315, %s312, 1
        %s317 = smul.addr %s314, 4
        %s318 = sadd.s32 %s316, %s317
        %s319 = smul.addr %s318, 8
        %s320 = scalar_lea.vmem %s3, %s319
      $region44: #{self_attention_forward.6} parent=39 // pred_fallthru
        _
    $region40: #{self_attention_forward.6} parent=5 // pred_fallthru
      _
  $region6: #{self_attention_forward.6} parent=0 // loop_footer
    %s13 = sadd.s32 1, %s9
  $region7: #{self_attention_forward.6} parent=0 // loop_footer_branch
    %8 = sbr.rel target = $region3
  $region8: #{self_attention_forward.6} parent=0 // loop_exit
    _

// kernel: self_attention_forward.5
$region0: #{self_attention_forward.5}
  #allocation0 [shape = 'u32[]', space=smem, size = 0x4, offset = 0x4, fixed_abs, tag = 'smem constant byte address 0x4 - core index']
  #allocation1 [shape = 'u32[72,128]{1,0:T(1,128)}', space=vmem, size = 0x9000, scoped, tag = 'internal scratch']
  %s0 = inlined_call_operand.vmem [shape: f32[2,4,256], index: 0, kind: input, shape index: {}]
  %s1 = inlined_call_operand.vmem [shape: f32[2,4,256], index: 1, kind: input, shape index: {}]
  %s2 = inlined_call_operand.vmem [shape: f32[4,4], index: 2, kind: input, shape index: {}]
  %s3 = inlined_call_operand.vmem [shape: f32[4,1], index: 3, kind: input, shape index: {}]
  %s4 = inlined_call_operand.vmem [shape: f32[4,4], index: 4, kind: input, shape index: {}]
  %s5 = inlined_call_operand.vmem [shape: f32[4,4], index: 5, kind: input, shape index: {}]
  %s6 = inlined_call_operand.vmem [shape: f32[4,1], index: 6, kind: input, shape index: {}]
  %s7 = inlined_call_operand.vmem [shape: f32[4,4], index: 7, kind: input, shape index: {}]
  %s8 = inlined_call_operand.vmem [shape: f32[4,4], index: 8, kind: input, shape index: {}]
  %s9 = inlined_call_operand.vmem [shape: f32[4,1], index: 9, kind: input, shape index: {}]
  %s10 = inlined_call_operand.vmem [shape: f32[4,4], index: 10, kind: input, shape index: {}]
  %s11 = inlined_call_operand.vmem [shape: f32[4,4], index: 11, kind: input, shape index: {}]
  %s12 = inlined_call_operand.vmem [shape: f32[4,1], index: 12, kind: input, shape index: {}]
  %s13 = inlined_call_operand.vmem [shape: f32[2,4,256], index: 13, kind: output, shape index: {}]
  %s14 = sld [smem:[#allocation0]]
  $region85: #{self_attention_forward.5} parent=0
    _
  %s16 = ssub.s32 1, %s14
  %s17 = scalar_select 0, %s16, %s14
  loop: start=0, step=1, limit=4
  $region2: #{self_attention_forward.5} parent=0 // loop_pre_header
    _
  $region3: #{self_attention_forward.5} parent=0 // loop_header
    %s19 = sphi 0, %s23
    %p20 = scmp.ge.s32.totalorder %s19, 4
    %s26 = sphi 0, %s38
    %s27 = sphi 0, %s34
    %s28 = sphi 0, %s26
    %s29 = sphi 0, %s27
    %s30 = sphi 0, %s28
    %s31 = sphi 0, %s29
    %s43 = sphi 0, %s45
    %s46 = sphi 0, %s43
    %s47 = sphi 0, %s46
    %s63 = sphi 0, %s47
    %s71 = sphi 0, %s73
    %s74 = sphi 0, %s71
    %s75 = sphi 0, %s74
    %s91 = sphi 0, %s75
    %s95 = sphi 0, %s95
    %s97 = sphi 0, %s95
    %s98 = sphi 0, %s97
    %s112 = sphi 0, %s98
    %s116 = sphi 0, %s116
    %s118 = sphi 0, %s116
    %s119 = sphi 0, %s118
    %s133 = sphi 0, %s119
    %s137 = sphi 0, %s137
    %s139 = sphi 0, %s137
    %s140 = sphi 0, %s139
    %s154 = sphi 0, %s140
    %s158 = sphi 0, %s158
    %s160 = sphi 0, %s158
    %s161 = sphi 0, %s160
    %s175 = sphi 0, %s161
    %s179 = sphi 0, %s179
    %s181 = sphi 0, %s179
    %s182 = sphi 0, %s181
    %s196 = sphi 0, %s182
    %s200 = sphi 0, %s200
    %s202 = sphi 0, %s200
    %s203 = sphi 0, %s202
    %s217 = sphi 0, %s203
    %s221 = sphi 0, %s221
    %s223 = sphi 0, %s221
    %s224 = sphi 0, %s223
    %s238 = sphi 0, %s224
    %s242 = sphi 0, %s242
    %s244 = sphi 0, %s242
    %s245 = sphi 0, %s244
    %s259 = sphi 0, %s245
    %s263 = sphi 0, %s263
    %s265 = sphi 0, %s263
    %s266 = sphi 0, %s265
    %s280 = sphi 0, %s266
    %s284 = sphi 0, %s284
    %s286 = sphi 0, %s284
    %s287 = sphi 0, %s286
    %s301 = sphi 0, %s287
    %s305 = sphi 0, %s305
    %s307 = sphi 0, %s305
    %s308 = sphi 0, %s307
    %s322 = sphi 0, %s308
    %s330 = sphi 0, %s332
    %s333 = sphi 0, %s330
    %s334 = sphi 0, %s333
    %s350 = sphi 0, %s334
  $region4: #{self_attention_forward.5} parent=0 // loop_header_branch
    %22 = sbr.rel (%p20) target = $region8
  $region5: #{self_attention_forward.5} parent=0 // loop_body
    %s24 = ssub.s32 %s19, 1
    %s25 = ssub.s32 %s19, 2
    %s32 = sadd.s32 1, %s27
    %p33 = scmp.ge.s32.totalorder %s32, 1
    %s34 = scalar_select %p33, 0, %s32
    %s35 = sadd.s32 1, %s26
    %s36 = scalar_select %p33, %s35, %s26
    %p37 = scmp.ge.s32.totalorder %s36, 2
    %s38 = scalar_select %p37, 0, %s36
    %s39 = ssub.s32 %s26, %s38
    %s40 = ssub.s32 %s27, %s34
    %s41 = sor.u32 %s39, %s40
    %p42 = scmp.eq.s32.totalorder %s41, 0
    %s44 = sadd.s32 %s43, 1
    %s45 = scalar_select %p42, %s43, %s44
    %p48 = pneg %p42
    %p49 = scmp.eq.s32.totalorder %s19, 1
    %p50 = por %p48, %p49
    %p51 = scmp.ne.s32.totalorder %s43, %s46
    %p52 = scmp.eq.s32.totalorder %s19, 0
    %p53 = por %p51, %p52
    %p54 = scmp.ne.s32.totalorder %s43, %s46
    %p55 = scmp.eq.s32.totalorder %s24, 1
    %p56 = por %p54, %p55
    %p57 = scmp.ne.s32.totalorder %s46, %s47
    %p58 = scmp.eq.s32.totalorder %s24, 0
    %p59 = por %p57, %p58
    %p60 = scmp.ne.s32.totalorder %s46, %s47
    %p61 = scmp.eq.s32.totalorder %s25, 1
    %p62 = por %p60, %p61
    %p64 = scmp.ne.s32.totalorder %s47, %s63
    %p65 = scmp.eq.s32.totalorder %s25, 0
    %p66 = por %p64, %p65
    %s67 = ssub.s32 %s26, %s38
    %s68 = ssub.s32 %s27, %s34
    %s69 = sor.u32 %s67, %s68
    %p70 = scmp.eq.s32.totalorder %s69, 0
    %s72 = sadd.s32 %s71, 1
    %s73 = scalar_select %p70, %s71, %s72
    %p76 = pneg %p70
    %p77 = scmp.eq.s32.totalorder %s19, 1
    %p78 = por %p76, %p77
    %p79 = scmp.ne.s32.totalorder %s71, %s74
    %p80 = scmp.eq.s32.totalorder %s19, 0
    %p81 = por %p79, %p80
    %p82 = scmp.ne.s32.totalorder %s71, %s74
    %p83 = scmp.eq.s32.totalorder %s24, 1
    %p84 = por %p82, %p83
    %p85 = scmp.ne.s32.totalorder %s74, %s75
    %p86 = scmp.eq.s32.totalorder %s24, 0
    %p87 = por %p85, %p86
    %p88 = scmp.ne.s32.totalorder %s74, %s75
    %p89 = scmp.eq.s32.totalorder %s25, 1
    %p90 = por %p88, %p89
    %p92 = scmp.ne.s32.totalorder %s75, %s91
    %p93 = scmp.eq.s32.totalorder %s25, 0
    %p94 = por %p92, %p93
    %s96 = sadd.s32 %s95, 1
    %p99 = scmp.eq.s32.totalorder %s19, 1
    %p100 = scmp.ne.s32.totalorder %s95, %s97
    %p101 = scmp.eq.s32.totalorder %s19, 0
    %p102 = por %p100, %p101
    %p103 = scmp.ne.s32.totalorder %s95, %s97
    %p104 = scmp.eq.s32.totalorder %s24, 1
    %p105 = por %p103, %p104
    %p106 = scmp.ne.s32.totalorder %s97, %s98
    %p107 = scmp.eq.s32.totalorder %s24, 0
    %p108 = por %p106, %p107
    %p109 = scmp.ne.s32.totalorder %s97, %s98
    %p110 = scmp.eq.s32.totalorder %s25, 1
    %p111 = por %p109, %p110
    %p113 = scmp.ne.s32.totalorder %s98, %s112
    %p114 = scmp.eq.s32.totalorder %s25, 0
    %p115 = por %p113, %p114
    %s117 = sadd.s32 %s116, 1
    %p120 = scmp.eq.s32.totalorder %s19, 1
    %p121 = scmp.ne.s32.totalorder %s116, %s118
    %p122 = scmp.eq.s32.totalorder %s19, 0
    %p123 = por %p121, %p122
    %p124 = scmp.ne.s32.totalorder %s116, %s118
    %p125 = scmp.eq.s32.totalorder %s24, 1
    %p126 = por %p124, %p125
    %p127 = scmp.ne.s32.totalorder %s118, %s119
    %p128 = scmp.eq.s32.totalorder %s24, 0
    %p129 = por %p127, %p128
    %p130 = scmp.ne.s32.totalorder %s118, %s119
    %p131 = scmp.eq.s32.totalorder %s25, 1
    %p132 = por %p130, %p131
    %p134 = scmp.ne.s32.totalorder %s119, %s133
    %p135 = scmp.eq.s32.totalorder %s25, 0
    %p136 = por %p134, %p135
    %s138 = sadd.s32 %s137, 1
    %p141 = scmp.eq.s32.totalorder %s19, 1
    %p142 = scmp.ne.s32.totalorder %s137, %s139
    %p143 = scmp.eq.s32.totalorder %s19, 0
    %p144 = por %p142, %p143
    %p145 = scmp.ne.s32.totalorder %s137, %s139
    %p146 = scmp.eq.s32.totalorder %s24, 1
    %p147 = por %p145, %p146
    %p148 = scmp.ne.s32.totalorder %s139, %s140
    %p149 = scmp.eq.s32.totalorder %s24, 0
    %p150 = por %p148, %p149
    %p151 = scmp.ne.s32.totalorder %s139, %s140
    %p152 = scmp.eq.s32.totalorder %s25, 1
    %p153 = por %p151, %p152
    %p155 = scmp.ne.s32.totalorder %s140, %s154
    %p156 = scmp.eq.s32.totalorder %s25, 0
    %p157 = por %p155, %p156
    %s159 = sadd.s32 %s158, 1
    %p162 = scmp.eq.s32.totalorder %s19, 1
    %p163 = scmp.ne.s32.totalorder %s158, %s160
    %p164 = scmp.eq.s32.totalorder %s19, 0
    %p165 = por %p163, %p164
    %p166 = scmp.ne.s32.totalorder %s158, %s160
    %p167 = scmp.eq.s32.totalorder %s24, 1
    %p168 = por %p166, %p167
    %p169 = scmp.ne.s32.totalorder %s160, %s161
    %p170 = scmp.eq.s32.totalorder %s24, 0
    %p171 = por %p169, %p170
    %p172 = scmp.ne.s32.totalorder %s160, %s161
    %p173 = scmp.eq.s32.totalorder %s25, 1
    %p174 = por %p172, %p173
    %p176 = scmp.ne.s32.totalorder %s161, %s175
    %p177 = scmp.eq.s32.totalorder %s25, 0
    %p178 = por %p176, %p177
    %s180 = sadd.s32 %s179, 1
    %p183 = scmp.eq.s32.totalorder %s19, 1
    %p184 = scmp.ne.s32.totalorder %s179, %s181
    %p185 = scmp.eq.s32.totalorder %s19, 0
    %p186 = por %p184, %p185
    %p187 = scmp.ne.s32.totalorder %s179, %s181
    %p188 = scmp.eq.s32.totalorder %s24, 1
    %p189 = por %p187, %p188
    %p190 = scmp.ne.s32.totalorder %s181, %s182
    %p191 = scmp.eq.s32.totalorder %s24, 0
    %p192 = por %p190, %p191
    %p193 = scmp.ne.s32.totalorder %s181, %s182
    %p194 = scmp.eq.s32.totalorder %s25, 1
    %p195 = por %p193, %p194
    %p197 = scmp.ne.s32.totalorder %s182, %s196
    %p198 = scmp.eq.s32.totalorder %s25, 0
    %p199 = por %p197, %p198
    %s201 = sadd.s32 %s200, 1
    %p204 = scmp.eq.s32.totalorder %s19, 1
    %p205 = scmp.ne.s32.totalorder %s200, %s202
    %p206 = scmp.eq.s32.totalorder %s19, 0
    %p207 = por %p205, %p206
    %p208 = scmp.ne.s32.totalorder %s200, %s202
    %p209 = scmp.eq.s32.totalorder %s24, 1
    %p210 = por %p208, %p209
    %p211 = scmp.ne.s32.totalorder %s202, %s203
    %p212 = scmp.eq.s32.totalorder %s24, 0
    %p213 = por %p211, %p212
    %p214 = scmp.ne.s32.totalorder %s202, %s203
    %p215 = scmp.eq.s32.totalorder %s25, 1
    %p216 = por %p214, %p215
    %p218 = scmp.ne.s32.totalorder %s203, %s217
    %p219 = scmp.eq.s32.totalorder %s25, 0
    %p220 = por %p218, %p219
    %s222 = sadd.s32 %s221, 1
    %p225 = scmp.eq.s32.totalorder %s19, 1
    %p226 = scmp.ne.s32.totalorder %s221, %s223
    %p227 = scmp.eq.s32.totalorder %s19, 0
    %p228 = por %p226, %p227
    %p229 = scmp.ne.s32.totalorder %s221, %s223
    %p230 = scmp.eq.s32.totalorder %s24, 1
    %p231 = por %p229, %p230
    %p232 = scmp.ne.s32.totalorder %s223, %s224
    %p233 = scmp.eq.s32.totalorder %s24, 0
    %p234 = por %p232, %p233
    %p235 = scmp.ne.s32.totalorder %s223, %s224
    %p236 = scmp.eq.s32.totalorder %s25, 1
    %p237 = por %p235, %p236
    %p239 = scmp.ne.s32.totalorder %s224, %s238
    %p240 = scmp.eq.s32.totalorder %s25, 0
    %p241 = por %p239, %p240
    %s243 = sadd.s32 %s242, 1
    %p246 = scmp.eq.s32.totalorder %s19, 1
    %p247 = scmp.ne.s32.totalorder %s242, %s244
    %p248 = scmp.eq.s32.totalorder %s19, 0
    %p249 = por %p247, %p248
    %p250 = scmp.ne.s32.totalorder %s242, %s244
    %p251 = scmp.eq.s32.totalorder %s24, 1
    %p252 = por %p250, %p251
    %p253 = scmp.ne.s32.totalorder %s244, %s245
    %p254 = scmp.eq.s32.totalorder %s24, 0
    %p255 = por %p253, %p254
    %p256 = scmp.ne.s32.totalorder %s244, %s245
    %p257 = scmp.eq.s32.totalorder %s25, 1
    %p258 = por %p256, %p257
    %p260 = scmp.ne.s32.totalorder %s245, %s259
    %p261 = scmp.eq.s32.totalorder %s25, 0
    %p262 = por %p260, %p261
    %s264 = sadd.s32 %s263, 1
    %p267 = scmp.eq.s32.totalorder %s19, 1
    %p268 = scmp.ne.s32.totalorder %s263, %s265
    %p269 = scmp.eq.s32.totalorder %s19, 0
    %p270 = por %p268, %p269
    %p271 = scmp.ne.s32.totalorder %s263, %s265
    %p272 = scmp.eq.s32.totalorder %s24, 1
    %p273 = por %p271, %p272
    %p274 = scmp.ne.s32.totalorder %s265, %s266
    %p275 = scmp.eq.s32.totalorder %s24, 0
    %p276 = por %p274, %p275
    %p277 = scmp.ne.s32.totalorder %s265, %s266
    %p278 = scmp.eq.s32.totalorder %s25, 1
    %p279 = por %p277, %p278
    %p281 = scmp.ne.s32.totalorder %s266, %s280
    %p282 = scmp.eq.s32.totalorder %s25, 0
    %p283 = por %p281, %p282
    %s285 = sadd.s32 %s284, 1
    %p288 = scmp.eq.s32.totalorder %s19, 1
    %p289 = scmp.ne.s32.totalorder %s284, %s286
    %p290 = scmp.eq.s32.totalorder %s19, 0
    %p291 = por %p289, %p290
    %p292 = scmp.ne.s32.totalorder %s284, %s286
    %p293 = scmp.eq.s32.totalorder %s24, 1
    %p294 = por %p292, %p293
    %p295 = scmp.ne.s32.totalorder %s286, %s287
    %p296 = scmp.eq.s32.totalorder %s24, 0
    %p297 = por %p295, %p296
    %p298 = scmp.ne.s32.totalorder %s286, %s287
    %p299 = scmp.eq.s32.totalorder %s25, 1
    %p300 = por %p298, %p299
    %p302 = scmp.ne.s32.totalorder %s287, %s301
    %p303 = scmp.eq.s32.totalorder %s25, 0
    %p304 = por %p302, %p303
    %s306 = sadd.s32 %s305, 1
    %p309 = scmp.eq.s32.totalorder %s19, 1
    %p310 = scmp.ne.s32.totalorder %s305, %s307
    %p311 = scmp.eq.s32.totalorder %s19, 0
    %p312 = por %p310, %p311
    %p313 = scmp.ne.s32.totalorder %s305, %s307
    %p314 = scmp.eq.s32.totalorder %s24, 1
    %p315 = por %p313, %p314
    %p316 = scmp.ne.s32.totalorder %s307, %s308
    %p317 = scmp.eq.s32.totalorder %s24, 0
    %p318 = por %p316, %p317
    %p319 = scmp.ne.s32.totalorder %s307, %s308
    %p320 = scmp.eq.s32.totalorder %s25, 1
    %p321 = por %p319, %p320
    %p323 = scmp.ne.s32.totalorder %s308, %s322
    %p324 = scmp.eq.s32.totalorder %s25, 0
    %p325 = por %p323, %p324
    %s326 = ssub.s32 %s26, %s38
    %s327 = ssub.s32 %s27, %s34
    %s328 = sor.u32 %s326, %s327
    %p329 = scmp.eq.s32.totalorder %s328, 0
    %s331 = sadd.s32 %s330, 1
    %s332 = scalar_select %p329, %s330, %s331
    %p335 = pneg %p329
    %p336 = scmp.eq.s32.totalorder %s19, 1
    %p337 = por %p335, %p336
    %p338 = scmp.ne.s32.totalorder %s330, %s333
    %p339 = scmp.eq.s32.totalorder %s19, 0
    %p340 = por %p338, %p339
    %p341 = scmp.ne.s32.totalorder %s330, %s333
    %p342 = scmp.eq.s32.totalorder %s24, 1
    %p343 = por %p341, %p342
    %p344 = scmp.ne.s32.totalorder %s333, %s334
    %p345 = scmp.eq.s32.totalorder %s24, 0
    %p346 = por %p344, %p345
    %p347 = scmp.ne.s32.totalorder %s333, %s334
    %p348 = scmp.eq.s32.totalorder %s25, 1
    %p349 = por %p347, %p348
    %p351 = scmp.ne.s32.totalorder %s334, %s350
    %p352 = scmp.eq.s32.totalorder %s25, 0
    %p353 = por %p351, %p352
    %p354 = scmp.le.s32.totalorder 1, %s19
    %p355 = scmp.lt.s32.totalorder %s19, 3
    %p356 = pnand %p354, %p355
    %p357 = pneg %p356
    // Predicated region
    $region9: #{self_attention_forward.5} parent=5 // pred_check
      _
    $region10: #{self_attention_forward.5} parent=5 // pred_check_branch
      %359 = sbr.rel (%p356) target = $region12
    $region11: #{self_attention_forward.5} parent=5 // pred_region
      %s360 = ssub.s32 %s19, 1
      // Predicated region
      $region13: #{self_attention_forward.5} parent=11 // pred_check
        %p361 = pneg %p108
      $region14: #{self_attention_forward.5} parent=11 // pred_check_branch
        %363 = sbr.rel (%p361) target = $region16
      $region15: #{self_attention_forward.5} parent=11 // pred_region
        _
      $region16: #{self_attention_forward.5} parent=11 // pred_fallthru
        _
      // Predicated region
      $region17: #{self_attention_forward.5} parent=11 // pred_check
        %p364 = pneg %p129
      $region18: #{self_attention_forward.5} parent=11 // pred_check_branch
        %366 = sbr.rel (%p364) target = $region20
      $region19: #{self_attention_forward.5} parent=11 // pred_region
        _
      $region20: #{self_attention_forward.5} parent=11 // pred_fallthru
        _
      // Predicated region
      $region21: #{self_attention_forward.5} parent=11 // pred_check
        %p367 = pneg %p150
      $region22: #{self_attention_forward.5} parent=11 // pred_check_branch
        %369 = sbr.rel (%p367) target = $region24
      $region23: #{self_attention_forward.5} parent=11 // pred_region
        _
      $region24: #{self_attention_forward.5} parent=11 // pred_fallthru
        _
      // Predicated region
      $region25: #{self_attention_forward.5} parent=11 // pred_check
        %p370 = pneg %p171
      $region26: #{self_attention_forward.5} parent=11 // pred_check_branch
        %372 = sbr.rel (%p370) target = $region28
      $region27: #{self_attention_forward.5} parent=11 // pred_region
        _
      $region28: #{self_attention_forward.5} parent=11 // pred_fallthru
        _
      // Predicated region
      $region29: #{self_attention_forward.5} parent=11 // pred_check
        %p373 = pneg %p192
      $region30: #{self_attention_forward.5} parent=11 // pred_check_branch
        %375 = sbr.rel (%p373) target = $region32
      $region31: #{self_attention_forward.5} parent=11 // pred_region
        _
      $region32: #{self_attention_forward.5} parent=11 // pred_fallthru
        _
      // Predicated region
      $region33: #{self_attention_forward.5} parent=11 // pred_check
        %p376 = pneg %p213
      $region34: #{self_attention_forward.5} parent=11 // pred_check_branch
        %378 = sbr.rel (%p376) target = $region36
      $region35: #{self_attention_forward.5} parent=11 // pred_region
        _
      $region36: #{self_attention_forward.5} parent=11 // pred_fallthru
        _
      // Predicated region
      $region37: #{self_attention_forward.5} parent=11 // pred_check
        %p379 = pneg %p234
      $region38: #{self_attention_forward.5} parent=11 // pred_check_branch
        %381 = sbr.rel (%p379) target = $region40
      $region39: #{self_attention_forward.5} parent=11 // pred_region
        _
      $region40: #{self_attention_forward.5} parent=11 // pred_fallthru
        _
      // Predicated region
      $region41: #{self_attention_forward.5} parent=11 // pred_check
        %p382 = pneg %p255
      $region42: #{self_attention_forward.5} parent=11 // pred_check_branch
        %384 = sbr.rel (%p382) target = $region44
      $region43: #{self_attention_forward.5} parent=11 // pred_region
        _
      $region44: #{self_attention_forward.5} parent=11 // pred_fallthru
        _
      // Predicated region
      $region45: #{self_attention_forward.5} parent=11 // pred_check
        %p385 = pneg %p276
      $region46: #{self_attention_forward.5} parent=11 // pred_check_branch
        %387 = sbr.rel (%p385) target = $region48
      $region47: #{self_attention_forward.5} parent=11 // pred_region
        _
      $region48: #{self_attention_forward.5} parent=11 // pred_fallthru
        _
      // Predicated region
      $region49: #{self_attention_forward.5} parent=11 // pred_check
        %p388 = pneg %p297
      $region50: #{self_attention_forward.5} parent=11 // pred_check_branch
        %390 = sbr.rel (%p388) target = $region52
      $region51: #{self_attention_forward.5} parent=11 // pred_region
        _
      $region52: #{self_attention_forward.5} parent=11 // pred_fallthru
        _
      // Predicated region
      $region53: #{self_attention_forward.5} parent=11 // pred_check
        %p391 = pneg %p318
      $region54: #{self_attention_forward.5} parent=11 // pred_check_branch
        %393 = sbr.rel (%p391) target = $region56
      $region55: #{self_attention_forward.5} parent=11 // pred_region
        _
      $region56: #{self_attention_forward.5} parent=11 // pred_fallthru
        _
    $region12: #{self_attention_forward.5} parent=5 // pred_fallthru
      _
    %p394 = scmp.lt.s32.totalorder %s19, 2
    // Predicated region
    $region57: #{self_attention_forward.5} parent=5 // pred_check
      %p395 = pneg %p394
    $region58: #{self_attention_forward.5} parent=5 // pred_check_branch
      %397 = sbr.rel (%p395) target = $region60
    $region59: #{self_attention_forward.5} parent=5 // pred_region
      // Predicated region
      $region61: #{self_attention_forward.5} parent=59 // pred_check
        %p398 = pneg %p53
      $region62: #{self_attention_forward.5} parent=59 // pred_check_branch
        %400 = sbr.rel (%p398) target = $region64
      $region63: #{self_attention_forward.5} parent=59 // pred_region
        %s401 = smul.u32 2, %s27
        %p402 = scmp.lt.s32.totalorder %s26, 1
        %s403 = scalar_select %p402, %s26, 1
        %p404 = scmp.lt.s32.totalorder %s401, 1
        %s405 = scalar_select %p404, %s401, 1
        %s406 = smul.addr %s403, 2
        %s407 = sadd.s32 %s405, %s406
        %s408 = smul.addr %s407, 4
        %s409 = scalar_lea.vmem %s0, %s408
        %s410 = smul.u32 2, %s27
      $region64: #{self_attention_forward.5} parent=59 // pred_fallthru
        _
      // Predicated region
      $region65: #{self_attention_forward.5} parent=59 // pred_check
        %p411 = pneg %p81
      $region66: #{self_attention_forward.5} parent=59 // pred_check_branch
        %413 = sbr.rel (%p411) target = $region68
      $region67: #{self_attention_forward.5} parent=59 // pred_region
        %s414 = smul.u32 2, %s27
        %p415 = scmp.lt.s32.totalorder %s26, 1
        %s416 = scalar_select %p415, %s26, 1
        %p417 = scmp.lt.s32.totalorder %s414, 1
        %s418 = scalar_select %p417, %s414, 1
        %s419 = smul.addr %s416, 2
        %s420 = sadd.s32 %s418, %s419
        %s421 = smul.addr %s420, 4
        %s422 = scalar_lea.vmem %s1, %s421
        %s423 = smul.u32 2, %s27
      $region68: #{self_attention_forward.5} parent=59 // pred_fallthru
        _
    $region60: #{self_attention_forward.5} parent=5 // pred_fallthru
      _
    %p424 = scmp.le.s32.totalorder 1, %s19
    %p425 = scmp.lt.s32.totalorder %s19, 3
    %p426 = pnand %p424, %p425
    %p427 = pneg %p426
    // Predicated region
    $region69: #{self_attention_forward.5} parent=5 // pred_check
      _
    $region70: #{self_attention_forward.5} parent=5 // pred_check_branch
      %429 = sbr.rel (%p426) target = $region72
    $region71: #{self_attention_forward.5} parent=5 // pred_region
      %s430 = ssub.s32 %s19, 1
      %s431 = smul.u32 2, %s29
      %p432 = scmp.lt.s32.totalorder %s28, 1
      %s433 = scalar_select %p432, %s28, 1
      %p434 = scmp.lt.s32.totalorder %s431, 1
      %s435 = scalar_select %p434, %s431, 1
      %s436 = smul.addr %s433, 2
      %s437 = sadd.s32 %s435, %s436
      %s438 = smul.addr %s437, 4
      %s439 = scalar_lea.vmem %s0, %s438
      %p440 = pneg %p59
      %p441 = pneg %p56
      %s442 = smul.u32 2, %s29
      %p443 = scmp.lt.s32.totalorder %s28, 1
      %s444 = scalar_select %p443, %s28, 1
      %p445 = scmp.lt.s32.totalorder %s442, 1
      %s446 = scalar_select %p445, %s442, 1
      %s447 = smul.addr %s444, 2
      %s448 = sadd.s32 %s446, %s447
      %s449 = smul.addr %s448, 4
      %s450 = scalar_lea.vmem %s1, %s449
      %p451 = pneg %p87
      %p452 = pneg %p84
      %p453 = pneg %p108
      %p454 = pneg %p105
      %p455 = pneg %p129
      %p456 = pneg %p126
      %p457 = pneg %p150
      %p458 = pneg %p147
      %p459 = pneg %p171
      %p460 = pneg %p168
      %p461 = pneg %p192
      %p462 = pneg %p189
      %p463 = pneg %p213
      %p464 = pneg %p210
      %p465 = pneg %p234
      %p466 = pneg %p231
      %p467 = pneg %p255
      %p468 = pneg %p252
      %p469 = pneg %p276
      %p470 = pneg %p273
      %p471 = pneg %p297
      %p472 = pneg %p294
      %p473 = pneg %p318
      %p474 = pneg %p315
      %p475 = pneg %p346
      %p476 = pneg %p343
      %s477 = smul.u32 2, %s29
      %p478 = scmp.lt.s32.totalorder %s28, 1
      %s479 = scalar_select %p478, %s28, 1
      %p480 = scmp.lt.s32.totalorder %s477, 1
      %s481 = scalar_select %p480, %s477, 1
      %s482 = smul.addr %s479, 2
      %s483 = sadd.s32 %s481, %s482
      %s484 = smul.addr %s483, 4
      %s485 = scalar_lea.vmem %s13, %s484
      %s486 = smul.u32 2, %s29
      %p487 = scmp.lt.s32.totalorder %s28, 1
      %s488 = scalar_select %p487, %s28, 1
      %p489 = scmp.lt.s32.totalorder %s486, 1
      %s490 = scalar_select %p489, %s486, 1
      %s491 = smul.addr %s488, 2
      %s492 = sadd.s32 %s490, %s491
      %s493 = smul.addr %s492, 4
      %s494 = scalar_lea.vmem %s0, %s493
      %s495 = smul.u32 2, %s29
      %s496 = smul.u32 2, %s29
      %p497 = scmp.lt.s32.totalorder %s28, 1
      %s498 = scalar_select %p497, %s28, 1
      %p499 = scmp.lt.s32.totalorder %s496, 1
      %s500 = scalar_select %p499, %s496, 1
      %s501 = smul.addr %s498, 2
      %s502 = sadd.s32 %s500, %s501
      %s503 = smul.addr %s502, 4
      %s504 = scalar_lea.vmem %s1, %s503
      %s505 = smul.u32 2, %s29
      %s506 = smul.u32 2, %s29
      %p507 = scmp.lt.s32.totalorder %s28, 1
      %s508 = scalar_select %p507, %s28, 1
      %p509 = scmp.lt.s32.totalorder %s506, 1
      %s510 = scalar_select %p509, %s506, 1
      %s511 = smul.addr %s508, 2
      %s512 = sadd.s32 %s510, %s511
      %s513 = smul.addr %s512, 4
      %s514 = scalar_lea.vmem %s13, %s513
      %s515 = smul.u32 2, %s29
      %v516 = vld [vmem:[%s494] sm:$0xff]
      %v517 = vld [vmem:[%s504] sm:$0xff]
      %v518 = vld [vmem:[%s2] sm:$0xf]
      %v519 = vld [vmem:[%s3] sm:$0xf]
      %521 = vset.pattern.permute.xlu0 0
      %522 = vperm.xlu0 %521, %v519
      %v523 = vpop.permute.xlu0 %522
      %526 = vst [vmem:[#allocation1] ss:$2 sm:$0xff] %v517
      %v527 = vld.sshfl [vmem:[#allocation1] sm:$0xff pattern:$0x75316420]
      %v528 = vld.sshfl [vmem:[#allocation1 + $0x8] sm:$0xff pattern:$0x75316420]
      %vm529 = vcmask 31744
      %v531 = vsel %vm529, %v518, 0
      %vm533 = vcmask 1043456
      %v534 = vsel %vm533, %v527, 0
      %v536 = vsel %vm533, %v528, 0
      %538 = vmatpush.msra.mxu0 0.0
      %539 = vmatpush.msra.mxu0 0.0
      %540 = vmatpush.msra.mxu0 0.0
      %541 = vmatpush.msra.mxu0 0.0
      %542 = vmatpush.msra.mxu0 0.0
      %543 = vmatpush.msra.mxu0 0.0
      %544 = vmatpush.msra.mxu0 0.0
      %545 = vmatpush.msra.mxu0 0.0
      %546 = vmatpush.msra.mxu0 0.0
      %547 = vmatpush.msra.mxu0 0.0
      %548 = vmatpush.msra.mxu0 0.0
      %549 = vmatpush.msra.mxu0 0.0
      %550 = vmatpush.msra.mxu0 0.0
      %551 = vmatpush.msra.mxu0 0.0
      %552 = vmatpush.msra.mxu0 0.0
      %553 = vmatpush.msra.mxu0 %v534
      %554 = vmatmul.f32.gmra.mxu0 %v531
      %v555 = vpop.f32.mrf.mxu0
      %v556 = vadd.f32 %v523, %v555
      %557 = vdwg.mxu0
      %558 = vmatpush.msra.mxu0 0.0
      %559 = vmatpush.msra.mxu0 0.0
      %560 = vmatpush.msra.mxu0 0.0
      %561 = vmatpush.msra.mxu0 0.0
      %562 = vmatpush.msra.mxu0 0.0
      %563 = vmatpush.msra.mxu0 0.0
      %564 = vmatpush.msra.mxu0 0.0
      %565 = vmatpush.msra.mxu0 0.0
      %566 = vmatpush.msra.mxu0 0.0
      %567 = vmatpush.msra.mxu0 0.0
      %568 = vmatpush.msra.mxu0 0.0
      %569 = vmatpush.msra.mxu0 0.0
      %570 = vmatpush.msra.mxu0 0.0
      %571 = vmatpush.msra.mxu0 0.0
      %572 = vmatpush.msra.mxu0 0.0
      %573 = vmatpush.msra.mxu0 %v536
      %574 = vmatmul.f32.gmra.mxu0 %v531
      %v575 = vpop.f32.mrf.mxu0
      %v576 = vadd.f32 %v523, %v575
      %577 = vdwg.mxu0
      %v578 = vld [vmem:[%s4] sm:$0xf]
      %v579 = vld [vmem:[%s5] sm:$0xf]
      %v581 = vsel %vm529, %v579, 0
      %v584 = vsel %vm533, %v556, 0
      %v587 = vsel %vm533, %v576, 0
      %589 = vmatpush.msra.mxu0 0.0
      %590 = vmatpush.msra.mxu0 0.0
      %591 = vmatpush.msra.mxu0 0.0
      %592 = vmatpush.msra.mxu0 0.0
      %593 = vmatpush.msra.mxu0 0.0
      %594 = vmatpush.msra.mxu0 0.0
      %595 = vmatpush.msra.mxu0 0.0
      %596 = vmatpush.msra.mxu0 0.0
      %597 = vmatpush.msra.mxu0 0.0
      %598 = vmatpush.msra.mxu0 0.0
      %599 = vmatpush.msra.mxu0 0.0
      %600 = vmatpush.msra.mxu0 0.0
      %601 = vmatpush.msra.mxu0 0.0
      %602 = vmatpush.msra.mxu0 0.0
      %603 = vmatpush.msra.mxu0 0.0
      %604 = vmatpush.msra.mxu0 %v584
      %605 = vmatmul.f32.gmra.mxu0 %v581
      %v606 = vpop.f32.mrf.mxu0
      %v607 = vadd.f32 0.0, %v606
      %608 = vdwg.mxu0
      %609 = vmatpush.msra.mxu0 0.0
      %610 = vmatpush.msra.mxu0 0.0
      %611 = vmatpush.msra.mxu0 0.0
      %612 = vmatpush.msra.mxu0 0.0
      %613 = vmatpush.msra.mxu0 0.0
      %614 = vmatpush.msra.mxu0 0.0
      %615 = vmatpush.msra.mxu0 0.0
      %616 = vmatpush.msra.mxu0 0.0
      %617 = vmatpush.msra.mxu0 0.0
      %618 = vmatpush.msra.mxu0 0.0
      %619 = vmatpush.msra.mxu0 0.0
      %620 = vmatpush.msra.mxu0 0.0
      %621 = vmatpush.msra.mxu0 0.0
      %622 = vmatpush.msra.mxu0 0.0
      %623 = vmatpush.msra.mxu0 0.0
      %624 = vmatpush.msra.mxu0 %v587
      %625 = vmatmul.f32.gmra.mxu0 %v581
      %v626 = vpop.f32.mrf.mxu0
      %v627 = vadd.f32 0.0, %v626
      %628 = vdwg.mxu0
      %630 = vst [vmem:[#allocation1] ss:$2 sm:$0xff] %v516
      %v631 = vld.sshfl [vmem:[#allocation1] sm:$0xff pattern:$0x75316420]
      %v632 = vld.sshfl [vmem:[#allocation1 + $0x8] sm:$0xff pattern:$0x75316420]
      %v634 = vsel %vm529, %v578, 0
      %v636 = vsel %vm533, %v631, 0
      %v638 = vsel %vm533, %v632, 0
      %640 = vmatpush.msra.mxu0 0.0
      %641 = vmatpush.msra.mxu0 0.0
      %642 = vmatpush.msra.mxu0 0.0
      %643 = vmatpush.msra.mxu0 0.0
      %644 = vmatpush.msra.mxu0 0.0
      %645 = vmatpush.msra.mxu0 0.0
      %646 = vmatpush.msra.mxu0 0.0
      %647 = vmatpush.msra.mxu0 0.0
      %648 = vmatpush.msra.mxu0 0.0
      %649 = vmatpush.msra.mxu0 0.0
      %650 = vmatpush.msra.mxu0 0.0
      %651 = vmatpush.msra.mxu0 0.0
      %652 = vmatpush.msra.mxu0 0.0
      %653 = vmatpush.msra.mxu0 0.0
      %654 = vmatpush.msra.mxu0 0.0
      %655 = vmatpush.msra.mxu0 %v636
      %656 = vmatmul.f32.gmra.mxu0 %v634
      %v657 = vpop.f32.mrf.mxu0
      %v658 = vadd.f32 %v607, %v657
      %659 = vdwg.mxu0
      %660 = vmatpush.msra.mxu0 0.0
      %661 = vmatpush.msra.mxu0 0.0
      %662 = vmatpush.msra.mxu0 0.0
      %663 = vmatpush.msra.mxu0 0.0
      %664 = vmatpush.msra.mxu0 0.0
      %665 = vmatpush.msra.mxu0 0.0
      %666 = vmatpush.msra.mxu0 0.0
      %667 = vmatpush.msra.mxu0 0.0
      %668 = vmatpush.msra.mxu0 0.0
      %669 = vmatpush.msra.mxu0 0.0
      %670 = vmatpush.msra.mxu0 0.0
      %671 = vmatpush.msra.mxu0 0.0
      %672 = vmatpush.msra.mxu0 0.0
      %673 = vmatpush.msra.mxu0 0.0
      %674 = vmatpush.msra.mxu0 0.0
      %675 = vmatpush.msra.mxu0 %v638
      %676 = vmatmul.f32.gmra.mxu0 %v634
      %v677 = vpop.f32.mrf.mxu0
      %v678 = vadd.f32 %v627, %v677
      %679 = vdwg.mxu0
      %v680 = vld [vmem:[%s6] sm:$0xf]
      %682 = vset.pattern.permute.xlu0 0
      %683 = vperm.xlu0 %682, %v680
      %v684 = vpop.permute.xlu0 %683
      %v686 = vadd.f32 %v658, %v684
      %v687 = vadd.f32 %v678, %v684
      %v688 = vld [vmem:[%s7] sm:$0xf]
      %v689 = vld [vmem:[%s8] sm:$0xf]
      %v691 = vsel %vm529, %v689, 0
      %693 = vmatpush.msra.mxu0 0.0
      %694 = vmatpush.msra.mxu0 0.0
      %695 = vmatpush.msra.mxu0 0.0
      %696 = vmatpush.msra.mxu0 0.0
      %697 = vmatpush.msra.mxu0 0.0
      %698 = vmatpush.msra.mxu0 0.0
      %699 = vmatpush.msra.mxu0 0.0
      %700 = vmatpush.msra.mxu0 0.0
      %701 = vmatpush.msra.mxu0 0.0
      %702 = vmatpush.msra.mxu0 0.0
      %703 = vmatpush.msra.mxu0 0.0
      %704 = vmatpush.msra.mxu0 0.0
      %705 = vmatpush.msra.mxu0 0.0
      %706 = vmatpush.msra.mxu0 0.0
      %707 = vmatpush.msra.mxu0 0.0
      %708 = vmatpush.msra.mxu0 %v584
      %709 = vmatmul.f32.gmra.mxu0 %v691
      %v710 = vpop.f32.mrf.mxu0
      %v711 = vadd.f32 0.0, %v710
      %712 = vdwg.mxu0
      %713 = vmatpush.msra.mxu0 0.0
      %714 = vmatpush.msra.mxu0 0.0
      %715 = vmatpush.msra.mxu0 0.0
      %716 = vmatpush.msra.mxu0 0.0
      %717 = vmatpush.msra.mxu0 0.0
      %718 = vmatpush.msra.mxu0 0.0
      %719 = vmatpush.msra.mxu0 0.0
      %720 = vmatpush.msra.mxu0 0.0
      %721 = vmatpush.msra.mxu0 0.0
      %722 = vmatpush.msra.mxu0 0.0
      %723 = vmatpush.msra.mxu0 0.0
      %724 = vmatpush.msra.mxu0 0.0
      %725 = vmatpush.msra.mxu0 0.0
      %726 = vmatpush.msra.mxu0 0.0
      %727 = vmatpush.msra.mxu0 0.0
      %728 = vmatpush.msra.mxu0 %v587
      %729 = vmatmul.f32.gmra.mxu0 %v691
      %v730 = vpop.f32.mrf.mxu0
      %v731 = vadd.f32 0.0, %v730
      %732 = vdwg.mxu0
      %733 = vst [vmem:[#allocation1] ss:$2 sm:$0xff] %v516
      %v734 = vld.sshfl [vmem:[#allocation1] sm:$0xff pattern:$0x75316420]
      %v735 = vld.sshfl [vmem:[#allocation1 + $0x8] sm:$0xff pattern:$0x75316420]
      %v737 = vsel %vm529, %v688, 0
      %v739 = vsel %vm533, %v734, 0
      %v741 = vsel %vm533, %v735, 0
      %743 = vmatpush.msra.mxu0 0.0
      %744 = vmatpush.msra.mxu0 0.0
      %745 = vmatpush.msra.mxu0 0.0
      %746 = vmatpush.msra.mxu0 0.0
      %747 = vmatpush.msra.mxu0 0.0
      %748 = vmatpush.msra.mxu0 0.0
      %749 = vmatpush.msra.mxu0 0.0
      %750 = vmatpush.msra.mxu0 0.0
      %751 = vmatpush.msra.mxu0 0.0
      %752 = vmatpush.msra.mxu0 0.0
      %753 = vmatpush.msra.mxu0 0.0
      %754 = vmatpush.msra.mxu0 0.0
      %755 = vmatpush.msra.mxu0 0.0
      %756 = vmatpush.msra.mxu0 0.0
      %757 = vmatpush.msra.mxu0 0.0
      %758 = vmatpush.msra.mxu0 %v739
      %759 = vmatmul.f32.gmra.mxu0 %v737
      %v760 = vpop.f32.mrf.mxu0
      %v761 = vadd.f32 %v711, %v760
      %762 = vdwg.mxu0
      %763 = vmatpush.msra.mxu0 0.0
      %764 = vmatpush.msra.mxu0 0.0
      %765 = vmatpush.msra.mxu0 0.0
      %766 = vmatpush.msra.mxu0 0.0
      %767 = vmatpush.msra.mxu0 0.0
      %768 = vmatpush.msra.mxu0 0.0
      %769 = vmatpush.msra.mxu0 0.0
      %770 = vmatpush.msra.mxu0 0.0
      %771 = vmatpush.msra.mxu0 0.0
      %772 = vmatpush.msra.mxu0 0.0
      %773 = vmatpush.msra.mxu0 0.0
      %774 = vmatpush.msra.mxu0 0.0
      %775 = vmatpush.msra.mxu0 0.0
      %776 = vmatpush.msra.mxu0 0.0
      %777 = vmatpush.msra.mxu0 0.0
      %778 = vmatpush.msra.mxu0 %v741
      %779 = vmatmul.f32.gmra.mxu0 %v737
      %v780 = vpop.f32.mrf.mxu0
      %v781 = vadd.f32 %v731, %v780
      %782 = vdwg.mxu0
      %v783 = vld [vmem:[%s9] sm:$0xf]
      %785 = vset.pattern.permute.xlu0 0
      %786 = vperm.xlu0 %785, %v783
      %v787 = vpop.permute.xlu0 %786
      %v789 = vadd.f32 %v761, %v787
      %v790 = vadd.f32 %v781, %v787
      %791 = vst [vmem:[#allocation1] ss:$2 sm:$0xff] %v516
      %v792 = vld.sshfl [vmem:[#allocation1] sm:$0xff pattern:$0x75316420]
      %v793 = vld.sshfl [vmem:[#allocation1 + $0x8] sm:$0xff pattern:$0x75316420]
      %v796 = vmul.f32 %v686, %v792
      %v797 = vmul.f32 %v687, %v793
      %798 = vst [vmem:[#allocation1] ss:$2 sm:$0xff] %v516
      %v799 = vld.sshfl [vmem:[#allocation1] sm:$0xff pattern:$0x75316420]
      %v800 = vld.sshfl [vmem:[#allocation1 + $0x8] sm:$0xff pattern:$0x75316420]
      %v803 = vadd.f32 %v796, %v799
      %v804 = vadd.f32 %v797, %v800
      %v805 = vmul.f32 %v789, %v556
      %v806 = vmul.f32 %v790, %v576
      %v807 = vadd.f32 %v805, %v556
      %v808 = vadd.f32 %v806, %v576
      %v809 = vld [vmem:[%s10] sm:$0xf]
      %v810 = vld [vmem:[%s11] sm:$0xf]
      %v812 = vsel %vm529, %v810, 0
      %v815 = vsel %vm533, %v807, 0
      %v818 = vsel %vm533, %v808, 0
      %820 = vmatpush.msra.mxu0 0.0
      %821 = vmatpush.msra.mxu0 0.0
      %822 = vmatpush.msra.mxu0 0.0
      %823 = vmatpush.msra.mxu0 0.0
      %824 = vmatpush.msra.mxu0 0.0
      %825 = vmatpush.msra.mxu0 0.0
      %826 = vmatpush.msra.mxu0 0.0
      %827 = vmatpush.msra.mxu0 0.0
      %828 = vmatpush.msra.mxu0 0.0
      %829 = vmatpush.msra.mxu0 0.0
      %830 = vmatpush.msra.mxu0 0.0
      %831 = vmatpush.msra.mxu0 0.0
      %832 = vmatpush.msra.mxu0 0.0
      %833 = vmatpush.msra.mxu0 0.0
      %834 = vmatpush.msra.mxu0 0.0
      %835 = vmatpush.msra.mxu0 %v815
      %836 = vmatmul.f32.gmra.mxu0 %v812
      %v837 = vpop.f32.mrf.mxu0
      %v838 = vadd.f32 0.0, %v837
      %839 = vdwg.mxu0
      %840 = vmatpush.msra.mxu0 0.0
      %841 = vmatpush.msra.mxu0 0.0
      %842 = vmatpush.msra.mxu0 0.0
      %843 = vmatpush.msra.mxu0 0.0
      %844 = vmatpush.msra.mxu0 0.0
      %845 = vmatpush.msra.mxu0 0.0
      %846 = vmatpush.msra.mxu0 0.0
      %847 = vmatpush.msra.mxu0 0.0
      %848 = vmatpush.msra.mxu0 0.0
      %849 = vmatpush.msra.mxu0 0.0
      %850 = vmatpush.msra.mxu0 0.0
      %851 = vmatpush.msra.mxu0 0.0
      %852 = vmatpush.msra.mxu0 0.0
      %853 = vmatpush.msra.mxu0 0.0
      %854 = vmatpush.msra.mxu0 0.0
      %855 = vmatpush.msra.mxu0 %v818
      %856 = vmatmul.f32.gmra.mxu0 %v812
      %v857 = vpop.f32.mrf.mxu0
      %v858 = vadd.f32 0.0, %v857
      %859 = vdwg.mxu0
      %v861 = vsel %vm529, %v809, 0
      %v864 = vsel %vm533, %v803, 0
      %v867 = vsel %vm533, %v804, 0
      %869 = vmatpush.msra.mxu0 0.0
      %870 = vmatpush.msra.mxu0 0.0
      %871 = vmatpush.msra.mxu0 0.0
      %872 = vmatpush.msra.mxu0 0.0
      %873 = vmatpush.msra.mxu0 0.0
      %874 = vmatpush.msra.mxu0 0.0
      %875 = vmatpush.msra.mxu0 0.0
      %876 = vmatpush.msra.mxu0 0.0
      %877 = vmatpush.msra.mxu0 0.0
      %878 = vmatpush.msra.mxu0 0.0
      %879 = vmatpush.msra.mxu0 0.0
      %880 = vmatpush.msra.mxu0 0.0
      %881 = vmatpush.msra.mxu0 0.0
      %882 = vmatpush.msra.mxu0 0.0
      %883 = vmatpush.msra.mxu0 0.0
      %884 = vmatpush.msra.mxu0 %v864
      %885 = vmatmul.f32.gmra.mxu0 %v861
      %v886 = vpop.f32.mrf.mxu0
      %v887 = vadd.f32 %v838, %v886
      %888 = vdwg.mxu0
      %889 = vmatpush.msra.mxu0 0.0
      %890 = vmatpush.msra.mxu0 0.0
      %891 = vmatpush.msra.mxu0 0.0
      %892 = vmatpush.msra.mxu0 0.0
      %893 = vmatpush.msra.mxu0 0.0
      %894 = vmatpush.msra.mxu0 0.0
      %895 = vmatpush.msra.mxu0 0.0
      %896 = vmatpush.msra.mxu0 0.0
      %897 = vmatpush.msra.mxu0 0.0
      %898 = vmatpush.msra.mxu0 0.0
      %899 = vmatpush.msra.mxu0 0.0
      %900 = vmatpush.msra.mxu0 0.0
      %901 = vmatpush.msra.mxu0 0.0
      %902 = vmatpush.msra.mxu0 0.0
      %903 = vmatpush.msra.mxu0 0.0
      %904 = vmatpush.msra.mxu0 %v867
      %905 = vmatmul.f32.gmra.mxu0 %v861
      %v906 = vpop.f32.mrf.mxu0
      %v907 = vadd.f32 %v858, %v906
      %908 = vdwg.mxu0
      %v909 = vld [vmem:[%s12] sm:$0xf]
      %911 = vset.pattern.permute.xlu0 0
      %912 = vperm.xlu0 %911, %v909
      %v913 = vpop.permute.xlu0 %912
      %v915 = vadd.f32 %v887, %v913
      %v916 = vadd.f32 %v907, %v913
      %917 = vst [vmem:[#allocation1] ss:$2 sm:$0xff] %v516
      %v918 = vld.sshfl [vmem:[#allocation1] sm:$0xff pattern:$0x75316420]
      %v919 = vld.sshfl [vmem:[#allocation1 + $0x8] sm:$0xff pattern:$0x75316420]
      %v922 = vadd.f32 %v915, %v918
      %v923 = vadd.f32 %v916, %v919
      %v926 = vrot.slane %v923, 4
      %v927 = vsel %vm533, %v922, %v926
      %929 = vst [vmem:[%s514] sm:$0xff] %v927
      %s930 = smul.u32 2, %s29
      %p931 = scmp.lt.s32.totalorder %s28, 1
      %s932 = scalar_select %p931, %s28, 1
      %p933 = scmp.lt.s32.totalorder %s930, 1
      %s934 = scalar_select %p933, %s930, 1
      %s935 = smul.addr %s932, 2
      %s936 = sadd.s32 %s934, %s935
      %s937 = smul.addr %s936, 4
      %s938 = scalar_lea.vmem %s13, %s937
      // Predicated region
      $region73: #{self_attention_forward.5} parent=71 // pred_check
        %p939 = pneg %p343
      $region74: #{self_attention_forward.5} parent=71 // pred_check_branch
        %941 = sbr.rel (%p939) target = $region76
      $region75: #{self_attention_forward.5} parent=71 // pred_region
        %s942 = smul.u32 2, %s29
      $region76: #{self_attention_forward.5} parent=71 // pred_fallthru
        _
    $region72: #{self_attention_forward.5} parent=5 // pred_fallthru
      _
    %p943 = scmp.le.s32.totalorder 2, %s19
    // Predicated region
    $region77: #{self_attention_forward.5} parent=5 // pred_check
      %p944 = pneg %p943
    $region78: #{self_attention_forward.5} parent=5 // pred_check_branch
      %946 = sbr.rel (%p944) target = $region80
    $region79: #{self_attention_forward.5} parent=5 // pred_region
      %s947 = ssub.s32 %s19, 2
      // Predicated region
      $region81: #{self_attention_forward.5} parent=79 // pred_check
        %p948 = pneg %p349
      $region82: #{self_attention_forward.5} parent=79 // pred_check_branch
        %950 = sbr.rel (%p948) target = $region84
      $region83: #{self_attention_forward.5} parent=79 // pred_region
        %s951 = smul.u32 2, %s31
        %p952 = scmp.lt.s32.totalorder %s30, 1
        %s953 = scalar_select %p952, %s30, 1
        %p954 = scmp.lt.s32.totalorder %s951, 1
        %s955 = scalar_select %p954, %s951, 1
        %s956 = smul.addr %s953, 2
        %s957 = sadd.s32 %s955, %s956
        %s958 = smul.addr %s957, 4
        %s959 = scalar_lea.vmem %s13, %s958
      $region84: #{self_attention_forward.5} parent=79 // pred_fallthru
        _
    $region80: #{self_attention_forward.5} parent=5 // pred_fallthru
      _
  $region6: #{self_attention_forward.5} parent=0 // loop_footer
    %s23 = sadd.s32 1, %s19
  $region7: #{self_attention_forward.5} parent=0 // loop_footer_branch
    %18 = sbr.rel target = $region3
  $region8: #{self_attention_forward.5} parent=0 // loop_exit
    _

// kernel: self_attention_forward.9
$region0: #{self_attention_forward.9}
  #allocation0 [shape = 'u32[]', space=smem, size = 0x4, offset = 0x4, fixed_abs, tag = 'smem constant byte address 0x4 - core index']
  #allocation1 [shape = 'u32[72,128]{1,0:T(1,128)}', space=vmem, size = 0x9000, scoped, tag = 'internal scratch']
  %s0 = inlined_call_operand.vmem [shape: f32[2,4,256], index: 0, kind: input, shape index: {}]
  %s1 = inlined_call_operand.vmem [shape: f32[4,4], index: 1, kind: input, shape index: {}]
  %s2 = inlined_call_operand.vmem [shape: f32[4,1], index: 2, kind: input, shape index: {}]
  %s3 = inlined_call_operand.vmem [shape: f32[2,4,256], index: 3, kind: output, shape index: {}]
  %s4 = sld [smem:[#allocation0]]
  $region45: #{self_attention_forward.9} parent=0
    _
  %s6 = ssub.s32 1, %s4
  %s7 = scalar_select 0, %s6, %s4
  loop: start=0, step=1, limit=4
  $region2: #{self_attention_forward.9} parent=0 // loop_pre_header
    _
  $region3: #{self_attention_forward.9} parent=0 // loop_header
    %s9 = sphi 0, %s13
    %p10 = scmp.ge.s32.totalorder %s9, 4
    %s16 = sphi 0, %s28
    %s17 = sphi 0, %s24
    %s18 = sphi 0, %s16
    %s19 = sphi 0, %s17
    %s20 = sphi 0, %s18
    %s21 = sphi 0, %s19
    %s33 = sphi 0, %s35
    %s36 = sphi 0, %s33
    %s37 = sphi 0, %s36
    %s53 = sphi 0, %s37
    %s57 = sphi 0, %s57
    %s59 = sphi 0, %s57
    %s60 = sphi 0, %s59
    %s74 = sphi 0, %s60
    %s78 = sphi 0, %s78
    %s80 = sphi 0, %s78
    %s81 = sphi 0, %s80
    %s95 = sphi 0, %s81
    %s103 = sphi 0, %s105
    %s106 = sphi 0, %s103
    %s107 = sphi 0, %s106
    %s123 = sphi 0, %s107
  $region4: #{self_attention_forward.9} parent=0 // loop_header_branch
    %12 = sbr.rel (%p10) target = $region8
  $region5: #{self_attention_forward.9} parent=0 // loop_body
    %s14 = ssub.s32 %s9, 1
    %s15 = ssub.s32 %s9, 2
    %s22 = sadd.s32 1, %s17
    %p23 = scmp.ge.s32.totalorder %s22, 1
    %s24 = scalar_select %p23, 0, %s22
    %s25 = sadd.s32 1, %s16
    %s26 = scalar_select %p23, %s25, %s16
    %p27 = scmp.ge.s32.totalorder %s26, 2
    %s28 = scalar_select %p27, 0, %s26
    %s29 = ssub.s32 %s16, %s28
    %s30 = ssub.s32 %s17, %s24
    %s31 = sor.u32 %s29, %s30
    %p32 = scmp.eq.s32.totalorder %s31, 0
    %s34 = sadd.s32 %s33, 1
    %s35 = scalar_select %p32, %s33, %s34
    %p38 = pneg %p32
    %p39 = scmp.eq.s32.totalorder %s9, 1
    %p40 = por %p38, %p39
    %p41 = scmp.ne.s32.totalorder %s33, %s36
    %p42 = scmp.eq.s32.totalorder %s9, 0
    %p43 = por %p41, %p42
    %p44 = scmp.ne.s32.totalorder %s33, %s36
    %p45 = scmp.eq.s32.totalorder %s14, 1
    %p46 = por %p44, %p45
    %p47 = scmp.ne.s32.totalorder %s36, %s37
    %p48 = scmp.eq.s32.totalorder %s14, 0
    %p49 = por %p47, %p48
    %p50 = scmp.ne.s32.totalorder %s36, %s37
    %p51 = scmp.eq.s32.totalorder %s15, 1
    %p52 = por %p50, %p51
    %p54 = scmp.ne.s32.totalorder %s37, %s53
    %p55 = scmp.eq.s32.totalorder %s15, 0
    %p56 = por %p54, %p55
    %s58 = sadd.s32 %s57, 1
    %p61 = scmp.eq.s32.totalorder %s9, 1
    %p62 = scmp.ne.s32.totalorder %s57, %s59
    %p63 = scmp.eq.s32.totalorder %s9, 0
    %p64 = por %p62, %p63
    %p65 = scmp.ne.s32.totalorder %s57, %s59
    %p66 = scmp.eq.s32.totalorder %s14, 1
    %p67 = por %p65, %p66
    %p68 = scmp.ne.s32.totalorder %s59, %s60
    %p69 = scmp.eq.s32.totalorder %s14, 0
    %p70 = por %p68, %p69
    %p71 = scmp.ne.s32.totalorder %s59, %s60
    %p72 = scmp.eq.s32.totalorder %s15, 1
    %p73 = por %p71, %p72
    %p75 = scmp.ne.s32.totalorder %s60, %s74
    %p76 = scmp.eq.s32.totalorder %s15, 0
    %p77 = por %p75, %p76
    %s79 = sadd.s32 %s78, 1
    %p82 = scmp.eq.s32.totalorder %s9, 1
    %p83 = scmp.ne.s32.totalorder %s78, %s80
    %p84 = scmp.eq.s32.totalorder %s9, 0
    %p85 = por %p83, %p84
    %p86 = scmp.ne.s32.totalorder %s78, %s80
    %p87 = scmp.eq.s32.totalorder %s14, 1
    %p88 = por %p86, %p87
    %p89 = scmp.ne.s32.totalorder %s80, %s81
    %p90 = scmp.eq.s32.totalorder %s14, 0
    %p91 = por %p89, %p90
    %p92 = scmp.ne.s32.totalorder %s80, %s81
    %p93 = scmp.eq.s32.totalorder %s15, 1
    %p94 = por %p92, %p93
    %p96 = scmp.ne.s32.totalorder %s81, %s95
    %p97 = scmp.eq.s32.totalorder %s15, 0
    %p98 = por %p96, %p97
    %s99 = ssub.s32 %s16, %s28
    %s100 = ssub.s32 %s17, %s24
    %s101 = sor.u32 %s99, %s100
    %p102 = scmp.eq.s32.totalorder %s101, 0
    %s104 = sadd.s32 %s103, 1
    %s105 = scalar_select %p102, %s103, %s104
    %p108 = pneg %p102
    %p109 = scmp.eq.s32.totalorder %s9, 1
    %p110 = por %p108, %p109
    %p111 = scmp.ne.s32.totalorder %s103, %s106
    %p112 = scmp.eq.s32.totalorder %s9, 0
    %p113 = por %p111, %p112
    %p114 = scmp.ne.s32.totalorder %s103, %s106
    %p115 = scmp.eq.s32.totalorder %s14, 1
    %p116 = por %p114, %p115
    %p117 = scmp.ne.s32.totalorder %s106, %s107
    %p118 = scmp.eq.s32.totalorder %s14, 0
    %p119 = por %p117, %p118
    %p120 = scmp.ne.s32.totalorder %s106, %s107
    %p121 = scmp.eq.s32.totalorder %s15, 1
    %p122 = por %p120, %p121
    %p124 = scmp.ne.s32.totalorder %s107, %s123
    %p125 = scmp.eq.s32.totalorder %s15, 0
    %p126 = por %p124, %p125
    %p127 = scmp.le.s32.totalorder 1, %s9
    %p128 = scmp.lt.s32.totalorder %s9, 3
    %p129 = pnand %p127, %p128
    %p130 = pneg %p129
    // Predicated region
    $region9: #{self_attention_forward.9} parent=5 // pred_check
      _
    $region10: #{self_attention_forward.9} parent=5 // pred_check_branch
      %132 = sbr.rel (%p129) target = $region12
    $region11: #{self_attention_forward.9} parent=5 // pred_region
      %s133 = ssub.s32 %s9, 1
      // Predicated region
      $region13: #{self_attention_forward.9} parent=11 // pred_check
        %p134 = pneg %p70
      $region14: #{self_attention_forward.9} parent=11 // pred_check_branch
        %136 = sbr.rel (%p134) target = $region16
      $region15: #{self_attention_forward.9} parent=11 // pred_region
        _
      $region16: #{self_attention_forward.9} parent=11 // pred_fallthru
        _
      // Predicated region
      $region17: #{self_attention_forward.9} parent=11 // pred_check
        %p137 = pneg %p91
      $region18: #{self_attention_forward.9} parent=11 // pred_check_branch
        %139 = sbr.rel (%p137) target = $region20
      $region19: #{self_attention_forward.9} parent=11 // pred_region
        _
      $region20: #{self_attention_forward.9} parent=11 // pred_fallthru
        _
    $region12: #{self_attention_forward.9} parent=5 // pred_fallthru
      _
    %p140 = scmp.lt.s32.totalorder %s9, 2
    // Predicated region
    $region21: #{self_attention_forward.9} parent=5 // pred_check
      %p141 = pneg %p140
    $region22: #{self_attention_forward.9} parent=5 // pred_check_branch
      %143 = sbr.rel (%p141) target = $region24
    $region23: #{self_attention_forward.9} parent=5 // pred_region
      // Predicated region
      $region25: #{self_attention_forward.9} parent=23 // pred_check
        %p144 = pneg %p43
      $region26: #{self_attention_forward.9} parent=23 // pred_check_branch
        %146 = sbr.rel (%p144) target = $region28
      $region27: #{self_attention_forward.9} parent=23 // pred_region
        %s147 = smul.u32 2, %s17
        %p148 = scmp.lt.s32.totalorder %s16, 1
        %s149 = scalar_select %p148, %s16, 1
        %p150 = scmp.lt.s32.totalorder %s147, 1
        %s151 = scalar_select %p150, %s147, 1
        %s152 = smul.addr %s149, 2
        %s153 = sadd.s32 %s151, %s152
        %s154 = smul.addr %s153, 4
        %s155 = scalar_lea.vmem %s0, %s154
        %s156 = smul.u32 2, %s17
      $region28: #{self_attention_forward.9} parent=23 // pred_fallthru
        _
    $region24: #{self_attention_forward.9} parent=5 // pred_fallthru
      _
    %p157 = scmp.le.s32.totalorder 1, %s9
    %p158 = scmp.lt.s32.totalorder %s9, 3
    %p159 = pnand %p157, %p158
    %p160 = pneg %p159
    // Predicated region
    $region29: #{self_attention_forward.9} parent=5 // pred_check
      _
    $region30: #{self_attention_forward.9} parent=5 // pred_check_branch
      %162 = sbr.rel (%p159) target = $region32
    $region31: #{self_attention_forward.9} parent=5 // pred_region
      %s163 = ssub.s32 %s9, 1
      %s164 = smul.u32 2, %s19
      %p165 = scmp.lt.s32.totalorder %s18, 1
      %s166 = scalar_select %p165, %s18, 1
      %p167 = scmp.lt.s32.totalorder %s164, 1
      %s168 = scalar_select %p167, %s164, 1
      %s169 = smul.addr %s166, 2
      %s170 = sadd.s32 %s168, %s169
      %s171 = smul.addr %s170, 4
      %s172 = scalar_lea.vmem %s0, %s171
      %p173 = pneg %p49
      %p174 = pneg %p46
      %p175 = pneg %p70
      %p176 = pneg %p67
      %p177 = pneg %p91
      %p178 = pneg %p88
      %p179 = pneg %p119
      %p180 = pneg %p116
      %s181 = smul.u32 2, %s19
      %p182 = scmp.lt.s32.totalorder %s18, 1
      %s183 = scalar_select %p182, %s18, 1
      %p184 = scmp.lt.s32.totalorder %s181, 1
      %s185 = scalar_select %p184, %s181, 1
      %s186 = smul.addr %s183, 2
      %s187 = sadd.s32 %s185, %s186
      %s188 = smul.addr %s187, 4
      %s189 = scalar_lea.vmem %s3, %s188
      %s190 = smul.u32 2, %s19
      %p191 = scmp.lt.s32.totalorder %s18, 1
      %s192 = scalar_select %p191, %s18, 1
      %p193 = scmp.lt.s32.totalorder %s190, 1
      %s194 = scalar_select %p193, %s190, 1
      %s195 = smul.addr %s192, 2
      %s196 = sadd.s32 %s194, %s195
      %s197 = smul.addr %s196, 4
      %s198 = scalar_lea.vmem %s0, %s197
      %s199 = smul.u32 2, %s19
      %s200 = smul.u32 2, %s19
      %p201 = scmp.lt.s32.totalorder %s18, 1
      %s202 = scalar_select %p201, %s18, 1
      %p203 = scmp.lt.s32.totalorder %s200, 1
      %s204 = scalar_select %p203, %s200, 1
      %s205 = smul.addr %s202, 2
      %s206 = sadd.s32 %s204, %s205
      %s207 = smul.addr %s206, 4
      %s208 = scalar_lea.vmem %s3, %s207
      %s209 = smul.u32 2, %s19
      %v210 = vld [vmem:[%s198] sm:$0xff]
      %v211 = vld [vmem:[%s1] sm:$0xf]
      %v212 = vld [vmem:[%s2] sm:$0xf]
      %214 = vset.pattern.permute.xlu0 0
      %215 = vperm.xlu0 %214, %v212
      %v216 = vpop.permute.xlu0 %215
      %219 = vst [vmem:[#allocation1] ss:$2 sm:$0xff] %v210
      %v220 = vld.sshfl [vmem:[#allocation1] sm:$0xff pattern:$0x75316420]
      %v221 = vld.sshfl [vmem:[#allocation1 + $0x8] sm:$0xff pattern:$0x75316420]
      %vm222 = vcmask 31744
      %v224 = vsel %vm222, %v211, 0
      %vm226 = vcmask 1043456
      %v227 = vsel %vm226, %v220, 0
      %v229 = vsel %vm226, %v221, 0
      %231 = vmatpush.msra.mxu0 0.0
      %232 = vmatpush.msra.mxu0 0.0
      %233 = vmatpush.msra.mxu0 0.0
      %234 = vmatpush.msra.mxu0 0.0
      %235 = vmatpush.msra.mxu0 0.0
      %236 = vmatpush.msra.mxu0 0.0
      %237 = vmatpush.msra.mxu0 0.0
      %238 = vmatpush.msra.mxu0 0.0
      %239 = vmatpush.msra.mxu0 0.0
      %240 = vmatpush.msra.mxu0 0.0
      %241 = vmatpush.msra.mxu0 0.0
      %242 = vmatpush.msra.mxu0 0.0
      %243 = vmatpush.msra.mxu0 0.0
      %244 = vmatpush.msra.mxu0 0.0
      %245 = vmatpush.msra.mxu0 0.0
      %246 = vmatpush.msra.mxu0 %v227
      %247 = vmatmul.f32.gmra.mxu0 %v224
      %v248 = vpop.f32.mrf.mxu0
      %v249 = vadd.f32 %v216, %v248
      %250 = vdwg.mxu0
      %251 = vmatpush.msra.mxu0 0.0
      %252 = vmatpush.msra.mxu0 0.0
      %253 = vmatpush.msra.mxu0 0.0
      %254 = vmatpush.msra.mxu0 0.0
      %255 = vmatpush.msra.mxu0 0.0
      %256 = vmatpush.msra.mxu0 0.0
      %257 = vmatpush.msra.mxu0 0.0
      %258 = vmatpush.msra.mxu0 0.0
      %259 = vmatpush.msra.mxu0 0.0
      %260 = vmatpush.msra.mxu0 0.0
      %261 = vmatpush.msra.mxu0 0.0
      %262 = vmatpush.msra.mxu0 0.0
      %263 = vmatpush.msra.mxu0 0.0
      %264 = vmatpush.msra.mxu0 0.0
      %265 = vmatpush.msra.mxu0 0.0
      %266 = vmatpush.msra.mxu0 %v229
      %267 = vmatmul.f32.gmra.mxu0 %v224
      %v268 = vpop.f32.mrf.mxu0
      %v269 = vadd.f32 %v216, %v268
      %270 = vdwg.mxu0
      %v273 = vrot.slane %v269, 4
      %v274 = vsel %vm226, %v249, %v273
      %276 = vst [vmem:[%s208] sm:$0xff] %v274
      %s277 = smul.u32 2, %s19
      %p278 = scmp.lt.s32.totalorder %s18, 1
      %s279 = scalar_select %p278, %s18, 1
      %p280 = scmp.lt.s32.totalorder %s277, 1
      %s281 = scalar_select %p280, %s277, 1
      %s282 = smul.addr %s279, 2
      %s283 = sadd.s32 %s281, %s282
      %s284 = smul.addr %s283, 4
      %s285 = scalar_lea.vmem %s3, %s284
      // Predicated region
      $region33: #{self_attention_forward.9} parent=31 // pred_check
        %p286 = pneg %p116
      $region34: #{self_attention_forward.9} parent=31 // pred_check_branch
        %288 = sbr.rel (%p286) target = $region36
      $region35: #{self_attention_forward.9} parent=31 // pred_region
        %s289 = smul.u32 2, %s19
      $region36: #{self_attention_forward.9} parent=31 // pred_fallthru
        _
    $region32: #{self_attention_forward.9} parent=5 // pred_fallthru
      _
    %p290 = scmp.le.s32.totalorder 2, %s9
    // Predicated region
    $region37: #{self_attention_forward.9} parent=5 // pred_check
      %p291 = pneg %p290
    $region38: #{self_attention_forward.9} parent=5 // pred_check_branch
      %293 = sbr.rel (%p291) target = $region40
    $region39: #{self_attention_forward.9} parent=5 // pred_region
      %s294 = ssub.s32 %s9, 2
      // Predicated region
      $region41: #{self_attention_forward.9} parent=39 // pred_check
        %p295 = pneg %p122
      $region42: #{self_attention_forward.9} parent=39 // pred_check_branch
        %297 = sbr.rel (%p295) target = $region44
      $region43: #{self_attention_forward.9} parent=39 // pred_region
        %s298 = smul.u32 2, %s21
        %p299 = scmp.lt.s32.totalorder %s20, 1
        %s300 = scalar_select %p299, %s20, 1
        %p301 = scmp.lt.s32.totalorder %s298, 1
        %s302 = scalar_select %p301, %s298, 1
        %s303 = smul.addr %s300, 2
        %s304 = sadd.s32 %s302, %s303
        %s305 = smul.addr %s304, 4
        %s306 = scalar_lea.vmem %s3, %s305
      $region44: #{self_attention_forward.9} parent=39 // pred_fallthru
        _
    $region40: #{self_attention_forward.9} parent=5 // pred_fallthru
      _
  $region6: #{self_attention_forward.9} parent=0 // loop_footer
    %s13 = sadd.s32 1, %s9
  $region7: #{self_attention_forward.9} parent=0 // loop_footer_branch
    %8 = sbr.rel target = $region3
  $region8: #{self_attention_forward.9} parent=0 // loop_exit
    _

// kernel: self_attention_forward.8
$region0: #{self_attention_forward.8}
  #allocation0 [shape = 'u32[]', space=smem, size = 0x4, offset = 0x4, fixed_abs, tag = 'smem constant byte address 0x4 - core index']
  #allocation1 [shape = 'u32[72,128]{1,0:T(1,128)}', space=vmem, size = 0x9000, scoped, tag = 'internal scratch']
  %s0 = inlined_call_operand.vmem [shape: f32[2], index: 0, kind: input, shape index: {}]
  %s1 = inlined_call_operand.vmem [shape: f32[2,6,2,256], index: 1, kind: input, shape index: {}, may-alias: {1,2,3}]
  %s2 = inlined_call_operand.vmem [shape: f32[2,6,2,256], index: 2, kind: input, shape index: {}, may-alias: {1,2,3}]
  %s3 = inlined_call_operand.vmem [shape: f32[2,6,2,256], index: 3, kind: input, shape index: {}, may-alias: {1,2,3}]
  %s4 = inlined_call_operand.vmem [shape: f32[2,2,2,256], index: 4, kind: output, shape index: {}]
  %s5 = sld [smem:[#allocation0]]
  $region53: #{self_attention_forward.8} parent=0
    _
  %s7 = ssub.s32 1, %s5
  %s8 = scalar_select 0, %s7, %s5
  $region1: #{self_attention_forward.8} parent=0
    #allocation2 [shape = 'u8[512]{0}', space=smem, size = 0x200, scoped, tag = 'input window, operand 0, single buffered']
    #allocation3 [shape = 's32[2]{0}', space=sflag, size = 0x8, scoped, tag = 'scoped memory for self_attention_forward.8']
    %9 = vsyncpa [#allocation3], 0
    loop: start=0, step=1, limit=6
    $region2: #{self_attention_forward.8} parent=1 // loop_pre_header
      _
    $region3: #{self_attention_forward.8} parent=1 // loop_header
      %s11 = sphi 0, %s15
      %p12 = scmp.ge.s32.totalorder %s11, 6
      %s18 = sphi 0, %s30
      %s19 = sphi 0, %s26
      %s20 = sphi 0, %s18
      %s21 = sphi 0, %s19
      %s22 = sphi 0, %s20
      %s23 = sphi 0, %s21
      %s31 = sphi 0, %s31
      %s33 = sphi 0, %s31
      %s34 = sphi 0, %s33
      %s48 = sphi 0, %s34
      %s56 = sphi 0, %s58
      %s59 = sphi 0, %s56
      %s60 = sphi 0, %s59
      %s76 = sphi 0, %s60
      %s86 = sphi 0, %s88
      %s89 = sphi 0, %s86
      %s90 = sphi 0, %s89
      %s106 = sphi 0, %s90
      %s116 = sphi 0, %s118
      %s119 = sphi 0, %s116
      %s120 = sphi 0, %s119
      %s136 = sphi 0, %s120
      %s144 = sphi 0, %s146
      %s147 = sphi 0, %s144
      %s148 = sphi 0, %s147
      %s164 = sphi 0, %s148
    $region4: #{self_attention_forward.8} parent=1 // loop_header_branch
      %14 = sbr.rel (%p12) target = $region8
    $region5: #{self_attention_forward.8} parent=1 // loop_body
      %s16 = ssub.s32 %s11, 1
      %s17 = ssub.s32 %s11, 2
      %s24 = sadd.s32 1, %s19
      %p25 = scmp.ge.s32.totalorder %s24, 2
      %s26 = scalar_select %p25, 0, %s24
      %s27 = sadd.s32 1, %s18
      %s28 = scalar_select %p25, %s27, %s18
      %p29 = scmp.ge.s32.totalorder %s28, 2
      %s30 = scalar_select %p29, 0, %s28
      %s32 = sadd.s32 %s31, 1
      %p35 = scmp.eq.s32.totalorder %s11, 3
      %p36 = scmp.ne.s32.totalorder %s31, %s33
      %p37 = scmp.eq.s32.totalorder %s11, 0
      %p38 = por %p36, %p37
      %p39 = scmp.ne.s32.totalorder %s31, %s33
      %p40 = scmp.eq.s32.totalorder %s16, 3
      %p41 = por %p39, %p40
      %p42 = scmp.ne.s32.totalorder %s33, %s34
      %p43 = scmp.eq.s32.totalorder %s16, 0
      %p44 = por %p42, %p43
      %p45 = scmp.ne.s32.totalorder %s33, %s34
      %p46 = scmp.eq.s32.totalorder %s17, 3
      %p47 = por %p45, %p46
      %p49 = scmp.ne.s32.totalorder %s34, %s48
      %p50 = scmp.eq.s32.totalorder %s17, 0
      %p51 = por %p49, %p50
      %s52 = ssub.s32 %s18, %s30
      %s53 = ssub.s32 %s19, %s26
      %s54 = sor.u32 %s52, %s53
      %p55 = scmp.eq.s32.totalorder %s54, 0
      %s57 = sadd.s32 %s56, 1
      %s58 = scalar_select %p55, %s56, %s57
      %p61 = pneg %p55
      %p62 = scmp.eq.s32.totalorder %s11, 3
      %p63 = por %p61, %p62
      %p64 = scmp.ne.s32.totalorder %s56, %s59
      %p65 = scmp.eq.s32.totalorder %s11, 0
      %p66 = por %p64, %p65
      %p67 = scmp.ne.s32.totalorder %s56, %s59
      %p68 = scmp.eq.s32.totalorder %s16, 3
      %p69 = por %p67, %p68
      %p70 = scmp.ne.s32.totalorder %s59, %s60
      %p71 = scmp.eq.s32.totalorder %s16, 0
      %p72 = por %p70, %p71
      %p73 = scmp.ne.s32.totalorder %s59, %s60
      %p74 = scmp.eq.s32.totalorder %s17, 3
      %p75 = por %p73, %p74
      %p77 = scmp.ne.s32.totalorder %s60, %s76
      %p78 = scmp.eq.s32.totalorder %s17, 0
      %p79 = por %p77, %p78
      %s80 = sadd.s32 %s19, 2
      %s81 = sadd.s32 %s26, 2
      %s82 = ssub.s32 %s18, %s30
      %s83 = ssub.s32 %s80, %s81
      %s84 = sor.u32 %s82, %s83
      %p85 = scmp.eq.s32.totalorder %s84, 0
      %s87 = sadd.s32 %s86, 1
      %s88 = scalar_select %p85, %s86, %s87
      %p91 = pneg %p85
      %p92 = scmp.eq.s32.totalorder %s11, 3
      %p93 = por %p91, %p92
      %p94 = scmp.ne.s32.totalorder %s86, %s89
      %p95 = scmp.eq.s32.totalorder %s11, 0
      %p96 = por %p94, %p95
      %p97 = scmp.ne.s32.totalorder %s86, %s89
      %p98 = scmp.eq.s32.totalorder %s16, 3
      %p99 = por %p97, %p98
      %p100 = scmp.ne.s32.totalorder %s89, %s90
      %p101 = scmp.eq.s32.totalorder %s16, 0
      %p102 = por %p100, %p101
      %p103 = scmp.ne.s32.totalorder %s89, %s90
      %p104 = scmp.eq.s32.totalorder %s17, 3
      %p105 = por %p103, %p104
      %p107 = scmp.ne.s32.totalorder %s90, %s106
      %p108 = scmp.eq.s32.totalorder %s17, 0
      %p109 = por %p107, %p108
      %s110 = sadd.s32 %s19, 4
      %s111 = sadd.s32 %s26, 4
      %s112 = ssub.s32 %s18, %s30
      %s113 = ssub.s32 %s110, %s111
      %s114 = sor.u32 %s112, %s113
      %p115 = scmp.eq.s32.totalorder %s114, 0
      %s117 = sadd.s32 %s116, 1
      %s118 = scalar_select %p115, %s116, %s117
      %p121 = pneg %p115
      %p122 = scmp.eq.s32.totalorder %s11, 3
      %p123 = por %p121, %p122
      %p124 = scmp.ne.s32.totalorder %s116, %s119
      %p125 = scmp.eq.s32.totalorder %s11, 0
      %p126 = por %p124, %p125
      %p127 = scmp.ne.s32.totalorder %s116, %s119
      %p128 = scmp.eq.s32.totalorder %s16, 3
      %p129 = por %p127, %p128
      %p130 = scmp.ne.s32.totalorder %s119, %s120
      %p131 = scmp.eq.s32.totalorder %s16, 0
      %p132 = por %p130, %p131
      %p133 = scmp.ne.s32.totalorder %s119, %s120
      %p134 = scmp.eq.s32.totalorder %s17, 3
      %p135 = por %p133, %p134
      %p137 = scmp.ne.s32.totalorder %s120, %s136
      %p138 = scmp.eq.s32.totalorder %s17, 0
      %p139 = por %p137, %p138
      %s140 = ssub.s32 %s18, %s30
      %s141 = ssub.s32 %s19, %s26
      %s142 = sor.u32 %s140, %s141
      %p143 = scmp.eq.s32.totalorder %s142, 0
      %s145 = sadd.s32 %s144, 1
      %s146 = scalar_select %p143, %s144, %s145
      %p149 = pneg %p143
      %p150 = scmp.eq.s32.totalorder %s11, 3
      %p151 = por %p149, %p150
      %p152 = scmp.ne.s32.totalorder %s144, %s147
      %p153 = scmp.eq.s32.totalorder %s11, 0
      %p154 = por %p152, %p153
      %p155 = scmp.ne.s32.totalorder %s144, %s147
      %p156 = scmp.eq.s32.totalorder %s16, 3
      %p157 = por %p155, %p156
      %p158 = scmp.ne.s32.totalorder %s147, %s148
      %p159 = scmp.eq.s32.totalorder %s16, 0
      %p160 = por %p158, %p159
      %p161 = scmp.ne.s32.totalorder %s147, %s148
      %p162 = scmp.eq.s32.totalorder %s17, 3
      %p163 = por %p161, %p162
      %p165 = scmp.ne.s32.totalorder %s148, %s164
      %p166 = scmp.eq.s32.totalorder %s17, 0
      %p167 = por %p165, %p166
      %p168 = scmp.le.s32.totalorder 1, %s11
      %p169 = scmp.lt.s32.totalorder %s11, 5
      %p170 = pnand %p168, %p169
      %p171 = pneg %p170
      // Predicated region
      $region9: #{self_attention_forward.8} parent=5 // pred_check
        _
      $region10: #{self_attention_forward.8} parent=5 // pred_check_branch
        %173 = sbr.rel (%p170) target = $region12
      $region11: #{self_attention_forward.8} parent=5 // pred_region
        %s174 = ssub.s32 %s11, 1
        // Predicated region
        $region13: #{self_attention_forward.8} parent=11 // pred_check
          %p175 = pneg %p44
        $region14: #{self_attention_forward.8} parent=11 // pred_check_branch
          %177 = sbr.rel (%p175) target = $region16
        $region15: #{self_attention_forward.8} parent=11 // pred_region
          %179 = vsyncadd [#allocation3], 0
          %s181 = sshll.u32 %s0, 4
          %s182 = int_to_ptr.vmem [resolvable:$true] %s181
          %184 = dma.vmem_to_smem %s182, 16, [#allocation2], [#allocation3]
        $region16: #{self_attention_forward.8} parent=11 // pred_fallthru
          _
      $region12: #{self_attention_forward.8} parent=5 // pred_fallthru
        _
      %p185 = scmp.lt.s32.totalorder %s11, 4
      // Predicated region
      $region17: #{self_attention_forward.8} parent=5 // pred_check
        %p186 = pneg %p185
      $region18: #{self_attention_forward.8} parent=5 // pred_check_branch
        %188 = sbr.rel (%p186) target = $region20
      $region19: #{self_attention_forward.8} parent=5 // pred_region
        // Predicated region
        $region21: #{self_attention_forward.8} parent=19 // pred_check
          %p189 = pneg %p66
        $region22: #{self_attention_forward.8} parent=19 // pred_check_branch
          %191 = sbr.rel (%p189) target = $region24
        $region23: #{self_attention_forward.8} parent=19 // pred_region
          %p192 = scmp.lt.s32.totalorder %s18, 1
          %s193 = scalar_select %p192, %s18, 1
          %p194 = scmp.lt.s32.totalorder %s19, 5
          %s195 = scalar_select %p194, %s19, 5
          %s196 = smul.addr %s195, 2
          %s197 = smul.addr %s193, 12
          %s198 = sadd.s32 %s196, %s197
          %s199 = smul.addr %s198, 2
          %s200 = scalar_lea.vmem %s1, %s199
        $region24: #{self_attention_forward.8} parent=19 // pred_fallthru
          _
        // Predicated region
        $region25: #{self_attention_forward.8} parent=19 // pred_check
          %p201 = pneg %p96
        $region26: #{self_attention_forward.8} parent=19 // pred_check_branch
          %203 = sbr.rel (%p201) target = $region28
        $region27: #{self_attention_forward.8} parent=19 // pred_region
          %s204 = sadd.s32 %s19, 2
          %p205 = scmp.lt.s32.totalorder %s18, 1
          %s206 = scalar_select %p205, %s18, 1
          %p207 = scmp.lt.s32.totalorder %s204, 5
          %s208 = scalar_select %p207, %s204, 5
          %s209 = smul.addr %s208, 2
          %s210 = smul.addr %s206, 12
          %s211 = sadd.s32 %s209, %s210
          %s212 = smul.addr %s211, 2
          %s213 = scalar_lea.vmem %s2, %s212
          %s214 = sadd.s32 %s19, 2
        $region28: #{self_attention_forward.8} parent=19 // pred_fallthru
          _
        // Predicated region
        $region29: #{self_attention_forward.8} parent=19 // pred_check
          %p215 = pneg %p126
        $region30: #{self_attention_forward.8} parent=19 // pred_check_branch
          %217 = sbr.rel (%p215) target = $region32
        $region31: #{self_attention_forward.8} parent=19 // pred_region
          %s218 = sadd.s32 %s19, 4
          %p219 = scmp.lt.s32.totalorder %s18, 1
          %s220 = scalar_select %p219, %s18, 1
          %p221 = scmp.lt.s32.totalorder %s218, 5
          %s222 = scalar_select %p221, %s218, 5
          %s223 = smul.addr %s222, 2
          %s224 = smul.addr %s220, 12
          %s225 = sadd.s32 %s223, %s224
          %s226 = smul.addr %s225, 2
          %s227 = scalar_lea.vmem %s3, %s226
          %s228 = sadd.s32 %s19, 4
        $region32: #{self_attention_forward.8} parent=19 // pred_fallthru
          _
      $region20: #{self_attention_forward.8} parent=5 // pred_fallthru
        _
      %p229 = scmp.le.s32.totalorder 1, %s11
      %p230 = scmp.lt.s32.totalorder %s11, 5
      %p231 = pnand %p229, %p230
      %p232 = pneg %p231
      // Predicated region
      $region33: #{self_attention_forward.8} parent=5 // pred_check
        _
      $region34: #{self_attention_forward.8} parent=5 // pred_check_branch
        %234 = sbr.rel (%p231) target = $region36
      $region35: #{self_attention_forward.8} parent=5 // pred_region
        %s235 = ssub.s32 %s11, 1
        // Predicated region
        $region37: #{self_attention_forward.8} parent=35 // pred_check
          %p236 = pneg %p44
        $region38: #{self_attention_forward.8} parent=35 // pred_check_branch
          %238 = sbr.rel (%p236) target = $region40
        $region39: #{self_attention_forward.8} parent=35 // pred_region
          %240 = dma.done [#allocation3], 16
        $region40: #{self_attention_forward.8} parent=35 // pred_fallthru
          _
        %241 = sfence
        %p242 = pneg %p44
        %p243 = pneg %p41
        %p244 = scmp.lt.s32.totalorder %s20, 1
        %s245 = scalar_select %p244, %s20, 1
        %p246 = scmp.lt.s32.totalorder %s21, 5
        %s247 = scalar_select %p246, %s21, 5
        %s248 = smul.addr %s247, 2
        %s249 = smul.addr %s245, 12
        %s250 = sadd.s32 %s248, %s249
        %s251 = smul.addr %s250, 2
        %s252 = scalar_lea.vmem %s1, %s251
        %p253 = pneg %p72
        %p254 = pneg %p69
        %s255 = sadd.s32 %s21, 2
        %p256 = scmp.lt.s32.totalorder %s20, 1
        %s257 = scalar_select %p256, %s20, 1
        %p258 = scmp.lt.s32.totalorder %s255, 5
        %s259 = scalar_select %p258, %s255, 5
        %s260 = smul.addr %s259, 2
        %s261 = smul.addr %s257, 12
        %s262 = sadd.s32 %s260, %s261
        %s263 = smul.addr %s262, 2
        %s264 = scalar_lea.vmem %s2, %s263
        %p265 = pneg %p102
        %p266 = pneg %p99
        %s267 = sadd.s32 %s21, 4
        %p268 = scmp.lt.s32.totalorder %s20, 1
        %s269 = scalar_select %p268, %s20, 1
        %p270 = scmp.lt.s32.totalorder %s267, 5
        %s271 = scalar_select %p270, %s267, 5
        %s272 = smul.addr %s271, 2
        %s273 = smul.addr %s269, 12
        %s274 = sadd.s32 %s272, %s273
        %s275 = smul.addr %s274, 2
        %s276 = scalar_lea.vmem %s3, %s275
        %p277 = pneg %p132
        %p278 = pneg %p129
        %p279 = pneg %p160
        %p280 = pneg %p157
        %p281 = scmp.lt.s32.totalorder %s20, 1
        %s282 = scalar_select %p281, %s20, 1
        %p283 = scmp.lt.s32.totalorder %s21, 1
        %s284 = scalar_select %p283, %s21, 1
        %s285 = smul.addr %s284, 2
        %s286 = smul.addr %s282, 4
        %s287 = sadd.s32 %s285, %s286
        %s288 = smul.addr %s287, 2
        %s289 = scalar_lea.vmem %s4, %s288
        %p290 = scmp.lt.s32.totalorder %s20, 1
        %s291 = scalar_select %p290, %s20, 1
        %p292 = scmp.lt.s32.totalorder %s21, 5
        %s293 = scalar_select %p292, %s21, 5
        %s294 = smul.addr %s293, 2
        %s295 = smul.addr %s291, 12
        %s296 = sadd.s32 %s294, %s295
        %s297 = smul.addr %s296, 2
        %s298 = scalar_lea.vmem %s1, %s297
        %s299 = sadd.s32 %s21, 2
        %p300 = scmp.lt.s32.totalorder %s20, 1
        %s301 = scalar_select %p300, %s20, 1
        %p302 = scmp.lt.s32.totalorder %s299, 5
        %s303 = scalar_select %p302, %s299, 5
        %s304 = smul.addr %s303, 2
        %s305 = smul.addr %s301, 12
        %s306 = sadd.s32 %s304, %s305
        %s307 = smul.addr %s306, 2
        %s308 = scalar_lea.vmem %s2, %s307
        %s309 = sadd.s32 %s21, 2
        %s310 = sadd.s32 %s21, 4
        %p311 = scmp.lt.s32.totalorder %s20, 1
        %s312 = scalar_select %p311, %s20, 1
        %p313 = scmp.lt.s32.totalorder %s310, 5
        %s314 = scalar_select %p313, %s310, 5
        %s315 = smul.addr %s314, 2
        %s316 = smul.addr %s312, 12
        %s317 = sadd.s32 %s315, %s316
        %s318 = smul.addr %s317, 2
        %s319 = scalar_lea.vmem %s3, %s318
        %s320 = sadd.s32 %s21, 4
        %p321 = scmp.lt.s32.totalorder %s20, 1
        %s322 = scalar_select %p321, %s20, 1
        %p323 = scmp.lt.s32.totalorder %s21, 1
        %s324 = scalar_select %p323, %s21, 1
        %s325 = smul.addr %s324, 2
        %s326 = smul.addr %s322, 4
        %s327 = sadd.s32 %s325, %s326
        %s328 = smul.addr %s327, 2
        %s329 = scalar_lea.vmem %s4, %s328
        %v330 = vld [vmem:[%s298] sm:$0xf]
        %v331 = vld [vmem:[%s308] sm:$0xf]
        %v332 = vld [vmem:[%s319] sm:$0xf]
        %v333 = vmul.f32 %v330, %v330
        %335 = vst [vmem:[#allocation1] ss:$4 sm:$0xff] %v333
        %v336 = vld.sshfl [vmem:[#allocation1] sm:$0xff pattern:$0x73625140]
        %v337 = vld.sshfl [vmem:[#allocation1 + $0x8] sm:$0xff pattern:$0x73625140]
        %vm340 = vcmask 1041408
        %v341 = vsel %vm340, %v336, 0.0
        %v342 = vsel %vm340, %v337, 0.0
        %v343 = vadd.f32 %v341, %v342
        %344 = vadd.xlane.f32.xlu0 %v343
        %v345 = vpop.xlane.xlu0 %344
        %v346 = vrsqrt.pop %v345
        %v347 = vmul.f32 %v346, %v345
        %v348 = vmul.f32 %v347, %v346
        %v349 = vmul.f32 0.5, %v348
        %v350 = vsub.f32 1.5, %v349
        %v351 = vmul.f32 %v346, %v350
        %v352 = vmul.f32 %v345, %v351
        %vm353 = vcmp.eq.f32.partialorder %v345, inf
        %v354 = vsel %vm353, %v345, %v352
        %vm355 = vcmp.eq.f32.partialorder %v345, 0.0
        %v356 = vand.u32 %v345, 2147483648
        %v357 = vsel %vm355, %v356, %v354
        %v358 = vmax.f32 %v357, 1e-12
        %v361 = vunpack.c.l.s4 269488144
        %v362 = vunpack.c.0.s8 %v361
        %v363 = vperm.slane %v358, %v362
        %v365 = vrcp.pop %v363
        %v366 = vmul.f32 %v363, %v365
        %v367 = vsub.f32 1.0, %v366
        %v368 = vmul.f32 %v365, %v367
        %v369 = vadd.f32 %v365, %v368
        %vm370 = vweird.f32 %v363
        %vm371 = vweird.f32 %v365
        %vm372 = vmor %vm370, %vm371
        %v373 = vsel %vm372, %v365, %v369
        %v374 = vand.u32 2147483647, %v363
        %vm375 = vcmp.eq.f32.partialorder %v374, 8.507059e+37
        %v376 = vand.u32 %v363, 2147483648
        %v377 = vor.u32 1.1754944e-38, %v376
        %v378 = vsel %vm375, %v377, %v373
        %v379 = vmul.f32 %v330, %v378
        %v380 = vmul.f32 %v331, %v331
        %382 = vst [vmem:[#allocation1] ss:$4 sm:$0xff] %v380
        %v383 = vld.sshfl [vmem:[#allocation1] sm:$0xff pattern:$0x73625140]
        %v384 = vld.sshfl [vmem:[#allocation1 + $0x8] sm:$0xff pattern:$0x73625140]
        %v387 = vsel %vm340, %v383, 0.0
        %v388 = vsel %vm340, %v384, 0.0
        %v389 = vadd.f32 %v387, %v388
        %390 = vadd.xlane.f32.xlu0 %v389
        %v391 = vpop.xlane.xlu0 %390
        %v392 = vrsqrt.pop %v391
        %v393 = vmul.f32 %v392, %v391
        %v394 = vmul.f32 %v393, %v392
        %v395 = vmul.f32 0.5, %v394
        %v396 = vsub.f32 1.5, %v395
        %v397 = vmul.f32 %v392, %v396
        %v398 = vmul.f32 %v391, %v397
        %vm399 = vcmp.eq.f32.partialorder %v391, inf
        %v400 = vsel %vm399, %v391, %v398
        %vm401 = vcmp.eq.f32.partialorder %v391, 0.0
        %v402 = vand.u32 %v391, 2147483648
        %v403 = vsel %vm401, %v402, %v400
        %v404 = vmax.f32 %v403, 1e-12
        %v407 = vunpack.c.l.s4 269488144
        %v408 = vunpack.c.0.s8 %v407
        %v409 = vperm.slane %v404, %v408
        %v411 = vrcp.pop %v409
        %v412 = vmul.f32 %v409, %v411
        %v413 = vsub.f32 1.0, %v412
        %v414 = vmul.f32 %v411, %v413
        %v415 = vadd.f32 %v411, %v414
        %vm416 = vweird.f32 %v409
        %vm417 = vweird.f32 %v411
        %vm418 = vmor %vm416, %vm417
        %v419 = vsel %vm418, %v411, %v415
        %v420 = vand.u32 2147483647, %v409
        %vm421 = vcmp.eq.f32.partialorder %v420, 8.507059e+37
        %v422 = vand.u32 %v409, 2147483648
        %v423 = vor.u32 1.1754944e-38, %v422
        %v424 = vsel %vm421, %v423, %v419
        %v425 = vmul.f32 %v331, %v424
        %v426 = vmul.f32 %v332, %v332
        %428 = vst [vmem:[#allocation1] ss:$4 sm:$0xff] %v426
        %v429 = vld.sshfl [vmem:[#allocation1] sm:$0xff pattern:$0x73625140]
        %v430 = vld.sshfl [vmem:[#allocation1 + $0x8] sm:$0xff pattern:$0x73625140]
        %v433 = vsel %vm340, %v429, 0.0
        %v434 = vsel %vm340, %v430, 0.0
        %v435 = vadd.f32 %v433, %v434
        %436 = vadd.xlane.f32.xlu0 %v435
        %v437 = vpop.xlane.xlu0 %436
        %v438 = vrsqrt.pop %v437
        %v439 = vmul.f32 %v438, %v437
        %v440 = vmul.f32 %v439, %v438
        %v441 = vmul.f32 0.5, %v440
        %v442 = vsub.f32 1.5, %v441
        %v443 = vmul.f32 %v438, %v442
        %v444 = vmul.f32 %v437, %v443
        %vm445 = vcmp.eq.f32.partialorder %v437, inf
        %v446 = vsel %vm445, %v437, %v444
        %vm447 = vcmp.eq.f32.partialorder %v437, 0.0
        %v448 = vand.u32 %v437, 2147483648
        %v449 = vsel %vm447, %v448, %v446
        %v450 = vmax.f32 %v449, 1e-12
        %v453 = vunpack.c.l.s4 269488144
        %v454 = vunpack.c.0.s8 %v453
        %v455 = vperm.slane %v450, %v454
        %v457 = vrcp.pop %v455
        %v458 = vmul.f32 %v455, %v457
        %v459 = vsub.f32 1.0, %v458
        %v460 = vmul.f32 %v457, %v459
        %v461 = vadd.f32 %v457, %v460
        %vm462 = vweird.f32 %v455
        %vm463 = vweird.f32 %v457
        %vm464 = vmor %vm462, %vm463
        %v465 = vsel %vm464, %v457, %v461
        %v466 = vand.u32 2147483647, %v455
        %vm467 = vcmp.eq.f32.partialorder %v466, 8.507059e+37
        %v468 = vand.u32 %v455, 2147483648
        %v469 = vor.u32 1.1754944e-38, %v468
        %v470 = vsel %vm467, %v469, %v465
        %v471 = vmul.f32 %v332, %v470
        %s472 = sld [smem:[#allocation2 + %s21]]
        %474 = vst [vmem:[#allocation1] ss:$4 sm:$0xff] %v379
        %v475 = vld.sshfl [vmem:[#allocation1] sm:$0xff pattern:$0x73625140]
        %v476 = vld.sshfl [vmem:[#allocation1 + $0x8] sm:$0xff pattern:$0x73625140]
        %480 = vst [vmem:[#allocation1] ss:$4 sm:$0xff] %v425
        %v481 = vld.sshfl [vmem:[#allocation1] sm:$0xff pattern:$0x73625140]
        %v482 = vld.sshfl [vmem:[#allocation1 + $0x8] sm:$0xff pattern:$0x73625140]
        %485 = vmatpush.xpose.msra.mxu0 0.0
        %486 = vmatpush.xpose.msra.mxu0 0.0
        %487 = vmatpush.xpose.msra.mxu0 0.0
        %488 = vmatpush.xpose.msra.mxu0 0.0
        %489 = vmatpush.xpose.msra.mxu0 0.0
        %490 = vmatpush.xpose.msra.mxu0 0.0
        %491 = vmatpush.xpose.msra.mxu0 0.0
        %492 = vmatpush.xpose.msra.mxu0 0.0
        %493 = vmatpush.xpose.msra.mxu0 0.0
        %494 = vmatpush.xpose.msra.mxu0 0.0
        %495 = vmatpush.xpose.msra.mxu0 0.0
        %496 = vmatpush.xpose.msra.mxu0 0.0
        %497 = vmatpush.xpose.msra.mxu0 0.0
        %498 = vmatpush.xpose.msra.mxu0 0.0
        %499 = vmatpush.xpose.msra.mxu0 0.0
        %500 = vmatpush.xpose.msra.mxu0 %v481
        %501 = vmatmul.f32.gmra.mxu0 %v475
        %v502 = vpop.f32.mrf.mxu0
        %v503 = vadd.f32 0.0, %v502
        %504 = vdwg.mxu0
        %505 = vmatpush.xpose.msra.mxu0 0.0
        %506 = vmatpush.xpose.msra.mxu0 0.0
        %507 = vmatpush.xpose.msra.mxu0 0.0
        %508 = vmatpush.xpose.msra.mxu0 0.0
        %509 = vmatpush.xpose.msra.mxu0 0.0
        %510 = vmatpush.xpose.msra.mxu0 0.0
        %511 = vmatpush.xpose.msra.mxu0 0.0
        %512 = vmatpush.xpose.msra.mxu0 0.0
        %513 = vmatpush.xpose.msra.mxu0 0.0
        %514 = vmatpush.xpose.msra.mxu0 0.0
        %515 = vmatpush.xpose.msra.mxu0 0.0
        %516 = vmatpush.xpose.msra.mxu0 0.0
        %517 = vmatpush.xpose.msra.mxu0 0.0
        %518 = vmatpush.xpose.msra.mxu0 0.0
        %519 = vmatpush.xpose.msra.mxu0 0.0
        %520 = vmatpush.xpose.msra.mxu0 %v482
        %521 = vmatmul.f32.gmra.mxu0 %v476
        %v522 = vpop.f32.mrf.mxu0
        %v523 = vadd.f32 %v503, %v522
        %524 = vdwg.mxu0
        %v525 = vstv %s472
        %v526 = vmul.f32 %v523, %v525
        %vm527 = vcmask 9216
        %v528 = vsel %vm527, %v526, -inf
        %529 = vmax.xlane.f32.xlu0 %v528
        %v530 = vpop.xlane.xlu0 %529
        %v531 = vsub.f32 %v526, %v530
        %v532 = vmul.f32 %v531, 1.442695
        %v533 = vpow.pop %v532
        %v534 = vsel %vm527, %v533, 0.0
        %535 = vadd.xlane.f32.xlu0 %v534
        %v536 = vpop.xlane.xlu0 %535
        %v537 = vrcp.pop %v536
        %v538 = vmul.f32 %v536, %v537
        %v539 = vsub.f32 1.0, %v538
        %v540 = vmul.f32 %v537, %v539
        %v541 = vadd.f32 %v537, %v540
        %vm542 = vweird.f32 %v536
        %vm543 = vweird.f32 %v537
        %vm544 = vmor %vm542, %vm543
        %v545 = vsel %vm544, %v537, %v541
        %v546 = vand.u32 2147483647, %v536
        %vm547 = vcmp.eq.f32.partialorder %v546, 8.507059e+37
        %v548 = vand.u32 %v536, 2147483648
        %v549 = vor.u32 1.1754944e-38, %v548
        %v550 = vsel %vm547, %v549, %v545
        %v551 = vmul.f32 %v533, %v550
        %553 = vst [vmem:[#allocation1] ss:$4 sm:$0xff] %v471
        %v554 = vld.sshfl [vmem:[#allocation1] sm:$0xff pattern:$0x73625140]
        %v555 = vld.sshfl [vmem:[#allocation1 + $0x8] sm:$0xff pattern:$0x73625140]
        %vm556 = vcmask 15360
        %v558 = vsel %vm556, %v551, 0
        %v560 = vsel %vm340, %v554, 0
        %v562 = vsel %vm340, %v555, 0
        %564 = vmatpush.msra.mxu0 0.0
        %565 = vmatpush.msra.mxu0 0.0
        %566 = vmatpush.msra.mxu0 0.0
        %567 = vmatpush.msra.mxu0 0.0
        %568 = vmatpush.msra.mxu0 0.0
        %569 = vmatpush.msra.mxu0 0.0
        %570 = vmatpush.msra.mxu0 0.0
        %571 = vmatpush.msra.mxu0 0.0
        %572 = vmatpush.msra.mxu0 0.0
        %573 = vmatpush.msra.mxu0 0.0
        %574 = vmatpush.msra.mxu0 0.0
        %575 = vmatpush.msra.mxu0 0.0
        %576 = vmatpush.msra.mxu0 0.0
        %577 = vmatpush.msra.mxu0 0.0
        %578 = vmatpush.msra.mxu0 0.0
        %579 = vmatpush.msra.mxu0 %v560
        %580 = vmatmul.f32.gmra.mxu0 %v558
        %v581 = vpop.f32.mrf.mxu0
        %v582 = vadd.f32 0.0, %v581
        %583 = vdwg.mxu0
        %584 = vmatpush.msra.mxu0 0.0
        %585 = vmatpush.msra.mxu0 0.0
        %586 = vmatpush.msra.mxu0 0.0
        %587 = vmatpush.msra.mxu0 0.0
        %588 = vmatpush.msra.mxu0 0.0
        %589 = vmatpush.msra.mxu0 0.0
        %590 = vmatpush.msra.mxu0 0.0
        %591 = vmatpush.msra.mxu0 0.0
        %592 = vmatpush.msra.mxu0 0.0
        %593 = vmatpush.msra.mxu0 0.0
        %594 = vmatpush.msra.mxu0 0.0
        %595 = vmatpush.msra.mxu0 0.0
        %596 = vmatpush.msra.mxu0 0.0
        %597 = vmatpush.msra.mxu0 0.0
        %598 = vmatpush.msra.mxu0 0.0
        %599 = vmatpush.msra.mxu0 %v562
        %600 = vmatmul.f32.gmra.mxu0 %v558
        %v601 = vpop.f32.mrf.mxu0
        %v602 = vadd.f32 0.0, %v601
        %603 = vdwg.mxu0
        %v606 = vrot.slane %v602, 6
        %v607 = vsel %vm340, %v582, %v606
        %609 = vst [vmem:[%s329] sm:$0xf] %v607
        %p610 = scmp.lt.s32.totalorder %s20, 1
        %s611 = scalar_select %p610, %s20, 1
        %p612 = scmp.lt.s32.totalorder %s21, 1
        %s613 = scalar_select %p612, %s21, 1
        %s614 = smul.addr %s613, 2
        %s615 = smul.addr %s611, 4
        %s616 = sadd.s32 %s614, %s615
        %s617 = smul.addr %s616, 2
        %s618 = scalar_lea.vmem %s4, %s617
        // Predicated region
        $region41: #{self_attention_forward.8} parent=35 // pred_check
          %p619 = pneg %p157
        $region42: #{self_attention_forward.8} parent=35 // pred_check_branch
          %621 = sbr.rel (%p619) target = $region44
        $region43: #{self_attention_forward.8} parent=35 // pred_region
          _
        $region44: #{self_attention_forward.8} parent=35 // pred_fallthru
          _
      $region36: #{self_attention_forward.8} parent=5 // pred_fallthru
        _
      %p622 = scmp.le.s32.totalorder 2, %s11
      // Predicated region
      $region45: #{self_attention_forward.8} parent=5 // pred_check
        %p623 = pneg %p622
      $region46: #{self_attention_forward.8} parent=5 // pred_check_branch
        %625 = sbr.rel (%p623) target = $region48
      $region47: #{self_attention_forward.8} parent=5 // pred_region
        %s626 = ssub.s32 %s11, 2
        // Predicated region
        $region49: #{self_attention_forward.8} parent=47 // pred_check
          %p627 = pneg %p163
        $region50: #{self_attention_forward.8} parent=47 // pred_check_branch
          %629 = sbr.rel (%p627) target = $region52
        $region51: #{self_attention_forward.8} parent=47 // pred_region
          %p630 = scmp.lt.s32.totalorder %s22, 1
          %s631 = scalar_select %p630, %s22, 1
          %p632 = scmp.lt.s32.totalorder %s23, 1
          %s633 = scalar_select %p632, %s23, 1
          %s634 = smul.addr %s633, 2
          %s635 = smul.addr %s631, 4
          %s636 = sadd.s32 %s634, %s635
          %s637 = smul.addr %s636, 2
          %s638 = scalar_lea.vmem %s4, %s637
        $region52: #{self_attention_forward.8} parent=47 // pred_fallthru
          _
      $region48: #{self_attention_forward.8} parent=5 // pred_fallthru
        _
    $region6: #{self_attention_forward.8} parent=1 // loop_footer
      %s15 = sadd.s32 1, %s11
    $region7: #{self_attention_forward.8} parent=1 // loop_footer_branch
      %10 = sbr.rel target = $region3
    $region8: #{self_attention_forward.8} parent=1 // loop_exit
      _
    %639 = vsyncpa [#allocation3], 1
    %s640 = scalar_lea.sflag [#allocation3], 1
    %641 = vsyncpa %s640, 1

// kernel: self_attention_forward.7
$region0: #{self_attention_forward.7}
  #allocation0 [shape = 'u32[]', space=smem, size = 0x4, offset = 0x4, fixed_abs, tag = 'smem constant byte address 0x4 - core index']
  #allocation1 [shape = 'u32[72,128]{1,0:T(1,128)}', space=vmem, size = 0x9000, scoped, tag = 'internal scratch']
  %s0 = inlined_call_operand.vmem [shape: f32[2,12,18,18], index: 0, kind: input, shape index: {}]
  %s1 = inlined_call_operand.vmem [shape: f32[12,3,3], index: 1, kind: input, shape index: {}]
  %s2 = inlined_call_operand.vmem [shape: f32[12,1,1], index: 2, kind: input, shape index: {}]
  %s3 = inlined_call_operand.vmem [shape: f32[2,12,16,16], index: 3, kind: output, shape index: {}]
  %s4 = sld [smem:[#allocation0]]
  $region45: #{self_attention_forward.7} parent=0
    _
  %s6 = ssub.s32 1, %s4
  %s7 = scalar_select 0, %s6, %s4
  loop: start=0, step=1, limit=4
  $region2: #{self_attention_forward.7} parent=0 // loop_pre_header
    _
  $region3: #{self_attention_forward.7} parent=0 // loop_header
    %s9 = sphi 0, %s13
    %p10 = scmp.ge.s32.totalorder %s9, 4
    %s16 = sphi 0, %s28
    %s17 = sphi 0, %s24
    %s18 = sphi 0, %s16
    %s19 = sphi 0, %s17
    %s20 = sphi 0, %s18
    %s21 = sphi 0, %s19
    %s33 = sphi 0, %s35
    %s36 = sphi 0, %s33
    %s37 = sphi 0, %s36
    %s53 = sphi 0, %s37
    %s59 = sphi 0, %s61
    %s62 = sphi 0, %s59
    %s63 = sphi 0, %s62
    %s79 = sphi 0, %s63
    %s85 = sphi 0, %s87
    %s88 = sphi 0, %s85
    %s89 = sphi 0, %s88
    %s105 = sphi 0, %s89
    %s113 = sphi 0, %s115
    %s116 = sphi 0, %s113
    %s117 = sphi 0, %s116
    %s133 = sphi 0, %s117
  $region4: #{self_attention_forward.7} parent=0 // loop_header_branch
    %12 = sbr.rel (%p10) target = $region8
  $region5: #{self_attention_forward.7} parent=0 // loop_body
    %s14 = ssub.s32 %s9, 1
    %s15 = ssub.s32 %s9, 2
    %s22 = sadd.s32 1, %s17
    %p23 = scmp.ge.s32.totalorder %s22, 1
    %s24 = scalar_select %p23, 0, %s22
    %s25 = sadd.s32 1, %s16
    %s26 = scalar_select %p23, %s25, %s16
    %p27 = scmp.ge.s32.totalorder %s26, 2
    %s28 = scalar_select %p27, 0, %s26
    %s29 = ssub.s32 %s16, %s28
    %s30 = ssub.s32 %s17, %s24
    %s31 = sor.u32 %s29, %s30
    %p32 = scmp.eq.s32.totalorder %s31, 0
    %s34 = sadd.s32 %s33, 1
    %s35 = scalar_select %p32, %s33, %s34
    %p38 = pneg %p32
    %p39 = scmp.eq.s32.totalorder %s9, 1
    %p40 = por %p38, %p39
    %p41 = scmp.ne.s32.totalorder %s33, %s36
    %p42 = scmp.eq.s32.totalorder %s9, 0
    %p43 = por %p41, %p42
    %p44 = scmp.ne.s32.totalorder %s33, %s36
    %p45 = scmp.eq.s32.totalorder %s14, 1
    %p46 = por %p44, %p45
    %p47 = scmp.ne.s32.totalorder %s36, %s37
    %p48 = scmp.eq.s32.totalorder %s14, 0
    %p49 = por %p47, %p48
    %p50 = scmp.ne.s32.totalorder %s36, %s37
    %p51 = scmp.eq.s32.totalorder %s15, 1
    %p52 = por %p50, %p51
    %p54 = scmp.ne.s32.totalorder %s37, %s53
    %p55 = scmp.eq.s32.totalorder %s15, 0
    %p56 = por %p54, %p55
    %s57 = ssub.s32 %s17, %s24
    %p58 = scmp.eq.s32.totalorder %s57, 0
    %s60 = sadd.s32 %s59, 1
    %s61 = scalar_select %p58, %s59, %s60
    %p64 = pneg %p58
    %p65 = scmp.eq.s32.totalorder %s9, 1
    %p66 = por %p64, %p65
    %p67 = scmp.ne.s32.totalorder %s59, %s62
    %p68 = scmp.eq.s32.totalorder %s9, 0
    %p69 = por %p67, %p68
    %p70 = scmp.ne.s32.totalorder %s59, %s62
    %p71 = scmp.eq.s32.totalorder %s14, 1
    %p72 = por %p70, %p71
    %p73 = scmp.ne.s32.totalorder %s62, %s63
    %p74 = scmp.eq.s32.totalorder %s14, 0
    %p75 = por %p73, %p74
    %p76 = scmp.ne.s32.totalorder %s62, %s63
    %p77 = scmp.eq.s32.totalorder %s15, 1
    %p78 = por %p76, %p77
    %p80 = scmp.ne.s32.totalorder %s63, %s79
    %p81 = scmp.eq.s32.totalorder %s15, 0
    %p82 = por %p80, %p81
    %s83 = ssub.s32 %s17, %s24
    %p84 = scmp.eq.s32.totalorder %s83, 0
    %s86 = sadd.s32 %s85, 1
    %s87 = scalar_select %p84, %s85, %s86
    %p90 = pneg %p84
    %p91 = scmp.eq.s32.totalorder %s9, 1
    %p92 = por %p90, %p91
    %p93 = scmp.ne.s32.totalorder %s85, %s88
    %p94 = scmp.eq.s32.totalorder %s9, 0
    %p95 = por %p93, %p94
    %p96 = scmp.ne.s32.totalorder %s85, %s88
    %p97 = scmp.eq.s32.totalorder %s14, 1
    %p98 = por %p96, %p97
    %p99 = scmp.ne.s32.totalorder %s88, %s89
    %p100 = scmp.eq.s32.totalorder %s14, 0
    %p101 = por %p99, %p100
    %p102 = scmp.ne.s32.totalorder %s88, %s89
    %p103 = scmp.eq.s32.totalorder %s15, 1
    %p104 = por %p102, %p103
    %p106 = scmp.ne.s32.totalorder %s89, %s105
    %p107 = scmp.eq.s32.totalorder %s15, 0
    %p108 = por %p106, %p107
    %s109 = ssub.s32 %s16, %s28
    %s110 = ssub.s32 %s17, %s24
    %s111 = sor.u32 %s109, %s110
    %p112 = scmp.eq.s32.totalorder %s111, 0
    %s114 = sadd.s32 %s113, 1
    %s115 = scalar_select %p112, %s113, %s114
    %p118 = pneg %p112
    %p119 = scmp.eq.s32.totalorder %s9, 1
    %p120 = por %p118, %p119
    %p121 = scmp.ne.s32.totalorder %s113, %s116
    %p122 = scmp.eq.s32.totalorder %s9, 0
    %p123 = por %p121, %p122
    %p124 = scmp.ne.s32.totalorder %s113, %s116
    %p125 = scmp.eq.s32.totalorder %s14, 1
    %p126 = por %p124, %p125
    %p127 = scmp.ne.s32.totalorder %s116, %s117
    %p128 = scmp.eq.s32.totalorder %s14, 0
    %p129 = por %p127, %p128
    %p130 = scmp.ne.s32.totalorder %s116, %s117
    %p131 = scmp.eq.s32.totalorder %s15, 1
    %p132 = por %p130, %p131
    %p134 = scmp.ne.s32.totalorder %s117, %s133
    %p135 = scmp.eq.s32.totalorder %s15, 0
    %p136 = por %p134, %p135
    %p137 = scmp.le.s32.totalorder 1, %s9
    %p138 = scmp.lt.s32.totalorder %s9, 3
    %p139 = pnand %p137, %p138
    %p140 = pneg %p139
    // Predicated region
    $region9: #{self_attention_forward.7} parent=5 // pred_check
      _
    $region10: #{self_attention_forward.7} parent=5 // pred_check_branch
      %142 = sbr.rel (%p139) target = $region12
    $region11: #{self_attention_forward.7} parent=5 // pred_region
      %s143 = ssub.s32 %s9, 1
      // Predicated region
      $region13: #{self_attention_forward.7} parent=11 // pred_check
        %p144 = pneg %p75
      $region14: #{self_attention_forward.7} parent=11 // pred_check_branch
        %146 = sbr.rel (%p144) target = $region16
      $region15: #{self_attention_forward.7} parent=11 // pred_region
        %s147 = smul.u32 12, %s19
        %p148 = scmp.lt.s32.totalorder %s147, 11
        %s149 = scalar_select %p148, %s147, 11
        %s150 = smul.addr %s149, 4
        %s151 = scalar_lea.vmem %s1, %s150
        %s152 = smul.u32 12, %s19
      $region16: #{self_attention_forward.7} parent=11 // pred_fallthru
        _
      // Predicated region
      $region17: #{self_attention_forward.7} parent=11 // pred_check
        %p153 = pneg %p101
      $region18: #{self_attention_forward.7} parent=11 // pred_check_branch
        %155 = sbr.rel (%p153) target = $region20
      $region19: #{self_attention_forward.7} parent=11 // pred_region
        %s156 = smul.u32 12, %s19
        %p157 = scmp.lt.s32.totalorder %s156, 11
        %s158 = scalar_select %p157, %s156, 11
        %s159 = scalar_lea.vmem %s2, %s158
        %s160 = smul.u32 12, %s19
      $region20: #{self_attention_forward.7} parent=11 // pred_fallthru
        _
    $region12: #{self_attention_forward.7} parent=5 // pred_fallthru
      _
    %p161 = scmp.lt.s32.totalorder %s9, 2
    // Predicated region
    $region21: #{self_attention_forward.7} parent=5 // pred_check
      %p162 = pneg %p161
    $region22: #{self_attention_forward.7} parent=5 // pred_check_branch
      %164 = sbr.rel (%p162) target = $region24
    $region23: #{self_attention_forward.7} parent=5 // pred_region
      // Predicated region
      $region25: #{self_attention_forward.7} parent=23 // pred_check
        %p165 = pneg %p43
      $region26: #{self_attention_forward.7} parent=23 // pred_check_branch
        %167 = sbr.rel (%p165) target = $region28
      $region27: #{self_attention_forward.7} parent=23 // pred_region
        %s168 = smul.u32 12, %s17
        %p169 = scmp.lt.s32.totalorder %s16, 1
        %s170 = scalar_select %p169, %s16, 1
        %p171 = scmp.lt.s32.totalorder %s168, 11
        %s172 = scalar_select %p171, %s168, 11
        %s173 = smul.addr %s172, 3
        %s174 = smul.addr %s170, 36
        %s175 = sadd.s32 %s173, %s174
        %s176 = smul.addr %s175, 8
        %s177 = scalar_lea.vmem %s0, %s176
        %s178 = smul.u32 12, %s17
      $region28: #{self_attention_forward.7} parent=23 // pred_fallthru
        _
    $region24: #{self_attention_forward.7} parent=5 // pred_fallthru
      _
    %p179 = scmp.le.s32.totalorder 1, %s9
    %p180 = scmp.lt.s32.totalorder %s9, 3
    %p181 = pnand %p179, %p180
    %p182 = pneg %p181
    // Predicated region
    $region29: #{self_attention_forward.7} parent=5 // pred_check
      _
    $region30: #{self_attention_forward.7} parent=5 // pred_check_branch
      %184 = sbr.rel (%p181) target = $region32
    $region31: #{self_attention_forward.7} parent=5 // pred_region
      %s185 = ssub.s32 %s9, 1
      %s186 = smul.u32 12, %s19
      %p187 = scmp.lt.s32.totalorder %s18, 1
      %s188 = scalar_select %p187, %s18, 1
      %p189 = scmp.lt.s32.totalorder %s186, 11
      %s190 = scalar_select %p189, %s186, 11
      %s191 = smul.addr %s190, 3
      %s192 = smul.addr %s188, 36
      %s193 = sadd.s32 %s191, %s192
      %s194 = smul.addr %s193, 8
      %s195 = scalar_lea.vmem %s0, %s194
      %p196 = pneg %p49
      %p197 = pneg %p46
      %s198 = smul.u32 12, %s19
      %p199 = scmp.lt.s32.totalorder %s198, 11
      %s200 = scalar_select %p199, %s198, 11
      %s201 = smul.addr %s200, 4
      %s202 = scalar_lea.vmem %s1, %s201
      %p203 = pneg %p75
      %p204 = pneg %p72
      %s205 = smul.u32 12, %s19
      %p206 = scmp.lt.s32.totalorder %s205, 11
      %s207 = scalar_select %p206, %s205, 11
      %s208 = scalar_lea.vmem %s2, %s207
      %p209 = pneg %p101
      %p210 = pneg %p98
      %p211 = pneg %p129
      %p212 = pneg %p126
      %s213 = smul.u32 12, %s19
      %p214 = scmp.lt.s32.totalorder %s18, 1
      %s215 = scalar_select %p214, %s18, 1
      %p216 = scmp.lt.s32.totalorder %s213, 11
      %s217 = scalar_select %p216, %s213, 11
      %s218 = smul.addr %s217, 2
      %s219 = smul.addr %s215, 24
      %s220 = sadd.s32 %s218, %s219
      %s221 = smul.addr %s220, 8
      %s222 = scalar_lea.vmem %s3, %s221
      %s223 = smul.u32 12, %s19
      %p224 = scmp.lt.s32.totalorder %s18, 1
      %s225 = scalar_select %p224, %s18, 1
      %p226 = scmp.lt.s32.totalorder %s223, 11
      %s227 = scalar_select %p226, %s223, 11
      %s228 = smul.addr %s227, 3
      %s229 = smul.addr %s225, 36
      %s230 = sadd.s32 %s228, %s229
      %s231 = smul.addr %s230, 8
      %s232 = scalar_lea.vmem %s0, %s231
      %s233 = smul.u32 12, %s19
      %s234 = smul.u32 12, %s19
      %p235 = scmp.lt.s32.totalorder %s234, 11
      %s236 = scalar_select %p235, %s234, 11
      %s237 = smul.addr %s236, 4
      %s238 = scalar_lea.vmem %s1, %s237
      %s239 = smul.u32 12, %s19
      %s240 = smul.u32 12, %s19
      %p241 = scmp.lt.s32.totalorder %s240, 11
      %s242 = scalar_select %p241, %s240, 11
      %s243 = scalar_lea.vmem %s2, %s242
      %s244 = smul.u32 12, %s19
      %s245 = smul.u32 12, %s19
      %p246 = scmp.lt.s32.totalorder %s18, 1
      %s247 = scalar_select %p246, %s18, 1
      %p248 = scmp.lt.s32.totalorder %s245, 11
      %s249 = scalar_select %p248, %s245, 11
      %s250 = smul.addr %s249, 2
      %s251 = smul.addr %s247, 24
      %s252 = sadd.s32 %s250, %s251
      %s253 = smul.addr %s252, 8
      %s254 = scalar_lea.vmem %s3, %s253
      %s255 = smul.u32 12, %s19
      %v256 = vld [vmem:[%s238] sm:$0x7]
      %v257 = vld [vmem:[%s238 + $0x4] sm:$0x7]
      %v258 = vld [vmem:[%s238 + $0x8] sm:$0x7]
      %v259 = vld [vmem:[%s238 + $0xc] sm:$0x7]
      %v260 = vld [vmem:[%s238 + $0x10] sm:$0x7]
      %v261 = vld [vmem:[%s238 + $0x14] sm:$0x7]
      %v262 = vld [vmem:[%s238 + $0x18] sm:$0x7]
      %v263 = vld [vmem:[%s238 + $0x1c] sm:$0x7]
      %v264 = vld [vmem:[%s238 + $0x20] sm:$0x7]
      %v265 = vld [vmem:[%s238 + $0x24] sm:$0x7]
      %v266 = vld [vmem:[%s238 + $0x28] sm:$0x7]
      %v267 = vld [vmem:[%s238 + $0x2c] sm:$0x7]
      %v268 = vld [vmem:[%s232] sm:$0xff]
      %v269 = vld [vmem:[%s232 + $0x8] sm:$0xff]
      %v270 = vld [vmem:[%s232 + $0x18] sm:$0xff]
      %v271 = vld [vmem:[%s232 + $0x20] sm:$0xff]
      %v272 = vld [vmem:[%s232 + $0x30] sm:$0xff]
      %v273 = vld [vmem:[%s232 + $0x38] sm:$0xff]
      %v274 = vld [vmem:[%s232 + $0x48] sm:$0xff]
      %v275 = vld [vmem:[%s232 + $0x50] sm:$0xff]
      %v276 = vld [vmem:[%s232 + $0x60] sm:$0xff]
      %v277 = vld [vmem:[%s232 + $0x68] sm:$0xff]
      %v278 = vld [vmem:[%s232 + $0x78] sm:$0xff]
      %v279 = vld [vmem:[%s232 + $0x80] sm:$0xff]
      %v280 = vld [vmem:[%s232 + $0x90] sm:$0xff]
      %v281 = vld [vmem:[%s232 + $0x98] sm:$0xff]
      %v282 = vld [vmem:[%s232 + $0xa8] sm:$0xff]
      %v283 = vld [vmem:[%s232 + $0xb0] sm:$0xff]
      %v284 = vld [vmem:[%s232 + $0xc0] sm:$0xff]
      %v285 = vld [vmem:[%s232 + $0xc8] sm:$0xff]
      %v286 = vld [vmem:[%s232 + $0xd8] sm:$0xff]
      %v287 = vld [vmem:[%s232 + $0xe0] sm:$0xff]
      %v288 = vld [vmem:[%s232 + $0xf0] sm:$0xff]
      %v289 = vld [vmem:[%s232 + $0xf8] sm:$0xff]
      %v290 = vld [vmem:[%s232 + $0x108] sm:$0xff]
      %v291 = vld [vmem:[%s232 + $0x110] sm:$0xff]
      %s293 = vtos %v256
      %v294 = vstv %s293
      %s297 = vtos %v257
      %v298 = vstv %s297
      %s301 = vtos %v258
      %v302 = vstv %s301
      %s305 = vtos %v259
      %v306 = vstv %s305
      %s309 = vtos %v260
      %v310 = vstv %s309
      %s313 = vtos %v261
      %v314 = vstv %s313
      %s317 = vtos %v262
      %v318 = vstv %s317
      %s321 = vtos %v263
      %v322 = vstv %s321
      %s325 = vtos %v264
      %v326 = vstv %s325
      %s329 = vtos %v265
      %v330 = vstv %s329
      %s333 = vtos %v266
      %v334 = vstv %s333
      %s337 = vtos %v267
      %v338 = vstv %s337
      %v340 = vmul.f32 %v268, %v294
      %v341 = vmul.f32 %v269, %v294
      %v342 = vmul.f32 %v270, %v298
      %v343 = vmul.f32 %v271, %v298
      %v344 = vmul.f32 %v272, %v302
      %v345 = vmul.f32 %v273, %v302
      %v346 = vmul.f32 %v274, %v306
      %v347 = vmul.f32 %v275, %v306
      %v348 = vmul.f32 %v276, %v310
      %v349 = vmul.f32 %v277, %v310
      %v350 = vmul.f32 %v278, %v314
      %v351 = vmul.f32 %v279, %v314
      %v352 = vmul.f32 %v280, %v318
      %v353 = vmul.f32 %v281, %v318
      %v354 = vmul.f32 %v282, %v322
      %v355 = vmul.f32 %v283, %v322
      %v356 = vmul.f32 %v284, %v326
      %v357 = vmul.f32 %v285, %v326
      %v358 = vmul.f32 %v286, %v330
      %v359 = vmul.f32 %v287, %v330
      %v360 = vmul.f32 %v288, %v334
      %v361 = vmul.f32 %v289, %v334
      %v362 = vmul.f32 %v290, %v338
      %v363 = vmul.f32 %v291, %v338
      %v364 = vadd.f32 %v340, 0.0
      %v365 = vadd.f32 %v341, 0.0
      %v366 = vadd.f32 %v342, 0.0
      %v367 = vadd.f32 %v343, 0.0
      %v368 = vadd.f32 %v344, 0.0
      %v369 = vadd.f32 %v345, 0.0
      %v370 = vadd.f32 %v346, 0.0
      %v371 = vadd.f32 %v347, 0.0
      %v372 = vadd.f32 %v348, 0.0
      %v373 = vadd.f32 %v349, 0.0
      %v374 = vadd.f32 %v350, 0.0
      %v375 = vadd.f32 %v351, 0.0
      %v376 = vadd.f32 %v352, 0.0
      %v377 = vadd.f32 %v353, 0.0
      %v378 = vadd.f32 %v354, 0.0
      %v379 = vadd.f32 %v355, 0.0
      %v380 = vadd.f32 %v356, 0.0
      %v381 = vadd.f32 %v357, 0.0
      %v382 = vadd.f32 %v358, 0.0
      %v383 = vadd.f32 %v359, 0.0
      %v384 = vadd.f32 %v360, 0.0
      %v385 = vadd.f32 %v361, 0.0
      %v386 = vadd.f32 %v362, 0.0
      %v387 = vadd.f32 %v363, 0.0
      %388 = vrot.lane.b32.xlu0 %v256, 127
      %v389 = vpop.permute.xlu0 %388
      %390 = vrot.lane.b32.xlu0 %v257, 127
      %v391 = vpop.permute.xlu0 %390
      %392 = vrot.lane.b32.xlu0 %v258, 127
      %v393 = vpop.permute.xlu0 %392
      %394 = vrot.lane.b32.xlu0 %v259, 127
      %v395 = vpop.permute.xlu0 %394
      %396 = vrot.lane.b32.xlu0 %v260, 127
      %v397 = vpop.permute.xlu0 %396
      %398 = vrot.lane.b32.xlu0 %v261, 127
      %v399 = vpop.permute.xlu0 %398
      %400 = vrot.lane.b32.xlu0 %v262, 127
      %v401 = vpop.permute.xlu0 %400
      %402 = vrot.lane.b32.xlu0 %v263, 127
      %v403 = vpop.permute.xlu0 %402
      %404 = vrot.lane.b32.xlu0 %v264, 127
      %v405 = vpop.permute.xlu0 %404
      %406 = vrot.lane.b32.xlu0 %v265, 127
      %v407 = vpop.permute.xlu0 %406
      %408 = vrot.lane.b32.xlu0 %v266, 127
      %v409 = vpop.permute.xlu0 %408
      %410 = vrot.lane.b32.xlu0 %v267, 127
      %v411 = vpop.permute.xlu0 %410
      %s412 = vtos %v389
      %v413 = vstv %s412
      %s415 = vtos %v391
      %v416 = vstv %s415
      %s418 = vtos %v393
      %v419 = vstv %s418
      %s421 = vtos %v395
      %v422 = vstv %s421
      %s424 = vtos %v397
      %v425 = vstv %s424
      %s427 = vtos %v399
      %v428 = vstv %s427
      %s430 = vtos %v401
      %v431 = vstv %s430
      %s433 = vtos %v403
      %v434 = vstv %s433
      %s436 = vtos %v405
      %v437 = vstv %s436
      %s439 = vtos %v407
      %v440 = vstv %s439
      %s442 = vtos %v409
      %v443 = vstv %s442
      %s445 = vtos %v411
      %v446 = vstv %s445
      %v448 = vmul.f32 %v268, %v413
      %v449 = vmul.f32 %v269, %v413
      %v450 = vmul.f32 %v270, %v416
      %v451 = vmul.f32 %v271, %v416
      %v452 = vmul.f32 %v272, %v419
      %v453 = vmul.f32 %v273, %v419
      %v454 = vmul.f32 %v274, %v422
      %v455 = vmul.f32 %v275, %v422
      %v456 = vmul.f32 %v276, %v425
      %v457 = vmul.f32 %v277, %v425
      %v458 = vmul.f32 %v278, %v428
      %v459 = vmul.f32 %v279, %v428
      %v460 = vmul.f32 %v280, %v431
      %v461 = vmul.f32 %v281, %v431
      %v462 = vmul.f32 %v282, %v434
      %v463 = vmul.f32 %v283, %v434
      %v464 = vmul.f32 %v284, %v437
      %v465 = vmul.f32 %v285, %v437
      %v466 = vmul.f32 %v286, %v440
      %v467 = vmul.f32 %v287, %v440
      %v468 = vmul.f32 %v288, %v443
      %v469 = vmul.f32 %v289, %v443
      %v470 = vmul.f32 %v290, %v446
      %v471 = vmul.f32 %v291, %v446
      %496 = vrot.lane.b32.xlu0 %v448, 127
      %v497 = vpop.permute.xlu0 %496
      %498 = vrot.lane.b32.xlu0 %v449, 127
      %v499 = vpop.permute.xlu0 %498
      %500 = vrot.lane.b32.xlu0 %v450, 127
      %v501 = vpop.permute.xlu0 %500
      %502 = vrot.lane.b32.xlu0 %v451, 127
      %v503 = vpop.permute.xlu0 %502
      %504 = vrot.lane.b32.xlu0 %v452, 127
      %v505 = vpop.permute.xlu0 %504
      %506 = vrot.lane.b32.xlu0 %v453, 127
      %v507 = vpop.permute.xlu0 %506
      %508 = vrot.lane.b32.xlu0 %v454, 127
      %v509 = vpop.permute.xlu0 %508
      %510 = vrot.lane.b32.xlu0 %v455, 127
      %v511 = vpop.permute.xlu0 %510
      %512 = vrot.lane.b32.xlu0 %v456, 127
      %v513 = vpop.permute.xlu0 %512
      %514 = vrot.lane.b32.xlu0 %v457, 127
      %v515 = vpop.permute.xlu0 %514
      %516 = vrot.lane.b32.xlu0 %v458, 127
      %v517 = vpop.permute.xlu0 %516
      %518 = vrot.lane.b32.xlu0 %v459, 127
      %v519 = vpop.permute.xlu0 %518
      %520 = vrot.lane.b32.xlu0 %v460, 127
      %v521 = vpop.permute.xlu0 %520
      %522 = vrot.lane.b32.xlu0 %v461, 127
      %v523 = vpop.permute.xlu0 %522
      %524 = vrot.lane.b32.xlu0 %v462, 127
      %v525 = vpop.permute.xlu0 %524
      %526 = vrot.lane.b32.xlu0 %v463, 127
      %v527 = vpop.permute.xlu0 %526
      %528 = vrot.lane.b32.xlu0 %v464, 127
      %v529 = vpop.permute.xlu0 %528
      %530 = vrot.lane.b32.xlu0 %v465, 127
      %v531 = vpop.permute.xlu0 %530
      %532 = vrot.lane.b32.xlu0 %v466, 127
      %v533 = vpop.permute.xlu0 %532
      %534 = vrot.lane.b32.xlu0 %v467, 127
      %v535 = vpop.permute.xlu0 %534
      %536 = vrot.lane.b32.xlu0 %v468, 127
      %v537 = vpop.permute.xlu0 %536
      %538 = vrot.lane.b32.xlu0 %v469, 127
      %v539 = vpop.permute.xlu0 %538
      %540 = vrot.lane.b32.xlu0 %v470, 127
      %v541 = vpop.permute.xlu0 %540
      %542 = vrot.lane.b32.xlu0 %v471, 127
      %v543 = vpop.permute.xlu0 %542
      %v568 = vadd.f32 %v364, %v497
      %v569 = vadd.f32 %v365, %v499
      %v570 = vadd.f32 %v366, %v501
      %v571 = vadd.f32 %v367, %v503
      %v572 = vadd.f32 %v368, %v505
      %v573 = vadd.f32 %v369, %v507
      %v574 = vadd.f32 %v370, %v509
      %v575 = vadd.f32 %v371, %v511
      %v576 = vadd.f32 %v372, %v513
      %v577 = vadd.f32 %v373, %v515
      %v578 = vadd.f32 %v374, %v517
      %v579 = vadd.f32 %v375, %v519
      %v580 = vadd.f32 %v376, %v521
      %v581 = vadd.f32 %v377, %v523
      %v582 = vadd.f32 %v378, %v525
      %v583 = vadd.f32 %v379, %v527
      %v584 = vadd.f32 %v380, %v529
      %v585 = vadd.f32 %v381, %v531
      %v586 = vadd.f32 %v382, %v533
      %v587 = vadd.f32 %v383, %v535
      %v588 = vadd.f32 %v384, %v537
      %v589 = vadd.f32 %v385, %v539
      %v590 = vadd.f32 %v386, %v541
      %v591 = vadd.f32 %v387, %v543
      %592 = vrot.lane.b32.xlu0 %v256, 126
      %v593 = vpop.permute.xlu0 %592
      %594 = vrot.lane.b32.xlu0 %v257, 126
      %v595 = vpop.permute.xlu0 %594
      %596 = vrot.lane.b32.xlu0 %v258, 126
      %v597 = vpop.permute.xlu0 %596
      %598 = vrot.lane.b32.xlu0 %v259, 126
      %v599 = vpop.permute.xlu0 %598
      %600 = vrot.lane.b32.xlu0 %v260, 126
      %v601 = vpop.permute.xlu0 %600
      %602 = vrot.lane.b32.xlu0 %v261, 126
      %v603 = vpop.permute.xlu0 %602
      %604 = vrot.lane.b32.xlu0 %v262, 126
      %v605 = vpop.permute.xlu0 %604
      %606 = vrot.lane.b32.xlu0 %v263, 126
      %v607 = vpop.permute.xlu0 %606
      %608 = vrot.lane.b32.xlu0 %v264, 126
      %v609 = vpop.permute.xlu0 %608
      %610 = vrot.lane.b32.xlu0 %v265, 126
      %v611 = vpop.permute.xlu0 %610
      %612 = vrot.lane.b32.xlu0 %v266, 126
      %v613 = vpop.permute.xlu0 %612
      %614 = vrot.lane.b32.xlu0 %v267, 126
      %v615 = vpop.permute.xlu0 %614
      %s616 = vtos %v593
      %v617 = vstv %s616
      %s619 = vtos %v595
      %v620 = vstv %s619
      %s622 = vtos %v597
      %v623 = vstv %s622
      %s625 = vtos %v599
      %v626 = vstv %s625
      %s628 = vtos %v601
      %v629 = vstv %s628
      %s631 = vtos %v603
      %v632 = vstv %s631
      %s634 = vtos %v605
      %v635 = vstv %s634
      %s637 = vtos %v607
      %v638 = vstv %s637
      %s640 = vtos %v609
      %v641 = vstv %s640
      %s643 = vtos %v611
      %v644 = vstv %s643
      %s646 = vtos %v613
      %v647 = vstv %s646
      %s649 = vtos %v615
      %v650 = vstv %s649
      %v652 = vmul.f32 %v268, %v617
      %v653 = vmul.f32 %v269, %v617
      %v654 = vmul.f32 %v270, %v620
      %v655 = vmul.f32 %v271, %v620
      %v656 = vmul.f32 %v272, %v623
      %v657 = vmul.f32 %v273, %v623
      %v658 = vmul.f32 %v274, %v626
      %v659 = vmul.f32 %v275, %v626
      %v660 = vmul.f32 %v276, %v629
      %v661 = vmul.f32 %v277, %v629
      %v662 = vmul.f32 %v278, %v632
      %v663 = vmul.f32 %v279, %v632
      %v664 = vmul.f32 %v280, %v635
      %v665 = vmul.f32 %v281, %v635
      %v666 = vmul.f32 %v282, %v638
      %v667 = vmul.f32 %v283, %v638
      %v668 = vmul.f32 %v284, %v641
      %v669 = vmul.f32 %v285, %v641
      %v670 = vmul.f32 %v286, %v644
      %v671 = vmul.f32 %v287, %v644
      %v672 = vmul.f32 %v288, %v647
      %v673 = vmul.f32 %v289, %v647
      %v674 = vmul.f32 %v290, %v650
      %v675 = vmul.f32 %v291, %v650
      %700 = vrot.lane.b32.xlu0 %v652, 126
      %v701 = vpop.permute.xlu0 %700
      %702 = vrot.lane.b32.xlu0 %v653, 126
      %v703 = vpop.permute.xlu0 %702
      %704 = vrot.lane.b32.xlu0 %v654, 126
      %v705 = vpop.permute.xlu0 %704
      %706 = vrot.lane.b32.xlu0 %v655, 126
      %v707 = vpop.permute.xlu0 %706
      %708 = vrot.lane.b32.xlu0 %v656, 126
      %v709 = vpop.permute.xlu0 %708
      %710 = vrot.lane.b32.xlu0 %v657, 126
      %v711 = vpop.permute.xlu0 %710
      %712 = vrot.lane.b32.xlu0 %v658, 126
      %v713 = vpop.permute.xlu0 %712
      %714 = vrot.lane.b32.xlu0 %v659, 126
      %v715 = vpop.permute.xlu0 %714
      %716 = vrot.lane.b32.xlu0 %v660, 126
      %v717 = vpop.permute.xlu0 %716
      %718 = vrot.lane.b32.xlu0 %v661, 126
      %v719 = vpop.permute.xlu0 %718
      %720 = vrot.lane.b32.xlu0 %v662, 126
      %v721 = vpop.permute.xlu0 %720
      %722 = vrot.lane.b32.xlu0 %v663, 126
      %v723 = vpop.permute.xlu0 %722
      %724 = vrot.lane.b32.xlu0 %v664, 126
      %v725 = vpop.permute.xlu0 %724
      %726 = vrot.lane.b32.xlu0 %v665, 126
      %v727 = vpop.permute.xlu0 %726
      %728 = vrot.lane.b32.xlu0 %v666, 126
      %v729 = vpop.permute.xlu0 %728
      %730 = vrot.lane.b32.xlu0 %v667, 126
      %v731 = vpop.permute.xlu0 %730
      %732 = vrot.lane.b32.xlu0 %v668, 126
      %v733 = vpop.permute.xlu0 %732
      %734 = vrot.lane.b32.xlu0 %v669, 126
      %v735 = vpop.permute.xlu0 %734
      %736 = vrot.lane.b32.xlu0 %v670, 126
      %v737 = vpop.permute.xlu0 %736
      %738 = vrot.lane.b32.xlu0 %v671, 126
      %v739 = vpop.permute.xlu0 %738
      %740 = vrot.lane.b32.xlu0 %v672, 126
      %v741 = vpop.permute.xlu0 %740
      %742 = vrot.lane.b32.xlu0 %v673, 126
      %v743 = vpop.permute.xlu0 %742
      %744 = vrot.lane.b32.xlu0 %v674, 126
      %v745 = vpop.permute.xlu0 %744
      %746 = vrot.lane.b32.xlu0 %v675, 126
      %v747 = vpop.permute.xlu0 %746
      %v772 = vadd.f32 %v568, %v701
      %v773 = vadd.f32 %v569, %v703
      %v774 = vadd.f32 %v570, %v705
      %v775 = vadd.f32 %v571, %v707
      %v776 = vadd.f32 %v572, %v709
      %v777 = vadd.f32 %v573, %v711
      %v778 = vadd.f32 %v574, %v713
      %v779 = vadd.f32 %v575, %v715
      %v780 = vadd.f32 %v576, %v717
      %v781 = vadd.f32 %v577, %v719
      %v782 = vadd.f32 %v578, %v721
      %v783 = vadd.f32 %v579, %v723
      %v784 = vadd.f32 %v580, %v725
      %v785 = vadd.f32 %v581, %v727
      %v786 = vadd.f32 %v582, %v729
      %v787 = vadd.f32 %v583, %v731
      %v788 = vadd.f32 %v584, %v733
      %v789 = vadd.f32 %v585, %v735
      %v790 = vadd.f32 %v586, %v737
      %v791 = vadd.f32 %v587, %v739
      %v792 = vadd.f32 %v588, %v741
      %v793 = vadd.f32 %v589, %v743
      %v794 = vadd.f32 %v590, %v745
      %v795 = vadd.f32 %v591, %v747
      %v796 = vld [vmem:[%s232 + $0x1] sm:$0xff]
      %v797 = vld [vmem:[%s232 + $0x9] sm:$0xff]
      %v798 = vld [vmem:[%s232 + $0x19] sm:$0xff]
      %v799 = vld [vmem:[%s232 + $0x21] sm:$0xff]
      %v800 = vld [vmem:[%s232 + $0x31] sm:$0xff]
      %v801 = vld [vmem:[%s232 + $0x39] sm:$0xff]
      %v802 = vld [vmem:[%s232 + $0x49] sm:$0xff]
      %v803 = vld [vmem:[%s232 + $0x51] sm:$0xff]
      %v804 = vld [vmem:[%s232 + $0x61] sm:$0xff]
      %v805 = vld [vmem:[%s232 + $0x69] sm:$0xff]
      %v806 = vld [vmem:[%s232 + $0x79] sm:$0xff]
      %v807 = vld [vmem:[%s232 + $0x81] sm:$0xff]
      %v808 = vld [vmem:[%s232 + $0x91] sm:$0xff]
      %v809 = vld [vmem:[%s232 + $0x99] sm:$0xff]
      %v810 = vld [vmem:[%s232 + $0xa9] sm:$0xff]
      %v811 = vld [vmem:[%s232 + $0xb1] sm:$0xff]
      %v812 = vld [vmem:[%s232 + $0xc1] sm:$0xff]
      %v813 = vld [vmem:[%s232 + $0xc9] sm:$0xff]
      %v814 = vld [vmem:[%s232 + $0xd9] sm:$0xff]
      %v815 = vld [vmem:[%s232 + $0xe1] sm:$0xff]
      %v816 = vld [vmem:[%s232 + $0xf1] sm:$0xff]
      %v817 = vld [vmem:[%s232 + $0xf9] sm:$0xff]
      %v818 = vld [vmem:[%s232 + $0x109] sm:$0xff]
      %v819 = vld [vmem:[%s232 + $0x111] sm:$0xff]
      %v820 = vrot.slane %v256, 1
      %v821 = vrot.slane %v257, 1
      %v822 = vrot.slane %v258, 1
      %v823 = vrot.slane %v259, 1
      %v824 = vrot.slane %v260, 1
      %v825 = vrot.slane %v261, 1
      %v826 = vrot.slane %v262, 1
      %v827 = vrot.slane %v263, 1
      %v828 = vrot.slane %v264, 1
      %v829 = vrot.slane %v265, 1
      %v830 = vrot.slane %v266, 1
      %v831 = vrot.slane %v267, 1
      %s832 = vtos %v820
      %v833 = vstv %s832
      %s835 = vtos %v821
      %v836 = vstv %s835
      %s838 = vtos %v822
      %v839 = vstv %s838
      %s841 = vtos %v823
      %v842 = vstv %s841
      %s844 = vtos %v824
      %v845 = vstv %s844
      %s847 = vtos %v825
      %v848 = vstv %s847
      %s850 = vtos %v826
      %v851 = vstv %s850
      %s853 = vtos %v827
      %v854 = vstv %s853
      %s856 = vtos %v828
      %v857 = vstv %s856
      %s859 = vtos %v829
      %v860 = vstv %s859
      %s862 = vtos %v830
      %v863 = vstv %s862
      %s865 = vtos %v831
      %v866 = vstv %s865
      %v868 = vmul.f32 %v796, %v833
      %v869 = vmul.f32 %v797, %v833
      %v870 = vmul.f32 %v798, %v836
      %v871 = vmul.f32 %v799, %v836
      %v872 = vmul.f32 %v800, %v839
      %v873 = vmul.f32 %v801, %v839
      %v874 = vmul.f32 %v802, %v842
      %v875 = vmul.f32 %v803, %v842
      %v876 = vmul.f32 %v804, %v845
      %v877 = vmul.f32 %v805, %v845
      %v878 = vmul.f32 %v806, %v848
      %v879 = vmul.f32 %v807, %v848
      %v880 = vmul.f32 %v808, %v851
      %v881 = vmul.f32 %v809, %v851
      %v882 = vmul.f32 %v810, %v854
      %v883 = vmul.f32 %v811, %v854
      %v884 = vmul.f32 %v812, %v857
      %v885 = vmul.f32 %v813, %v857
      %v886 = vmul.f32 %v814, %v860
      %v887 = vmul.f32 %v815, %v860
      %v888 = vmul.f32 %v816, %v863
      %v889 = vmul.f32 %v817, %v863
      %v890 = vmul.f32 %v818, %v866
      %v891 = vmul.f32 %v819, %v866
      %v892 = vadd.f32 %v772, %v868
      %v893 = vadd.f32 %v773, %v869
      %v894 = vadd.f32 %v774, %v870
      %v895 = vadd.f32 %v775, %v871
      %v896 = vadd.f32 %v776, %v872
      %v897 = vadd.f32 %v777, %v873
      %v898 = vadd.f32 %v778, %v874
      %v899 = vadd.f32 %v779, %v875
      %v900 = vadd.f32 %v780, %v876
      %v901 = vadd.f32 %v781, %v877
      %v902 = vadd.f32 %v782, %v878
      %v903 = vadd.f32 %v783, %v879
      %v904 = vadd.f32 %v784, %v880
      %v905 = vadd.f32 %v785, %v881
      %v906 = vadd.f32 %v786, %v882
      %v907 = vadd.f32 %v787, %v883
      %v908 = vadd.f32 %v788, %v884
      %v909 = vadd.f32 %v789, %v885
      %v910 = vadd.f32 %v790, %v886
      %v911 = vadd.f32 %v791, %v887
      %v912 = vadd.f32 %v792, %v888
      %v913 = vadd.f32 %v793, %v889
      %v914 = vadd.f32 %v794, %v890
      %v915 = vadd.f32 %v795, %v891
      %916 = vrot.lane.b32.xlu0 %v820, 127
      %v917 = vpop.permute.xlu0 %916
      %918 = vrot.lane.b32.xlu0 %v821, 127
      %v919 = vpop.permute.xlu0 %918
      %920 = vrot.lane.b32.xlu0 %v822, 127
      %v921 = vpop.permute.xlu0 %920
      %922 = vrot.lane.b32.xlu0 %v823, 127
      %v923 = vpop.permute.xlu0 %922
      %924 = vrot.lane.b32.xlu0 %v824, 127
      %v925 = vpop.permute.xlu0 %924
      %926 = vrot.lane.b32.xlu0 %v825, 127
      %v927 = vpop.permute.xlu0 %926
      %928 = vrot.lane.b32.xlu0 %v826, 127
      %v929 = vpop.permute.xlu0 %928
      %930 = vrot.lane.b32.xlu0 %v827, 127
      %v931 = vpop.permute.xlu0 %930
      %932 = vrot.lane.b32.xlu0 %v828, 127
      %v933 = vpop.permute.xlu0 %932
      %934 = vrot.lane.b32.xlu0 %v829, 127
      %v935 = vpop.permute.xlu0 %934
      %936 = vrot.lane.b32.xlu0 %v830, 127
      %v937 = vpop.permute.xlu0 %936
      %938 = vrot.lane.b32.xlu0 %v831, 127
      %v939 = vpop.permute.xlu0 %938
      %s940 = vtos %v917
      %v941 = vstv %s940
      %s943 = vtos %v919
      %v944 = vstv %s943
      %s946 = vtos %v921
      %v947 = vstv %s946
      %s949 = vtos %v923
      %v950 = vstv %s949
      %s952 = vtos %v925
      %v953 = vstv %s952
      %s955 = vtos %v927
      %v956 = vstv %s955
      %s958 = vtos %v929
      %v959 = vstv %s958
      %s961 = vtos %v931
      %v962 = vstv %s961
      %s964 = vtos %v933
      %v965 = vstv %s964
      %s967 = vtos %v935
      %v968 = vstv %s967
      %s970 = vtos %v937
      %v971 = vstv %s970
      %s973 = vtos %v939
      %v974 = vstv %s973
      %v976 = vmul.f32 %v796, %v941
      %v977 = vmul.f32 %v797, %v941
      %v978 = vmul.f32 %v798, %v944
      %v979 = vmul.f32 %v799, %v944
      %v980 = vmul.f32 %v800, %v947
      %v981 = vmul.f32 %v801, %v947
      %v982 = vmul.f32 %v802, %v950
      %v983 = vmul.f32 %v803, %v950
      %v984 = vmul.f32 %v804, %v953
      %v985 = vmul.f32 %v805, %v953
      %v986 = vmul.f32 %v806, %v956
      %v987 = vmul.f32 %v807, %v956
      %v988 = vmul.f32 %v808, %v959
      %v989 = vmul.f32 %v809, %v959
      %v990 = vmul.f32 %v810, %v962
      %v991 = vmul.f32 %v811, %v962
      %v992 = vmul.f32 %v812, %v965
      %v993 = vmul.f32 %v813, %v965
      %v994 = vmul.f32 %v814, %v968
      %v995 = vmul.f32 %v815, %v968
      %v996 = vmul.f32 %v816, %v971
      %v997 = vmul.f32 %v817, %v971
      %v998 = vmul.f32 %v818, %v974
      %v999 = vmul.f32 %v819, %v974
      %1024 = vrot.lane.b32.xlu0 %v976, 127
      %v1025 = vpop.permute.xlu0 %1024
      %1026 = vrot.lane.b32.xlu0 %v977, 127
      %v1027 = vpop.permute.xlu0 %1026
      %1028 = vrot.lane.b32.xlu0 %v978, 127
      %v1029 = vpop.permute.xlu0 %1028
      %1030 = vrot.lane.b32.xlu0 %v979, 127
      %v1031 = vpop.permute.xlu0 %1030
      %1032 = vrot.lane.b32.xlu0 %v980, 127
      %v1033 = vpop.permute.xlu0 %1032
      %1034 = vrot.lane.b32.xlu0 %v981, 127
      %v1035 = vpop.permute.xlu0 %1034
      %1036 = vrot.lane.b32.xlu0 %v982, 127
      %v1037 = vpop.permute.xlu0 %1036
      %1038 = vrot.lane.b32.xlu0 %v983, 127
      %v1039 = vpop.permute.xlu0 %1038
      %1040 = vrot.lane.b32.xlu0 %v984, 127
      %v1041 = vpop.permute.xlu0 %1040
      %1042 = vrot.lane.b32.xlu0 %v985, 127
      %v1043 = vpop.permute.xlu0 %1042
      %1044 = vrot.lane.b32.xlu0 %v986, 127
      %v1045 = vpop.permute.xlu0 %1044
      %1046 = vrot.lane.b32.xlu0 %v987, 127
      %v1047 = vpop.permute.xlu0 %1046
      %1048 = vrot.lane.b32.xlu0 %v988, 127
      %v1049 = vpop.permute.xlu0 %1048
      %1050 = vrot.lane.b32.xlu0 %v989, 127
      %v1051 = vpop.permute.xlu0 %1050
      %1052 = vrot.lane.b32.xlu0 %v990, 127
      %v1053 = vpop.permute.xlu0 %1052
      %1054 = vrot.lane.b32.xlu0 %v991, 127
      %v1055 = vpop.permute.xlu0 %1054
      %1056 = vrot.lane.b32.xlu0 %v992, 127
      %v1057 = vpop.permute.xlu0 %1056
      %1058 = vrot.lane.b32.xlu0 %v993, 127
      %v1059 = vpop.permute.xlu0 %1058
      %1060 = vrot.lane.b32.xlu0 %v994, 127
      %v1061 = vpop.permute.xlu0 %1060
      %1062 = vrot.lane.b32.xlu0 %v995, 127
      %v1063 = vpop.permute.xlu0 %1062
      %1064 = vrot.lane.b32.xlu0 %v996, 127
      %v1065 = vpop.permute.xlu0 %1064
      %1066 = vrot.lane.b32.xlu0 %v997, 127
      %v1067 = vpop.permute.xlu0 %1066
      %1068 = vrot.lane.b32.xlu0 %v998, 127
      %v1069 = vpop.permute.xlu0 %1068
      %1070 = vrot.lane.b32.xlu0 %v999, 127
      %v1071 = vpop.permute.xlu0 %1070
      %v1096 = vadd.f32 %v892, %v1025
      %v1097 = vadd.f32 %v893, %v1027
      %v1098 = vadd.f32 %v894, %v1029
      %v1099 = vadd.f32 %v895, %v1031
      %v1100 = vadd.f32 %v896, %v1033
      %v1101 = vadd.f32 %v897, %v1035
      %v1102 = vadd.f32 %v898, %v1037
      %v1103 = vadd.f32 %v899, %v1039
      %v1104 = vadd.f32 %v900, %v1041
      %v1105 = vadd.f32 %v901, %v1043
      %v1106 = vadd.f32 %v902, %v1045
      %v1107 = vadd.f32 %v903, %v1047
      %v1108 = vadd.f32 %v904, %v1049
      %v1109 = vadd.f32 %v905, %v1051
      %v1110 = vadd.f32 %v906, %v1053
      %v1111 = vadd.f32 %v907, %v1055
      %v1112 = vadd.f32 %v908, %v1057
      %v1113 = vadd.f32 %v909, %v1059
      %v1114 = vadd.f32 %v910, %v1061
      %v1115 = vadd.f32 %v911, %v1063
      %v1116 = vadd.f32 %v912, %v1065
      %v1117 = vadd.f32 %v913, %v1067
      %v1118 = vadd.f32 %v914, %v1069
      %v1119 = vadd.f32 %v915, %v1071
      %1120 = vrot.lane.b32.xlu0 %v820, 126
      %v1121 = vpop.permute.xlu0 %1120
      %1122 = vrot.lane.b32.xlu0 %v821, 126
      %v1123 = vpop.permute.xlu0 %1122
      %1124 = vrot.lane.b32.xlu0 %v822, 126
      %v1125 = vpop.permute.xlu0 %1124
      %1126 = vrot.lane.b32.xlu0 %v823, 126
      %v1127 = vpop.permute.xlu0 %1126
      %1128 = vrot.lane.b32.xlu0 %v824, 126
      %v1129 = vpop.permute.xlu0 %1128
      %1130 = vrot.lane.b32.xlu0 %v825, 126
      %v1131 = vpop.permute.xlu0 %1130
      %1132 = vrot.lane.b32.xlu0 %v826, 126
      %v1133 = vpop.permute.xlu0 %1132
      %1134 = vrot.lane.b32.xlu0 %v827, 126
      %v1135 = vpop.permute.xlu0 %1134
      %1136 = vrot.lane.b32.xlu0 %v828, 126
      %v1137 = vpop.permute.xlu0 %1136
      %1138 = vrot.lane.b32.xlu0 %v829, 126
      %v1139 = vpop.permute.xlu0 %1138
      %1140 = vrot.lane.b32.xlu0 %v830, 126
      %v1141 = vpop.permute.xlu0 %1140
      %1142 = vrot.lane.b32.xlu0 %v831, 126
      %v1143 = vpop.permute.xlu0 %1142
      %s1144 = vtos %v1121
      %v1145 = vstv %s1144
      %s1147 = vtos %v1123
      %v1148 = vstv %s1147
      %s1150 = vtos %v1125
      %v1151 = vstv %s1150
      %s1153 = vtos %v1127
      %v1154 = vstv %s1153
      %s1156 = vtos %v1129
      %v1157 = vstv %s1156
      %s1159 = vtos %v1131
      %v1160 = vstv %s1159
      %s1162 = vtos %v1133
      %v1163 = vstv %s1162
      %s1165 = vtos %v1135
      %v1166 = vstv %s1165
      %s1168 = vtos %v1137
      %v1169 = vstv %s1168
      %s1171 = vtos %v1139
      %v1172 = vstv %s1171
      %s1174 = vtos %v1141
      %v1175 = vstv %s1174
      %s1177 = vtos %v1143
      %v1178 = vstv %s1177
      %v1180 = vmul.f32 %v796, %v1145
      %v1181 = vmul.f32 %v797, %v1145
      %v1182 = vmul.f32 %v798, %v1148
      %v1183 = vmul.f32 %v799, %v1148
      %v1184 = vmul.f32 %v800, %v1151
      %v1185 = vmul.f32 %v801, %v1151
      %v1186 = vmul.f32 %v802, %v1154
      %v1187 = vmul.f32 %v803, %v1154
      %v1188 = vmul.f32 %v804, %v1157
      %v1189 = vmul.f32 %v805, %v1157
      %v1190 = vmul.f32 %v806, %v1160
      %v1191 = vmul.f32 %v807, %v1160
      %v1192 = vmul.f32 %v808, %v1163
      %v1193 = vmul.f32 %v809, %v1163
      %v1194 = vmul.f32 %v810, %v1166
      %v1195 = vmul.f32 %v811, %v1166
      %v1196 = vmul.f32 %v812, %v1169
      %v1197 = vmul.f32 %v813, %v1169
      %v1198 = vmul.f32 %v814, %v1172
      %v1199 = vmul.f32 %v815, %v1172
      %v1200 = vmul.f32 %v816, %v1175
      %v1201 = vmul.f32 %v817, %v1175
      %v1202 = vmul.f32 %v818, %v1178
      %v1203 = vmul.f32 %v819, %v1178
      %1228 = vrot.lane.b32.xlu0 %v1180, 126
      %v1229 = vpop.permute.xlu0 %1228
      %1230 = vrot.lane.b32.xlu0 %v1181, 126
      %v1231 = vpop.permute.xlu0 %1230
      %1232 = vrot.lane.b32.xlu0 %v1182, 126
      %v1233 = vpop.permute.xlu0 %1232
      %1234 = vrot.lane.b32.xlu0 %v1183, 126
      %v1235 = vpop.permute.xlu0 %1234
      %1236 = vrot.lane.b32.xlu0 %v1184, 126
      %v1237 = vpop.permute.xlu0 %1236
      %1238 = vrot.lane.b32.xlu0 %v1185, 126
      %v1239 = vpop.permute.xlu0 %1238
      %1240 = vrot.lane.b32.xlu0 %v1186, 126
      %v1241 = vpop.permute.xlu0 %1240
      %1242 = vrot.lane.b32.xlu0 %v1187, 126
      %v1243 = vpop.permute.xlu0 %1242
      %1244 = vrot.lane.b32.xlu0 %v1188, 126
      %v1245 = vpop.permute.xlu0 %1244
      %1246 = vrot.lane.b32.xlu0 %v1189, 126
      %v1247 = vpop.permute.xlu0 %1246
      %1248 = vrot.lane.b32.xlu0 %v1190, 126
      %v1249 = vpop.permute.xlu0 %1248
      %1250 = vrot.lane.b32.xlu0 %v1191, 126
      %v1251 = vpop.permute.xlu0 %1250
      %1252 = vrot.lane.b32.xlu0 %v1192, 126
      %v1253 = vpop.permute.xlu0 %1252
      %1254 = vrot.lane.b32.xlu0 %v1193, 126
      %v1255 = vpop.permute.xlu0 %1254
      %1256 = vrot.lane.b32.xlu0 %v1194, 126
      %v1257 = vpop.permute.xlu0 %1256
      %1258 = vrot.lane.b32.xlu0 %v1195, 126
      %v1259 = vpop.permute.xlu0 %1258
      %1260 = vrot.lane.b32.xlu0 %v1196, 126
      %v1261 = vpop.permute.xlu0 %1260
      %1262 = vrot.lane.b32.xlu0 %v1197, 126
      %v1263 = vpop.permute.xlu0 %1262
      %1264 = vrot.lane.b32.xlu0 %v1198, 126
      %v1265 = vpop.permute.xlu0 %1264
      %1266 = vrot.lane.b32.xlu0 %v1199, 126
      %v1267 = vpop.permute.xlu0 %1266
      %1268 = vrot.lane.b32.xlu0 %v1200, 126
      %v1269 = vpop.permute.xlu0 %1268
      %1270 = vrot.lane.b32.xlu0 %v1201, 126
      %v1271 = vpop.permute.xlu0 %1270
      %1272 = vrot.lane.b32.xlu0 %v1202, 126
      %v1273 = vpop.permute.xlu0 %1272
      %1274 = vrot.lane.b32.xlu0 %v1203, 126
      %v1275 = vpop.permute.xlu0 %1274
      %v1300 = vadd.f32 %v1096, %v1229
      %v1301 = vadd.f32 %v1097, %v1231
      %v1302 = vadd.f32 %v1098, %v1233
      %v1303 = vadd.f32 %v1099, %v1235
      %v1304 = vadd.f32 %v1100, %v1237
      %v1305 = vadd.f32 %v1101, %v1239
      %v1306 = vadd.f32 %v1102, %v1241
      %v1307 = vadd.f32 %v1103, %v1243
      %v1308 = vadd.f32 %v1104, %v1245
      %v1309 = vadd.f32 %v1105, %v1247
      %v1310 = vadd.f32 %v1106, %v1249
      %v1311 = vadd.f32 %v1107, %v1251
      %v1312 = vadd.f32 %v1108, %v1253
      %v1313 = vadd.f32 %v1109, %v1255
      %v1314 = vadd.f32 %v1110, %v1257
      %v1315 = vadd.f32 %v1111, %v1259
      %v1316 = vadd.f32 %v1112, %v1261
      %v1317 = vadd.f32 %v1113, %v1263
      %v1318 = vadd.f32 %v1114, %v1265
      %v1319 = vadd.f32 %v1115, %v1267
      %v1320 = vadd.f32 %v1116, %v1269
      %v1321 = vadd.f32 %v1117, %v1271
      %v1322 = vadd.f32 %v1118, %v1273
      %v1323 = vadd.f32 %v1119, %v1275
      %v1324 = vld [vmem:[%s232 + $0x2] sm:$0xff]
      %v1325 = vld [vmem:[%s232 + $0xa] sm:$0xff]
      %v1326 = vld [vmem:[%s232 + $0x1a] sm:$0xff]
      %v1327 = vld [vmem:[%s232 + $0x22] sm:$0xff]
      %v1328 = vld [vmem:[%s232 + $0x32] sm:$0xff]
      %v1329 = vld [vmem:[%s232 + $0x3a] sm:$0xff]
      %v1330 = vld [vmem:[%s232 + $0x4a] sm:$0xff]
      %v1331 = vld [vmem:[%s232 + $0x52] sm:$0xff]
      %v1332 = vld [vmem:[%s232 + $0x62] sm:$0xff]
      %v1333 = vld [vmem:[%s232 + $0x6a] sm:$0xff]
      %v1334 = vld [vmem:[%s232 + $0x7a] sm:$0xff]
      %v1335 = vld [vmem:[%s232 + $0x82] sm:$0xff]
      %v1336 = vld [vmem:[%s232 + $0x92] sm:$0xff]
      %v1337 = vld [vmem:[%s232 + $0x9a] sm:$0xff]
      %v1338 = vld [vmem:[%s232 + $0xaa] sm:$0xff]
      %v1339 = vld [vmem:[%s232 + $0xb2] sm:$0xff]
      %v1340 = vld [vmem:[%s232 + $0xc2] sm:$0xff]
      %v1341 = vld [vmem:[%s232 + $0xca] sm:$0xff]
      %v1342 = vld [vmem:[%s232 + $0xda] sm:$0xff]
      %v1343 = vld [vmem:[%s232 + $0xe2] sm:$0xff]
      %v1344 = vld [vmem:[%s232 + $0xf2] sm:$0xff]
      %v1345 = vld [vmem:[%s232 + $0xfa] sm:$0xff]
      %v1346 = vld [vmem:[%s232 + $0x10a] sm:$0xff]
      %v1347 = vld [vmem:[%s232 + $0x112] sm:$0xff]
      %v1348 = vrot.slane %v256, 2
      %v1349 = vrot.slane %v257, 2
      %v1350 = vrot.slane %v258, 2
      %v1351 = vrot.slane %v259, 2
      %v1352 = vrot.slane %v260, 2
      %v1353 = vrot.slane %v261, 2
      %v1354 = vrot.slane %v262, 2
      %v1355 = vrot.slane %v263, 2
      %v1356 = vrot.slane %v264, 2
      %v1357 = vrot.slane %v265, 2
      %v1358 = vrot.slane %v266, 2
      %v1359 = vrot.slane %v267, 2
      %s1360 = vtos %v1348
      %v1361 = vstv %s1360
      %s1363 = vtos %v1349
      %v1364 = vstv %s1363
      %s1366 = vtos %v1350
      %v1367 = vstv %s1366
      %s1369 = vtos %v1351
      %v1370 = vstv %s1369
      %s1372 = vtos %v1352
      %v1373 = vstv %s1372
      %s1375 = vtos %v1353
      %v1376 = vstv %s1375
      %s1378 = vtos %v1354
      %v1379 = vstv %s1378
      %s1381 = vtos %v1355
      %v1382 = vstv %s1381
      %s1384 = vtos %v1356
      %v1385 = vstv %s1384
      %s1387 = vtos %v1357
      %v1388 = vstv %s1387
      %s1390 = vtos %v1358
      %v1391 = vstv %s1390
      %s1393 = vtos %v1359
      %v1394 = vstv %s1393
      %v1396 = vmul.f32 %v1324, %v1361
      %v1397 = vmul.f32 %v1325, %v1361
      %v1398 = vmul.f32 %v1326, %v1364
      %v1399 = vmul.f32 %v1327, %v1364
      %v1400 = vmul.f32 %v1328, %v1367
      %v1401 = vmul.f32 %v1329, %v1367
      %v1402 = vmul.f32 %v1330, %v1370
      %v1403 = vmul.f32 %v1331, %v1370
      %v1404 = vmul.f32 %v1332, %v1373
      %v1405 = vmul.f32 %v1333, %v1373
      %v1406 = vmul.f32 %v1334, %v1376
      %v1407 = vmul.f32 %v1335, %v1376
      %v1408 = vmul.f32 %v1336, %v1379
      %v1409 = vmul.f32 %v1337, %v1379
      %v1410 = vmul.f32 %v1338, %v1382
      %v1411 = vmul.f32 %v1339, %v1382
      %v1412 = vmul.f32 %v1340, %v1385
      %v1413 = vmul.f32 %v1341, %v1385
      %v1414 = vmul.f32 %v1342, %v1388
      %v1415 = vmul.f32 %v1343, %v1388
      %v1416 = vmul.f32 %v1344, %v1391
      %v1417 = vmul.f32 %v1345, %v1391
      %v1418 = vmul.f32 %v1346, %v1394
      %v1419 = vmul.f32 %v1347, %v1394
      %v1420 = vadd.f32 %v1300, %v1396
      %v1421 = vadd.f32 %v1301, %v1397
      %v1422 = vadd.f32 %v1302, %v1398
      %v1423 = vadd.f32 %v1303, %v1399
      %v1424 = vadd.f32 %v1304, %v1400
      %v1425 = vadd.f32 %v1305, %v1401
      %v1426 = vadd.f32 %v1306, %v1402
      %v1427 = vadd.f32 %v1307, %v1403
      %v1428 = vadd.f32 %v1308, %v1404
      %v1429 = vadd.f32 %v1309, %v1405
      %v1430 = vadd.f32 %v1310, %v1406
      %v1431 = vadd.f32 %v1311, %v1407
      %v1432 = vadd.f32 %v1312, %v1408
      %v1433 = vadd.f32 %v1313, %v1409
      %v1434 = vadd.f32 %v1314, %v1410
      %v1435 = vadd.f32 %v1315, %v1411
      %v1436 = vadd.f32 %v1316, %v1412
      %v1437 = vadd.f32 %v1317, %v1413
      %v1438 = vadd.f32 %v1318, %v1414
      %v1439 = vadd.f32 %v1319, %v1415
      %v1440 = vadd.f32 %v1320, %v1416
      %v1441 = vadd.f32 %v1321, %v1417
      %v1442 = vadd.f32 %v1322, %v1418
      %v1443 = vadd.f32 %v1323, %v1419
      %1444 = vrot.lane.b32.xlu0 %v1348, 127
      %v1445 = vpop.permute.xlu0 %1444
      %1446 = vrot.lane.b32.xlu0 %v1349, 127
      %v1447 = vpop.permute.xlu0 %1446
      %1448 = vrot.lane.b32.xlu0 %v1350, 127
      %v1449 = vpop.permute.xlu0 %1448
      %1450 = vrot.lane.b32.xlu0 %v1351, 127
      %v1451 = vpop.permute.xlu0 %1450
      %1452 = vrot.lane.b32.xlu0 %v1352, 127
      %v1453 = vpop.permute.xlu0 %1452
      %1454 = vrot.lane.b32.xlu0 %v1353, 127
      %v1455 = vpop.permute.xlu0 %1454
      %1456 = vrot.lane.b32.xlu0 %v1354, 127
      %v1457 = vpop.permute.xlu0 %1456
      %1458 = vrot.lane.b32.xlu0 %v1355, 127
      %v1459 = vpop.permute.xlu0 %1458
      %1460 = vrot.lane.b32.xlu0 %v1356, 127
      %v1461 = vpop.permute.xlu0 %1460
      %1462 = vrot.lane.b32.xlu0 %v1357, 127
      %v1463 = vpop.permute.xlu0 %1462
      %1464 = vrot.lane.b32.xlu0 %v1358, 127
      %v1465 = vpop.permute.xlu0 %1464
      %1466 = vrot.lane.b32.xlu0 %v1359, 127
      %v1467 = vpop.permute.xlu0 %1466
      %s1468 = vtos %v1445
      %v1469 = vstv %s1468
      %s1471 = vtos %v1447
      %v1472 = vstv %s1471
      %s1474 = vtos %v1449
      %v1475 = vstv %s1474
      %s1477 = vtos %v1451
      %v1478 = vstv %s1477
      %s1480 = vtos %v1453
      %v1481 = vstv %s1480
      %s1483 = vtos %v1455
      %v1484 = vstv %s1483
      %s1486 = vtos %v1457
      %v1487 = vstv %s1486
      %s1489 = vtos %v1459
      %v1490 = vstv %s1489
      %s1492 = vtos %v1461
      %v1493 = vstv %s1492
      %s1495 = vtos %v1463
      %v1496 = vstv %s1495
      %s1498 = vtos %v1465
      %v1499 = vstv %s1498
      %s1501 = vtos %v1467
      %v1502 = vstv %s1501
      %v1504 = vmul.f32 %v1324, %v1469
      %v1505 = vmul.f32 %v1325, %v1469
      %v1506 = vmul.f32 %v1326, %v1472
      %v1507 = vmul.f32 %v1327, %v1472
      %v1508 = vmul.f32 %v1328, %v1475
      %v1509 = vmul.f32 %v1329, %v1475
      %v1510 = vmul.f32 %v1330, %v1478
      %v1511 = vmul.f32 %v1331, %v1478
      %v1512 = vmul.f32 %v1332, %v1481
      %v1513 = vmul.f32 %v1333, %v1481
      %v1514 = vmul.f32 %v1334, %v1484
      %v1515 = vmul.f32 %v1335, %v1484
      %v1516 = vmul.f32 %v1336, %v1487
      %v1517 = vmul.f32 %v1337, %v1487
      %v1518 = vmul.f32 %v1338, %v1490
      %v1519 = vmul.f32 %v1339, %v1490
      %v1520 = vmul.f32 %v1340, %v1493
      %v1521 = vmul.f32 %v1341, %v1493
      %v1522 = vmul.f32 %v1342, %v1496
      %v1523 = vmul.f32 %v1343, %v1496
      %v1524 = vmul.f32 %v1344, %v1499
      %v1525 = vmul.f32 %v1345, %v1499
      %v1526 = vmul.f32 %v1346, %v1502
      %v1527 = vmul.f32 %v1347, %v1502
      %1552 = vrot.lane.b32.xlu0 %v1504, 127
      %v1553 = vpop.permute.xlu0 %1552
      %1554 = vrot.lane.b32.xlu0 %v1505, 127
      %v1555 = vpop.permute.xlu0 %1554
      %1556 = vrot.lane.b32.xlu0 %v1506, 127
      %v1557 = vpop.permute.xlu0 %1556
      %1558 = vrot.lane.b32.xlu0 %v1507, 127
      %v1559 = vpop.permute.xlu0 %1558
      %1560 = vrot.lane.b32.xlu0 %v1508, 127
      %v1561 = vpop.permute.xlu0 %1560
      %1562 = vrot.lane.b32.xlu0 %v1509, 127
      %v1563 = vpop.permute.xlu0 %1562
      %1564 = vrot.lane.b32.xlu0 %v1510, 127
      %v1565 = vpop.permute.xlu0 %1564
      %1566 = vrot.lane.b32.xlu0 %v1511, 127
      %v1567 = vpop.permute.xlu0 %1566
      %1568 = vrot.lane.b32.xlu0 %v1512, 127
      %v1569 = vpop.permute.xlu0 %1568
      %1570 = vrot.lane.b32.xlu0 %v1513, 127
      %v1571 = vpop.permute.xlu0 %1570
      %1572 = vrot.lane.b32.xlu0 %v1514, 127
      %v1573 = vpop.permute.xlu0 %1572
      %1574 = vrot.lane.b32.xlu0 %v1515, 127
      %v1575 = vpop.permute.xlu0 %1574
      %1576 = vrot.lane.b32.xlu0 %v1516, 127
      %v1577 = vpop.permute.xlu0 %1576
      %1578 = vrot.lane.b32.xlu0 %v1517, 127
      %v1579 = vpop.permute.xlu0 %1578
      %1580 = vrot.lane.b32.xlu0 %v1518, 127
      %v1581 = vpop.permute.xlu0 %1580
      %1582 = vrot.lane.b32.xlu0 %v1519, 127
      %v1583 = vpop.permute.xlu0 %1582
      %1584 = vrot.lane.b32.xlu0 %v1520, 127
      %v1585 = vpop.permute.xlu0 %1584
      %1586 = vrot.lane.b32.xlu0 %v1521, 127
      %v1587 = vpop.permute.xlu0 %1586
      %1588 = vrot.lane.b32.xlu0 %v1522, 127
      %v1589 = vpop.permute.xlu0 %1588
      %1590 = vrot.lane.b32.xlu0 %v1523, 127
      %v1591 = vpop.permute.xlu0 %1590
      %1592 = vrot.lane.b32.xlu0 %v1524, 127
      %v1593 = vpop.permute.xlu0 %1592
      %1594 = vrot.lane.b32.xlu0 %v1525, 127
      %v1595 = vpop.permute.xlu0 %1594
      %1596 = vrot.lane.b32.xlu0 %v1526, 127
      %v1597 = vpop.permute.xlu0 %1596
      %1598 = vrot.lane.b32.xlu0 %v1527, 127
      %v1599 = vpop.permute.xlu0 %1598
      %v1624 = vadd.f32 %v1420, %v1553
      %v1625 = vadd.f32 %v1421, %v1555
      %v1626 = vadd.f32 %v1422, %v1557
      %v1627 = vadd.f32 %v1423, %v1559
      %v1628 = vadd.f32 %v1424, %v1561
      %v1629 = vadd.f32 %v1425, %v1563
      %v1630 = vadd.f32 %v1426, %v1565
      %v1631 = vadd.f32 %v1427, %v1567
      %v1632 = vadd.f32 %v1428, %v1569
      %v1633 = vadd.f32 %v1429, %v1571
      %v1634 = vadd.f32 %v1430, %v1573
      %v1635 = vadd.f32 %v1431, %v1575
      %v1636 = vadd.f32 %v1432, %v1577
      %v1637 = vadd.f32 %v1433, %v1579
      %v1638 = vadd.f32 %v1434, %v1581
      %v1639 = vadd.f32 %v1435, %v1583
      %v1640 = vadd.f32 %v1436, %v1585
      %v1641 = vadd.f32 %v1437, %v1587
      %v1642 = vadd.f32 %v1438, %v1589
      %v1643 = vadd.f32 %v1439, %v1591
      %v1644 = vadd.f32 %v1440, %v1593
      %v1645 = vadd.f32 %v1441, %v1595
      %v1646 = vadd.f32 %v1442, %v1597
      %v1647 = vadd.f32 %v1443, %v1599
      %1648 = vrot.lane.b32.xlu0 %v1348, 126
      %v1649 = vpop.permute.xlu0 %1648
      %1650 = vrot.lane.b32.xlu0 %v1349, 126
      %v1651 = vpop.permute.xlu0 %1650
      %1652 = vrot.lane.b32.xlu0 %v1350, 126
      %v1653 = vpop.permute.xlu0 %1652
      %1654 = vrot.lane.b32.xlu0 %v1351, 126
      %v1655 = vpop.permute.xlu0 %1654
      %1656 = vrot.lane.b32.xlu0 %v1352, 126
      %v1657 = vpop.permute.xlu0 %1656
      %1658 = vrot.lane.b32.xlu0 %v1353, 126
      %v1659 = vpop.permute.xlu0 %1658
      %1660 = vrot.lane.b32.xlu0 %v1354, 126
      %v1661 = vpop.permute.xlu0 %1660
      %1662 = vrot.lane.b32.xlu0 %v1355, 126
      %v1663 = vpop.permute.xlu0 %1662
      %1664 = vrot.lane.b32.xlu0 %v1356, 126
      %v1665 = vpop.permute.xlu0 %1664
      %1666 = vrot.lane.b32.xlu0 %v1357, 126
      %v1667 = vpop.permute.xlu0 %1666
      %1668 = vrot.lane.b32.xlu0 %v1358, 126
      %v1669 = vpop.permute.xlu0 %1668
      %1670 = vrot.lane.b32.xlu0 %v1359, 126
      %v1671 = vpop.permute.xlu0 %1670
      %s1672 = vtos %v1649
      %v1673 = vstv %s1672
      %s1675 = vtos %v1651
      %v1676 = vstv %s1675
      %s1678 = vtos %v1653
      %v1679 = vstv %s1678
      %s1681 = vtos %v1655
      %v1682 = vstv %s1681
      %s1684 = vtos %v1657
      %v1685 = vstv %s1684
      %s1687 = vtos %v1659
      %v1688 = vstv %s1687
      %s1690 = vtos %v1661
      %v1691 = vstv %s1690
      %s1693 = vtos %v1663
      %v1694 = vstv %s1693
      %s1696 = vtos %v1665
      %v1697 = vstv %s1696
      %s1699 = vtos %v1667
      %v1700 = vstv %s1699
      %s1702 = vtos %v1669
      %v1703 = vstv %s1702
      %s1705 = vtos %v1671
      %v1706 = vstv %s1705
      %v1708 = vmul.f32 %v1324, %v1673
      %v1709 = vmul.f32 %v1325, %v1673
      %v1710 = vmul.f32 %v1326, %v1676
      %v1711 = vmul.f32 %v1327, %v1676
      %v1712 = vmul.f32 %v1328, %v1679
      %v1713 = vmul.f32 %v1329, %v1679
      %v1714 = vmul.f32 %v1330, %v1682
      %v1715 = vmul.f32 %v1331, %v1682
      %v1716 = vmul.f32 %v1332, %v1685
      %v1717 = vmul.f32 %v1333, %v1685
      %v1718 = vmul.f32 %v1334, %v1688
      %v1719 = vmul.f32 %v1335, %v1688
      %v1720 = vmul.f32 %v1336, %v1691
      %v1721 = vmul.f32 %v1337, %v1691
      %v1722 = vmul.f32 %v1338, %v1694
      %v1723 = vmul.f32 %v1339, %v1694
      %v1724 = vmul.f32 %v1340, %v1697
      %v1725 = vmul.f32 %v1341, %v1697
      %v1726 = vmul.f32 %v1342, %v1700
      %v1727 = vmul.f32 %v1343, %v1700
      %v1728 = vmul.f32 %v1344, %v1703
      %v1729 = vmul.f32 %v1345, %v1703
      %v1730 = vmul.f32 %v1346, %v1706
      %v1731 = vmul.f32 %v1347, %v1706
      %1756 = vrot.lane.b32.xlu0 %v1708, 126
      %v1757 = vpop.permute.xlu0 %1756
      %1758 = vrot.lane.b32.xlu0 %v1709, 126
      %v1759 = vpop.permute.xlu0 %1758
      %1760 = vrot.lane.b32.xlu0 %v1710, 126
      %v1761 = vpop.permute.xlu0 %1760
      %1762 = vrot.lane.b32.xlu0 %v1711, 126
      %v1763 = vpop.permute.xlu0 %1762
      %1764 = vrot.lane.b32.xlu0 %v1712, 126
      %v1765 = vpop.permute.xlu0 %1764
      %1766 = vrot.lane.b32.xlu0 %v1713, 126
      %v1767 = vpop.permute.xlu0 %1766
      %1768 = vrot.lane.b32.xlu0 %v1714, 126
      %v1769 = vpop.permute.xlu0 %1768
      %1770 = vrot.lane.b32.xlu0 %v1715, 126
      %v1771 = vpop.permute.xlu0 %1770
      %1772 = vrot.lane.b32.xlu0 %v1716, 126
      %v1773 = vpop.permute.xlu0 %1772
      %1774 = vrot.lane.b32.xlu0 %v1717, 126
      %v1775 = vpop.permute.xlu0 %1774
      %1776 = vrot.lane.b32.xlu0 %v1718, 126
      %v1777 = vpop.permute.xlu0 %1776
      %1778 = vrot.lane.b32.xlu0 %v1719, 126
      %v1779 = vpop.permute.xlu0 %1778
      %1780 = vrot.lane.b32.xlu0 %v1720, 126
      %v1781 = vpop.permute.xlu0 %1780
      %1782 = vrot.lane.b32.xlu0 %v1721, 126
      %v1783 = vpop.permute.xlu0 %1782
      %1784 = vrot.lane.b32.xlu0 %v1722, 126
      %v1785 = vpop.permute.xlu0 %1784
      %1786 = vrot.lane.b32.xlu0 %v1723, 126
      %v1787 = vpop.permute.xlu0 %1786
      %1788 = vrot.lane.b32.xlu0 %v1724, 126
      %v1789 = vpop.permute.xlu0 %1788
      %1790 = vrot.lane.b32.xlu0 %v1725, 126
      %v1791 = vpop.permute.xlu0 %1790
      %1792 = vrot.lane.b32.xlu0 %v1726, 126
      %v1793 = vpop.permute.xlu0 %1792
      %1794 = vrot.lane.b32.xlu0 %v1727, 126
      %v1795 = vpop.permute.xlu0 %1794
      %1796 = vrot.lane.b32.xlu0 %v1728, 126
      %v1797 = vpop.permute.xlu0 %1796
      %1798 = vrot.lane.b32.xlu0 %v1729, 126
      %v1799 = vpop.permute.xlu0 %1798
      %1800 = vrot.lane.b32.xlu0 %v1730, 126
      %v1801 = vpop.permute.xlu0 %1800
      %1802 = vrot.lane.b32.xlu0 %v1731, 126
      %v1803 = vpop.permute.xlu0 %1802
      %v1828 = vadd.f32 %v1624, %v1757
      %v1829 = vadd.f32 %v1625, %v1759
      %v1830 = vadd.f32 %v1626, %v1761
      %v1831 = vadd.f32 %v1627, %v1763
      %v1832 = vadd.f32 %v1628, %v1765
      %v1833 = vadd.f32 %v1629, %v1767
      %v1834 = vadd.f32 %v1630, %v1769
      %v1835 = vadd.f32 %v1631, %v1771
      %v1836 = vadd.f32 %v1632, %v1773
      %v1837 = vadd.f32 %v1633, %v1775
      %v1838 = vadd.f32 %v1634, %v1777
      %v1839 = vadd.f32 %v1635, %v1779
      %v1840 = vadd.f32 %v1636, %v1781
      %v1841 = vadd.f32 %v1637, %v1783
      %v1842 = vadd.f32 %v1638, %v1785
      %v1843 = vadd.f32 %v1639, %v1787
      %v1844 = vadd.f32 %v1640, %v1789
      %v1845 = vadd.f32 %v1641, %v1791
      %v1846 = vadd.f32 %v1642, %v1793
      %v1847 = vadd.f32 %v1643, %v1795
      %v1848 = vadd.f32 %v1644, %v1797
      %v1849 = vadd.f32 %v1645, %v1799
      %v1850 = vadd.f32 %v1646, %v1801
      %v1851 = vadd.f32 %v1647, %v1803
      %v1852 = vld [vmem:[%s243] sm:$0x1]
      %v1853 = vld [vmem:[%s243 + $0x1] sm:$0x1]
      %v1854 = vld [vmem:[%s243 + $0x2] sm:$0x1]
      %v1855 = vld [vmem:[%s243 + $0x3] sm:$0x1]
      %v1856 = vld [vmem:[%s243 + $0x4] sm:$0x1]
      %v1857 = vld [vmem:[%s243 + $0x5] sm:$0x1]
      %v1858 = vld [vmem:[%s243 + $0x6] sm:$0x1]
      %v1859 = vld [vmem:[%s243 + $0x7] sm:$0x1]
      %v1860 = vld [vmem:[%s243 + $0x8] sm:$0x1]
      %v1861 = vld [vmem:[%s243 + $0x9] sm:$0x1]
      %v1862 = vld [vmem:[%s243 + $0xa] sm:$0x1]
      %v1863 = vld [vmem:[%s243 + $0xb] sm:$0x1]
      %v1876 = vperm.slane %v1852, 0
      %v1877 = vperm.slane %v1853, 0
      %v1878 = vperm.slane %v1854, 0
      %v1879 = vperm.slane %v1855, 0
      %v1880 = vperm.slane %v1856, 0
      %v1881 = vperm.slane %v1857, 0
      %v1882 = vperm.slane %v1858, 0
      %v1883 = vperm.slane %v1859, 0
      %v1884 = vperm.slane %v1860, 0
      %v1885 = vperm.slane %v1861, 0
      %v1886 = vperm.slane %v1862, 0
      %v1887 = vperm.slane %v1863, 0
      %1888 = vset.pattern.permute.xlu0 0
      %1889 = vperm.xlu0 %1888, %v1876
      %v1890 = vpop.permute.xlu0 %1889
      %1892 = vset.pattern.permute.xlu0 0
      %1893 = vperm.xlu0 %1892, %v1877
      %v1894 = vpop.permute.xlu0 %1893
      %1896 = vset.pattern.permute.xlu0 0
      %1897 = vperm.xlu0 %1896, %v1878
      %v1898 = vpop.permute.xlu0 %1897
      %1900 = vset.pattern.permute.xlu0 0
      %1901 = vperm.xlu0 %1900, %v1879
      %v1902 = vpop.permute.xlu0 %1901
      %1904 = vset.pattern.permute.xlu0 0
      %1905 = vperm.xlu0 %1904, %v1880
      %v1906 = vpop.permute.xlu0 %1905
      %1908 = vset.pattern.permute.xlu0 0
      %1909 = vperm.xlu0 %1908, %v1881
      %v1910 = vpop.permute.xlu0 %1909
      %1912 = vset.pattern.permute.xlu0 0
      %1913 = vperm.xlu0 %1912, %v1882
      %v1914 = vpop.permute.xlu0 %1913
      %1916 = vset.pattern.permute.xlu0 0
      %1917 = vperm.xlu0 %1916, %v1883
      %v1918 = vpop.permute.xlu0 %1917
      %1920 = vset.pattern.permute.xlu0 0
      %1921 = vperm.xlu0 %1920, %v1884
      %v1922 = vpop.permute.xlu0 %1921
      %1924 = vset.pattern.permute.xlu0 0
      %1925 = vperm.xlu0 %1924, %v1885
      %v1926 = vpop.permute.xlu0 %1925
      %1928 = vset.pattern.permute.xlu0 0
      %1929 = vperm.xlu0 %1928, %v1886
      %v1930 = vpop.permute.xlu0 %1929
      %1932 = vset.pattern.permute.xlu0 0
      %1933 = vperm.xlu0 %1932, %v1887
      %v1934 = vpop.permute.xlu0 %1933
      %v1936 = vadd.f32 %v1828, %v1890
      %v1937 = vadd.f32 %v1829, %v1890
      %v1938 = vadd.f32 %v1830, %v1894
      %v1939 = vadd.f32 %v1831, %v1894
      %v1940 = vadd.f32 %v1832, %v1898
      %v1941 = vadd.f32 %v1833, %v1898
      %v1942 = vadd.f32 %v1834, %v1902
      %v1943 = vadd.f32 %v1835, %v1902
      %v1944 = vadd.f32 %v1836, %v1906
      %v1945 = vadd.f32 %v1837, %v1906
      %v1946 = vadd.f32 %v1838, %v1910
      %v1947 = vadd.f32 %v1839, %v1910
      %v1948 = vadd.f32 %v1840, %v1914
      %v1949 = vadd.f32 %v1841, %v1914
      %v1950 = vadd.f32 %v1842, %v1918
      %v1951 = vadd.f32 %v1843, %v1918
      %v1952 = vadd.f32 %v1844, %v1922
      %v1953 = vadd.f32 %v1845, %v1922
      %v1954 = vadd.f32 %v1846, %v1926
      %v1955 = vadd.f32 %v1847, %v1926
      %v1956 = vadd.f32 %v1848, %v1930
      %v1957 = vadd.f32 %v1849, %v1930
      %v1958 = vadd.f32 %v1850, %v1934
      %v1959 = vadd.f32 %v1851, %v1934
      %vm1960 = vcmask 130048
      %1961 = vst.msk [vmem:[%s254] sm:$0xff] %vm1960, %v1936
      %1962 = vst.msk [vmem:[%s254 + $0x8] sm:$0xff] %vm1960, %v1937
      %1963 = vst.msk [vmem:[%s254 + $0x10] sm:$0xff] %vm1960, %v1938
      %1964 = vst.msk [vmem:[%s254 + $0x18] sm:$0xff] %vm1960, %v1939
      %1965 = vst.msk [vmem:[%s254 + $0x20] sm:$0xff] %vm1960, %v1940
      %1966 = vst.msk [vmem:[%s254 + $0x28] sm:$0xff] %vm1960, %v1941
      %1967 = vst.msk [vmem:[%s254 + $0x30] sm:$0xff] %vm1960, %v1942
      %1968 = vst.msk [vmem:[%s254 + $0x38] sm:$0xff] %vm1960, %v1943
      %1969 = vst.msk [vmem:[%s254 + $0x40] sm:$0xff] %vm1960, %v1944
      %1970 = vst.msk [vmem:[%s254 + $0x48] sm:$0xff] %vm1960, %v1945
      %1971 = vst.msk [vmem:[%s254 + $0x50] sm:$0xff] %vm1960, %v1946
      %1972 = vst.msk [vmem:[%s254 + $0x58] sm:$0xff] %vm1960, %v1947
      %1973 = vst.msk [vmem:[%s254 + $0x60] sm:$0xff] %vm1960, %v1948
      %1974 = vst.msk [vmem:[%s254 + $0x68] sm:$0xff] %vm1960, %v1949
      %1975 = vst.msk [vmem:[%s254 + $0x70] sm:$0xff] %vm1960, %v1950
      %1976 = vst.msk [vmem:[%s254 + $0x78] sm:$0xff] %vm1960, %v1951
      %1977 = vst.msk [vmem:[%s254 + $0x80] sm:$0xff] %vm1960, %v1952
      %1978 = vst.msk [vmem:[%s254 + $0x88] sm:$0xff] %vm1960, %v1953
      %1979 = vst.msk [vmem:[%s254 + $0x90] sm:$0xff] %vm1960, %v1954
      %1980 = vst.msk [vmem:[%s254 + $0x98] sm:$0xff] %vm1960, %v1955
      %1981 = vst.msk [vmem:[%s254 + $0xa0] sm:$0xff] %vm1960, %v1956
      %1982 = vst.msk [vmem:[%s254 + $0xa8] sm:$0xff] %vm1960, %v1957
      %1983 = vst.msk [vmem:[%s254 + $0xb0] sm:$0xff] %vm1960, %v1958
      %1984 = vst.msk [vmem:[%s254 + $0xb8] sm:$0xff] %vm1960, %v1959
      %s1985 = smul.u32 12, %s19
      %p1986 = scmp.lt.s32.totalorder %s18, 1
      %s1987 = scalar_select %p1986, %s18, 1
      %p1988 = scmp.lt.s32.totalorder %s1985, 11
      %s1989 = scalar_select %p1988, %s1985, 11
      %s1990 = smul.addr %s1989, 2
      %s1991 = smul.addr %s1987, 24
      %s1992 = sadd.s32 %s1990, %s1991
      %s1993 = smul.addr %s1992, 8
      %s1994 = scalar_lea.vmem %s3, %s1993
      // Predicated region
      $region33: #{self_attention_forward.7} parent=31 // pred_check
        %p1995 = pneg %p126
      $region34: #{self_attention_forward.7} parent=31 // pred_check_branch
        %1997 = sbr.rel (%p1995) target = $region36
      $region35: #{self_attention_forward.7} parent=31 // pred_region
        %s1998 = smul.u32 12, %s19
      $region36: #{self_attention_forward.7} parent=31 // pred_fallthru
        _
    $region32: #{self_attention_forward.7} parent=5 // pred_fallthru
      _
    %p1999 = scmp.le.s32.totalorder 2, %s9
    // Predicated region
    $region37: #{self_attention_forward.7} parent=5 // pred_check
      %p2000 = pneg %p1999
    $region38: #{self_attention_forward.7} parent=5 // pred_check_branch
      %2002 = sbr.rel (%p2000) target = $region40
    $region39: #{self_attention_forward.7} parent=5 // pred_region
      %s2003 = ssub.s32 %s9, 2
      // Predicated region
      $region41: #{self_attention_forward.7} parent=39 // pred_check
        %p2004 = pneg %p132
      $region42: #{self_attention_forward.7} parent=39 // pred_check_branch
        %2006 = sbr.rel (%p2004) target = $region44
      $region43: #{self_attention_forward.7} parent=39 // pred_region
        %s2007 = smul.u32 12, %s21
        %p2008 = scmp.lt.s32.totalorder %s20, 1
        %s2009 = scalar_select %p2008, %s20, 1
        %p2010 = scmp.lt.s32.totalorder %s2007, 11
        %s2011 = scalar_select %p2010, %s2007, 11
        %s2012 = smul.addr %s2011, 2
        %s2013 = smul.addr %s2009, 24
        %s2014 = sadd.s32 %s2012, %s2013
        %s2015 = smul.addr %s2014, 8
        %s2016 = scalar_lea.vmem %s3, %s2015
      $region44: #{self_attention_forward.7} parent=39 // pred_fallthru
        _
    $region40: #{self_attention_forward.7} parent=5 // pred_fallthru
      _
  $region6: #{self_attention_forward.7} parent=0 // loop_footer
    %s13 = sadd.s32 1, %s9
  $region7: #{self_attention_forward.7} parent=0 // loop_footer_branch
    %8 = sbr.rel target = $region3
  $region8: #{self_attention_forward.7} parent=0 // loop_exit
    _

</llo_original>
